<compile_context>
chip_gen: v5e
topology: v5e:2x2
jax: 0.10.0
libtpu: 0.0.40
codegen_flags: <defaults>
</compile_context>

<pallas_src>
import jax
import jax.numpy as jnp
from jax.experimental import pallas as pl
from jax.experimental.pallas import tpu as pltpu

_H1, _H2, _H3 = 256, 512, 1024
_OUT = 784
_OUT_PAD = 896  # 7 * 128 lanes -> unmasked stores / clean MXU N-tiling


def _round_up(x, m):
    return (x + m - 1) // m * m


def _cdiv(a, b):
    return (a + b - 1) // b


def _leaky_relu(x, slope=0.2):
    return jnp.where(x > 0, x, slope * x)


def generator_kernel(z_ref,
                     w1_ref, b1_ref,
                     w2_ref, b2_ref,
                     w3_ref, b3_ref,
                     w4_ref, b4_ref,
                     out_ref):
    # Layer 1: (TB, L) @ (L, 256) + (1, 256), bf16 operands, f32 accumulate
    h = jnp.dot(z_ref[...].astype(jnp.bfloat16), w1_ref[...],
                preferred_element_type=jnp.float32)
    h = _leaky_relu(h + b1_ref[...])
    # Layer 2: (TB, 256) @ (256, 512)
    h = jnp.dot(h.astype(jnp.bfloat16), w2_ref[...],
                preferred_element_type=jnp.float32)
    h = _leaky_relu(h + b2_ref[...])
    # Layer 3: (TB, 512) @ (512, 1024)
    h = jnp.dot(h.astype(jnp.bfloat16), w3_ref[...],
                preferred_element_type=jnp.float32)
    h = _leaky_relu(h + b3_ref[...])
    # Layer 4: (TB, 1024) @ (1024, 896) + Tanh   (cols 784..895 are zero-padded)
    h = jnp.dot(h.astype(jnp.bfloat16), w4_ref[...],
                preferred_element_type=jnp.float32)
    out_ref[...] = jnp.tanh(h + b4_ref[...]).astype(out_ref.dtype)


def init_generator_params(latent_dim, key):
    """Synthetic PyTorch-style init. Weights (in,out) bf16; biases (1,out) f32.
    Layer 4 is column-padded to _OUT_PAD with zeros."""
    dims = [(latent_dim, _H1), (_H1, _H2), (_H2, _H3), (_H3, _OUT)]
    params = []
    for i, (fan_in, fan_out) in enumerate(dims):
        key, kw, kb = jax.random.split(key, 3)
        scale = 1.0 / jnp.sqrt(jnp.float32(fan_in))
        w = jax.random.uniform(kw, (fan_in, fan_out), jnp.float32, -scale, scale)
        b = jax.random.uniform(kb, (1, fan_out), jnp.float32, -scale, scale)
        if i == 3:
            w = jnp.pad(w, ((0, 0), (0, _OUT_PAD - _OUT)))
            b = jnp.pad(b, ((0, 0), (0, _OUT_PAD - _OUT)))
        params.append((w.astype(jnp.bfloat16), b))
    return params


def _choose_batch_tiling(B):
    """Pick (tile_b, B_pad, n_tiles): cap tiles at 256 rows, split evenly for
    awkward batch sizes, and guarantee >= 2 grid steps when B >= 128 so both
    TensorCores on v7x participate (no-op on single-TC v5e/v6e)."""
    n_tiles = max(_cdiv(B, 256), 1)
    if B >= 128 and n_tiles < 2:
        n_tiles = 2
    tile_b = _round_up(_cdiv(B, n_tiles), 8)
    B_pad = n_tiles * tile_b
    return tile_b, B_pad, n_tiles


def generator_forward(z, params):
    """z: (B, latent_dim) float32 -> img: (B, 1, 28, 28) float32."""
    B, latent_dim = z.shape

    tile_b, B_pad, n_tiles = _choose_batch_tiling(B)
    if B_pad != B:
        z = jnp.pad(z, ((0, B_pad - B), (0, 0)))
    grid = (n_tiles,)

    (w1, b1), (w2, b2), (w3, b3), (w4, b4) = params

    def resident_spec(shape):
        # Same (0, 0) block every grid step -> loaded once, stays in VMEM.
        # Buffered(1): constant index_map means the default second (double)
        # buffer would be dead space.
        return pl.BlockSpec(shape, lambda i: (0, 0), pipeline_mode=pl.Buffered(1))

    in_specs = [
        pl.BlockSpec((tile_b, latent_dim), lambda i: (i, 0)),
        resident_spec(w1.shape), resident_spec(b1.shape),
        resident_spec(w2.shape), resident_spec(b2.shape),
        resident_spec(w3.shape), resident_spec(b3.shape),
        resident_spec(w4.shape), resident_spec(b4.shape),
    ]
    out_spec = pl.BlockSpec((tile_b, _OUT_PAD), lambda i: (i, 0))

    flops = 2 * B_pad * (latent_dim * _H1 + _H1 * _H2 + _H2 * _H3 + _H3 * _OUT_PAD)
    weight_bytes = sum(int(w.size) * w.dtype.itemsize + int(b.size) * b.dtype.itemsize
                       for (w, b) in params)
    bytes_accessed = weight_bytes + int(z.size) * 4 + B_pad * _OUT_PAD * 2  # bf16 out
    cost = pl.CostEstimate(flops=flops,
                           transcendentals=B_pad * _OUT_PAD,
                           bytes_accessed=bytes_accessed)

    img_flat = pl.pallas_call(
        generator_kernel,
        out_shape=jax.ShapeDtypeStruct((B_pad, _OUT_PAD), jnp.bfloat16),
        grid=grid,
        in_specs=in_specs,
        out_specs=out_spec,
        compiler_params=pltpu.CompilerParams(
            dimension_semantics=("parallel",),
            vmem_limit_bytes=32 * 1024 * 1024,   # fits v7x's 64 MiB physical VMEM
        ),
        cost_estimate=cost,
    )(z, w1, b1, w2, b2, w3, b3, w4, b4)

    # Drop batch padding + lane padding, upcast to f32 (PyTorch dtype), NCHW view.
    return img_flat[:B, :_OUT].astype(jnp.float32).reshape(B, 1, 28, 28)


if __name__ == "__main__":
    batch = 8
    latent_dim = 32

    root = jax.random.PRNGKey(0)
    k_params, k_z = jax.random.split(root)

    params = init_generator_params(latent_dim, k_params)
    z = jax.random.normal(k_z, (batch, latent_dim), dtype=jnp.float32)

    img = jax.block_until_ready(generator_forward(z, params))

    assert img.shape == (batch, 1, 28, 28), img.shape
    assert img.dtype == jnp.float32
    # Tanh output must lie in [-1, 1]
    assert bool(jnp.all(jnp.abs(img) <= 1.0))

    # Pure-JAX reference of the same math (bf16 operands, f32 accumulation).
    def ref_forward(z, params):
        h = z
        for i, (w, b) in enumerate(params):
            h = jnp.dot(h.astype(jnp.bfloat16), w,
                        preferred_element_type=jnp.float32) + b
            if i < 3:
                h = jnp.where(h > 0, h, 0.2 * h)
            else:
                h = jnp.tanh(h)
        return h[:, :_OUT].reshape(z.shape[0], 1, 28, 28)

    ref = ref_forward(z, params)
    max_err = float(jnp.max(jnp.abs(img - ref)))
    # Tolerance covers the bf16 output store (rel eps ~2^-8 on a [-1,1] range).
    assert bool(jnp.allclose(img, ref, atol=2e-2, rtol=2e-2)), max_err

    print("KERNEL_OK")
</pallas_src>

<mosaic_0001>
module attributes {stable_mosaic.version = 11 : i64} {
  func.func @generator_kernel(%arg0: i32, %arg1: memref<8x32xf32, #tpu.memory_space<vmem>>, %arg2: memref<32x256xbf16, #tpu.memory_space<vmem>>, %arg3: memref<1x256xf32, #tpu.memory_space<vmem>>, %arg4: memref<256x512xbf16, #tpu.memory_space<vmem>>, %arg5: memref<1x512xf32, #tpu.memory_space<vmem>>, %arg6: memref<512x1024xbf16, #tpu.memory_space<vmem>>, %arg7: memref<1x1024xf32, #tpu.memory_space<vmem>>, %arg8: memref<1024x896xbf16, #tpu.memory_space<vmem>>, %arg9: memref<1x896xf32, #tpu.memory_space<vmem>>, %arg10: memref<8x896xbf16, #tpu.memory_space<vmem>>) attributes {dimension_semantics = [#tpu.dimension_semantics<parallel>], iteration_bounds = array<i64: 1>, scalar_prefetch = 0 : i64, scratch_operands = 0 : i64, tpu.core_type = #tpu.core_type<tc>, window_params = [{transform_indices = @transform_0, window_bounds = array<i64: 8, 32>}, {pipeline_mode = #tpu.pipeline_mode<synchronous>, transform_indices = @transform_1, window_bounds = array<i64: 32, 256>}, {pipeline_mode = #tpu.pipeline_mode<synchronous>, transform_indices = @transform_2, window_bounds = array<i64: 1, 256>}, {pipeline_mode = #tpu.pipeline_mode<synchronous>, transform_indices = @transform_3, window_bounds = array<i64: 256, 512>}, {pipeline_mode = #tpu.pipeline_mode<synchronous>, transform_indices = @transform_4, window_bounds = array<i64: 1, 512>}, {pipeline_mode = #tpu.pipeline_mode<synchronous>, transform_indices = @transform_5, window_bounds = array<i64: 512, 1024>}, {pipeline_mode = #tpu.pipeline_mode<synchronous>, transform_indices = @transform_6, window_bounds = array<i64: 1, 1024>}, {pipeline_mode = #tpu.pipeline_mode<synchronous>, transform_indices = @transform_7, window_bounds = array<i64: 1024, 896>}, {pipeline_mode = #tpu.pipeline_mode<synchronous>, transform_indices = @transform_8, window_bounds = array<i64: 1, 896>}, {transform_indices = @transform_9, window_bounds = array<i64: 8, 896>}]} {
    %c0 = arith.constant 0 : index
    %c0_0 = arith.constant 0 : index
    %0 = vector.load %arg1[%c0, %c0_0] : memref<8x32xf32, #tpu.memory_space<vmem>>, vector<8x32xf32>
    %1 = arith.truncf %0 : vector<8x32xf32> to vector<8x32xbf16>
    %c0_1 = arith.constant 0 : index
    %c0_2 = arith.constant 0 : index
    %2 = vector.load %arg2[%c0_1, %c0_2] : memref<32x256xbf16, #tpu.memory_space<vmem>>, vector<32x256xbf16>
    %cst = arith.constant dense<0.000000e+00> : vector<8x256xf32>
    %3 = tpu.matmul %1, %2, %cst {dimension_numbers = #tpu.dot_dimension_numbers<[1], [0], [0], [1], [0, 0, 1, 1], [], []>} : vector<8x32xbf16>, vector<32x256xbf16>, vector<8x256xf32> -> vector<8x256xf32>
    %c0_3 = arith.constant 0 : index
    %c0_4 = arith.constant 0 : index
    %4 = vector.load %arg3[%c0_3, %c0_4] : memref<1x256xf32, #tpu.memory_space<vmem>>, vector<1x256xf32>
    %5 = vector.broadcast %4 : vector<1x256xf32> to vector<8x256xf32>
    %6 = arith.addf %3, %5 : vector<8x256xf32>
    %cst_5 = arith.constant 0.000000e+00 : f32
    %7 = vector.broadcast %cst_5 : f32 to vector<8x256xf32>
    %8 = arith.cmpf ogt, %6, %7 : vector<8x256xf32>
    %cst_6 = arith.constant 2.000000e-01 : f32
    %9 = vector.broadcast %cst_6 : f32 to vector<8x256xf32>
    %10 = arith.mulf %9, %6 : vector<8x256xf32>
    %11 = arith.select %8, %6, %10 : vector<8x256xi1>, vector<8x256xf32>
    %12 = arith.truncf %11 : vector<8x256xf32> to vector<8x256xbf16>
    %c0_7 = arith.constant 0 : index
    %c0_8 = arith.constant 0 : index
    %13 = vector.load %arg4[%c0_7, %c0_8] : memref<256x512xbf16, #tpu.memory_space<vmem>>, vector<256x512xbf16>
    %cst_9 = arith.constant dense<0.000000e+00> : vector<8x512xf32>
    %14 = tpu.matmul %12, %13, %cst_9 {dimension_numbers = #tpu.dot_dimension_numbers<[1], [0], [0], [1], [0, 0, 1, 1], [], []>} : vector<8x256xbf16>, vector<256x512xbf16>, vector<8x512xf32> -> vector<8x512xf32>
    %c0_10 = arith.constant 0 : index
    %c0_11 = arith.constant 0 : index
    %15 = vector.load %arg5[%c0_10, %c0_11] : memref<1x512xf32, #tpu.memory_space<vmem>>, vector<1x512xf32>
    %16 = vector.broadcast %15 : vector<1x512xf32> to vector<8x512xf32>
    %17 = arith.addf %14, %16 : vector<8x512xf32>
    %cst_12 = arith.constant 0.000000e+00 : f32
    %18 = vector.broadcast %cst_12 : f32 to vector<8x512xf32>
    %19 = arith.cmpf ogt, %17, %18 : vector<8x512xf32>
    %cst_13 = arith.constant 2.000000e-01 : f32
    %20 = vector.broadcast %cst_13 : f32 to vector<8x512xf32>
    %21 = arith.mulf %20, %17 : vector<8x512xf32>
    %22 = arith.select %19, %17, %21 : vector<8x512xi1>, vector<8x512xf32>
    %23 = arith.truncf %22 : vector<8x512xf32> to vector<8x512xbf16>
    %c0_14 = arith.constant 0 : index
    %c0_15 = arith.constant 0 : index
    %24 = vector.load %arg6[%c0_14, %c0_15] : memref<512x1024xbf16, #tpu.memory_space<vmem>>, vector<512x1024xbf16>
    %cst_16 = arith.constant dense<0.000000e+00> : vector<8x1024xf32>
    %25 = tpu.matmul %23, %24, %cst_16 {dimension_numbers = #tpu.dot_dimension_numbers<[1], [0], [0], [1], [0, 0, 1, 1], [], []>} : vector<8x512xbf16>, vector<512x1024xbf16>, vector<8x1024xf32> -> vector<8x1024xf32>
    %c0_17 = arith.constant 0 : index
    %c0_18 = arith.constant 0 : index
    %26 = vector.load %arg7[%c0_17, %c0_18] : memref<1x1024xf32, #tpu.memory_space<vmem>>, vector<1x1024xf32>
    %27 = vector.broadcast %26 : vector<1x1024xf32> to vector<8x1024xf32>
    %28 = arith.addf %25, %27 : vector<8x1024xf32>
    %cst_19 = arith.constant 0.000000e+00 : f32
    %29 = vector.broadcast %cst_19 : f32 to vector<8x1024xf32>
    %30 = arith.cmpf ogt, %28, %29 : vector<8x1024xf32>
    %cst_20 = arith.constant 2.000000e-01 : f32
    %31 = vector.broadcast %cst_20 : f32 to vector<8x1024xf32>
    %32 = arith.mulf %31, %28 : vector<8x1024xf32>
    %33 = arith.select %30, %28, %32 : vector<8x1024xi1>, vector<8x1024xf32>
    %34 = arith.truncf %33 : vector<8x1024xf32> to vector<8x1024xbf16>
    %c0_21 = arith.constant 0 : index
    %c0_22 = arith.constant 0 : index
    %35 = vector.load %arg8[%c0_21, %c0_22] : memref<1024x896xbf16, #tpu.memory_space<vmem>>, vector<1024x896xbf16>
    %cst_23 = arith.constant dense<0.000000e+00> : vector<8x896xf32>
    %36 = tpu.matmul %34, %35, %cst_23 {dimension_numbers = #tpu.dot_dimension_numbers<[1], [0], [0], [1], [0, 0, 1, 1], [], []>} : vector<8x1024xbf16>, vector<1024x896xbf16>, vector<8x896xf32> -> vector<8x896xf32>
    %c0_24 = arith.constant 0 : index
    %c0_25 = arith.constant 0 : index
    %37 = vector.load %arg9[%c0_24, %c0_25] : memref<1x896xf32, #tpu.memory_space<vmem>>, vector<1x896xf32>
    %38 = vector.broadcast %37 : vector<1x896xf32> to vector<8x896xf32>
    %39 = arith.addf %36, %38 : vector<8x896xf32>
    %40 = math.tanh %39 : vector<8x896xf32>
    %41 = arith.truncf %40 : vector<8x896xf32> to vector<8x896xbf16>
    %c0_26 = arith.constant 0 : index
    %c0_27 = arith.constant 0 : index
    %42 = vector.load %arg10[%c0_26, %c0_27] : memref<8x896xbf16, #tpu.memory_space<vmem>>, vector<8x896xbf16>
    tpu.vector_store %arg10[%c0_26, %c0_27], %41 {strides = array<i32>} : memref<8x896xbf16, #tpu.memory_space<vmem>>, vector<8x896xbf16>,
    return
  }
  func.func @transform_0(%arg0: i32) -> (i32, i32) {
    %c0_i32 = arith.constant 0 : i32
    %c0_i32_0 = arith.constant 0 : i32
    return %arg0, %c0_i32 : i32, i32
  }
  func.func @transform_1(%arg0: i32) -> (i32, i32) {
    %c0_i32 = arith.constant 0 : i32
    %c0_i32_0 = arith.constant 0 : i32
    %c0_i32_1 = arith.constant 0 : i32
    return %c0_i32, %c0_i32_0 : i32, i32
  }
  func.func @transform_2(%arg0: i32) -> (i32, i32) {
    %c0_i32 = arith.constant 0 : i32
    %c0_i32_0 = arith.constant 0 : i32
    %c0_i32_1 = arith.constant 0 : i32
    return %c0_i32, %c0_i32_0 : i32, i32
  }
  func.func @transform_3(%arg0: i32) -> (i32, i32) {
    %c0_i32 = arith.constant 0 : i32
    %c0_i32_0 = arith.constant 0 : i32
    %c0_i32_1 = arith.constant 0 : i32
    return %c0_i32, %c0_i32_0 : i32, i32
  }
  func.func @transform_4(%arg0: i32) -> (i32, i32) {
    %c0_i32 = arith.constant 0 : i32
    %c0_i32_0 = arith.constant 0 : i32
    %c0_i32_1 = arith.constant 0 : i32
    return %c0_i32, %c0_i32_0 : i32, i32
  }
  func.func @transform_5(%arg0: i32) -> (i32, i32) {
    %c0_i32 = arith.constant 0 : i32
    %c0_i32_0 = arith.constant 0 : i32
    %c0_i32_1 = arith.constant 0 : i32
    return %c0_i32, %c0_i32_0 : i32, i32
  }
  func.func @transform_6(%arg0: i32) -> (i32, i32) {
    %c0_i32 = arith.constant 0 : i32
    %c0_i32_0 = arith.constant 0 : i32
    %c0_i32_1 = arith.constant 0 : i32
    return %c0_i32, %c0_i32_0 : i32, i32
  }
  func.func @transform_7(%arg0: i32) -> (i32, i32) {
    %c0_i32 = arith.constant 0 : i32
    %c0_i32_0 = arith.constant 0 : i32
    %c0_i32_1 = arith.constant 0 : i32
    return %c0_i32, %c0_i32_0 : i32, i32
  }
  func.func @transform_8(%arg0: i32) -> (i32, i32) {
    %c0_i32 = arith.constant 0 : i32
    %c0_i32_0 = arith.constant 0 : i32
    %c0_i32_1 = arith.constant 0 : i32
    return %c0_i32, %c0_i32_0 : i32, i32
  }
  func.func @transform_9(%arg0: i32) -> (i32, i32) {
    %c0_i32 = arith.constant 0 : i32
    %c0_i32_0 = arith.constant 0 : i32
    return %arg0, %c0_i32 : i32, i32
  }
}

</mosaic_0001>

<llo_original>
// kernel: tpu_custom_call.1
$region0: #{tpu_custom_call.1}
  #allocation0 [shape = 'u32[]', space=smem, size = 0x4, offset = 0x4, fixed_abs, tag = 'smem constant byte address 0x4 - core index']
  #allocation1 [shape = 'u32[72,128]{1,0:T(1,128)}', space=vmem, size = 0x9000, scoped, tag = 'internal scratch']
  %s0 = inlined_call_operand.hbm [shape: f32[8,32], index: 0, kind: input, shape index: {}]
  %s1 = inlined_call_operand.hbm [shape: bf16[32,256], index: 1, kind: input, shape index: {}]
  %s2 = inlined_call_operand.hbm [shape: f32[1,256], index: 2, kind: input, shape index: {}]
  %s3 = inlined_call_operand.hbm [shape: bf16[256,512], index: 3, kind: input, shape index: {}]
  %s4 = inlined_call_operand.hbm [shape: f32[1,512], index: 4, kind: input, shape index: {}]
  %s5 = inlined_call_operand.hbm [shape: bf16[512,1024], index: 5, kind: input, shape index: {}]
  %s6 = inlined_call_operand.hbm [shape: f32[1,1024], index: 6, kind: input, shape index: {}]
  %s7 = inlined_call_operand.hbm [shape: bf16[1024,896], index: 7, kind: input, shape index: {}]
  %s8 = inlined_call_operand.hbm [shape: f32[1,896], index: 8, kind: input, shape index: {}]
  %s9 = inlined_call_operand.hbm [shape: bf16[8,896], index: 9, kind: output, shape index: {}]
  %s10 = sld [smem:[#allocation0]]
  $region82: #{tpu_custom_call.1} parent=0
    _
  %s12 = ssub.s32 1, %s10
  %s13 = scalar_select 0, %s12, %s10
  $region1: #{tpu_custom_call.1} parent=0
    #allocation2 [shape = 'u8[4096]{0}', space=vmem, size = 0x1000, scoped, tag = 'input window, operand 0, single buffered']
    #allocation3 [shape = 's32[1]{0}', space=sflag, size = 0x4, scoped, tag = 'scoped memory for tpu_custom_call.1']
    #allocation4 [shape = 's32[1]{0}', space=sflag, size = 0x4, scoped, tag = 'scoped memory for tpu_custom_call.1']
    #allocation5 [shape = 'u8[16384]{0}', space=vmem, size = 0x4000, scoped, tag = 'input window, operand 1, single buffered']
    #allocation6 [shape = 's32[1]{0}', space=sflag, size = 0x4, scoped, tag = 'scoped memory for tpu_custom_call.1']
    #allocation7 [shape = 'u8[1024]{0}', space=vmem, size = 0x400, scoped, tag = 'input window, operand 2, single buffered']
    #allocation8 [shape = 'u8[262144]{0}', space=vmem, size = 0x40000, scoped, tag = 'input window, operand 3, single buffered']
    #allocation9 [shape = 's32[1]{0}', space=sflag, size = 0x4, scoped, tag = 'scoped memory for tpu_custom_call.1']
    #allocation10 [shape = 'u8[2048]{0}', space=vmem, size = 0x800, scoped, tag = 'input window, operand 4, single buffered']
    #allocation11 [shape = 'u8[1048576]{0}', space=vmem, size = 0x100000, scoped, tag = 'input window, operand 5, single buffered']
    #allocation12 [shape = 's32[1]{0}', space=sflag, size = 0x4, scoped, tag = 'scoped memory for tpu_custom_call.1']
    #allocation13 [shape = 'u8[4096]{0}', space=vmem, size = 0x1000, scoped, tag = 'input window, operand 6, single buffered']
    #allocation14 [shape = 'u8[1835008]{0}', space=vmem, size = 0x1c0000, scoped, tag = 'input window, operand 7, single buffered']
    #allocation15 [shape = 's32[1]{0}', space=sflag, size = 0x4, scoped, tag = 'scoped memory for tpu_custom_call.1']
    #allocation16 [shape = 'u8[3584]{0}', space=vmem, size = 0x1000, scoped, tag = 'input window, operand 8, single buffered']
    #allocation17 [shape = 'u8[14336]{0}', space=vmem, size = 0x3800, scoped, tag = 'output window, operand 0, single buffered']
    %14 = vsyncpa [#allocation3], 0
    %15 = vsyncpa [#allocation6], 0
    %16 = vsyncpa [#allocation9], 0
    %17 = vsyncpa [#allocation12], 0
    %18 = vsyncpa [#allocation15], 0
    %19 = vsyncpa [#allocation4], 0
    // Predicated region
    $region2: #{tpu_custom_call.1} parent=1 // pred_check
      _
    $region3: #{tpu_custom_call.1} parent=1 // pred_check_branch
      %21 = sbr.rel (0) target = $region5
    $region4: #{tpu_custom_call.1} parent=1 // pred_region
      %23 = vsyncadd [#allocation3], 0
      %s25 = sshll.u32 %s0, 4
      %s26 = int_to_ptr.hbm [resolvable:$true] %s25
      %s27 = sshll.u32 [#allocation2], 4
      %s28 = int_to_ptr.vmem [resolvable:$true] %s27
      %30 = dma.hbm_to_vmem [thread:$0]  %s26, 128, %s28, [#allocation3]
    $region5: #{tpu_custom_call.1} parent=1 // pred_fallthru
      _
    // Predicated region
    $region6: #{tpu_custom_call.1} parent=1 // pred_check
      _
    $region7: #{tpu_custom_call.1} parent=1 // pred_check_branch
      %32 = sbr.rel (0) target = $region9
    $region8: #{tpu_custom_call.1} parent=1 // pred_region
      %34 = vsyncadd [#allocation6], 0
      %s35 = sshll.u32 %s1, 4
      %s36 = int_to_ptr.hbm [resolvable:$true] %s35
      %s37 = sshll.u32 [#allocation5], 4
      %s38 = int_to_ptr.vmem [resolvable:$true] %s37
      %43 = dma.hbm_to_vmem [thread:$0]  %s36, 512, %s38, [#allocation6], 128, 128, 8
    $region9: #{tpu_custom_call.1} parent=1 // pred_fallthru
      _
    // Predicated region
    $region10: #{tpu_custom_call.1} parent=1 // pred_check
      _
    $region11: #{tpu_custom_call.1} parent=1 // pred_check_branch
      %45 = sbr.rel (0) target = $region13
    $region12: #{tpu_custom_call.1} parent=1 // pred_region
      %47 = vsyncadd [#allocation6], 0
      %s49 = sshll.u32 %s2, 4
      %s50 = int_to_ptr.hbm [resolvable:$true] %s49
      %s51 = sshll.u32 [#allocation7], 4
      %s52 = int_to_ptr.vmem [resolvable:$true] %s51
      %54 = dma.hbm_to_vmem [thread:$0]  %s50, 32, %s52, [#allocation6]
    $region13: #{tpu_custom_call.1} parent=1 // pred_fallthru
      _
    // Predicated region
    $region14: #{tpu_custom_call.1} parent=1 // pred_check
      _
    $region15: #{tpu_custom_call.1} parent=1 // pred_check_branch
      %56 = sbr.rel (0) target = $region17
    $region16: #{tpu_custom_call.1} parent=1 // pred_region
      %58 = vsyncadd [#allocation9], 0
      %s59 = sshll.u32 %s3, 4
      %s60 = int_to_ptr.hbm [resolvable:$true] %s59
      %s61 = sshll.u32 [#allocation8], 4
      %s62 = int_to_ptr.vmem [resolvable:$true] %s61
      %67 = dma.hbm_to_vmem [thread:$0]  %s60, 8192, %s62, [#allocation9], 256, 256, 16
    $region17: #{tpu_custom_call.1} parent=1 // pred_fallthru
      _
    // Predicated region
    $region18: #{tpu_custom_call.1} parent=1 // pred_check
      _
    $region19: #{tpu_custom_call.1} parent=1 // pred_check_branch
      %69 = sbr.rel (0) target = $region21
    $region20: #{tpu_custom_call.1} parent=1 // pred_region
      %71 = vsyncadd [#allocation9], 0
      %s73 = sshll.u32 %s4, 4
      %s74 = int_to_ptr.hbm [resolvable:$true] %s73
      %s75 = sshll.u32 [#allocation10], 4
      %s76 = int_to_ptr.vmem [resolvable:$true] %s75
      %78 = dma.hbm_to_vmem [thread:$0]  %s74, 64, %s76, [#allocation9]
    $region21: #{tpu_custom_call.1} parent=1 // pred_fallthru
      _
    // Predicated region
    $region22: #{tpu_custom_call.1} parent=1 // pred_check
      _
    $region23: #{tpu_custom_call.1} parent=1 // pred_check_branch
      %80 = sbr.rel (0) target = $region25
    $region24: #{tpu_custom_call.1} parent=1 // pred_region
      %82 = vsyncadd [#allocation12], 0
      %s83 = sshll.u32 %s5, 4
      %s84 = int_to_ptr.hbm [resolvable:$true] %s83
      %s85 = sshll.u32 [#allocation11], 4
      %s86 = int_to_ptr.vmem [resolvable:$true] %s85
      %91 = dma.hbm_to_vmem [thread:$0]  %s84, 32768, %s86, [#allocation12], 512, 512, 32
    $region25: #{tpu_custom_call.1} parent=1 // pred_fallthru
      _
    // Predicated region
    $region26: #{tpu_custom_call.1} parent=1 // pred_check
      _
    $region27: #{tpu_custom_call.1} parent=1 // pred_check_branch
      %93 = sbr.rel (0) target = $region29
    $region28: #{tpu_custom_call.1} parent=1 // pred_region
      %95 = vsyncadd [#allocation12], 0
      %s97 = sshll.u32 %s6, 4
      %s98 = int_to_ptr.hbm [resolvable:$true] %s97
      %s99 = sshll.u32 [#allocation13], 4
      %s100 = int_to_ptr.vmem [resolvable:$true] %s99
      %102 = dma.hbm_to_vmem [thread:$0]  %s98, 128, %s100, [#allocation12]
    $region29: #{tpu_custom_call.1} parent=1 // pred_fallthru
      _
    // Predicated region
    $region30: #{tpu_custom_call.1} parent=1 // pred_check
      _
    $region31: #{tpu_custom_call.1} parent=1 // pred_check_branch
      %104 = sbr.rel (0) target = $region33
    $region32: #{tpu_custom_call.1} parent=1 // pred_region
      %106 = vsyncadd [#allocation15], 0
      %s107 = sshll.u32 %s7, 4
      %s108 = int_to_ptr.hbm [resolvable:$true] %s107
      %s109 = sshll.u32 [#allocation14], 4
      %s110 = int_to_ptr.vmem [resolvable:$true] %s109
      %115 = dma.hbm_to_vmem [thread:$0]  %s108, 57344, %s110, [#allocation15], 448, 448, 28
    $region33: #{tpu_custom_call.1} parent=1 // pred_fallthru
      _
    // Predicated region
    $region34: #{tpu_custom_call.1} parent=1 // pred_check
      _
    $region35: #{tpu_custom_call.1} parent=1 // pred_check_branch
      %117 = sbr.rel (0) target = $region37
    $region36: #{tpu_custom_call.1} parent=1 // pred_region
      %119 = vsyncadd [#allocation15], 0
      %s121 = sshll.u32 %s8, 4
      %s122 = int_to_ptr.hbm [resolvable:$true] %s121
      %s123 = sshll.u32 [#allocation16], 4
      %s124 = int_to_ptr.vmem [resolvable:$true] %s123
      %126 = dma.hbm_to_vmem [thread:$0]  %s122, 112, %s124, [#allocation15]
    $region37: #{tpu_custom_call.1} parent=1 // pred_fallthru
      _
    // Predicated region
    $region38: #{tpu_custom_call.1} parent=1 // pred_check
      _
    $region39: #{tpu_custom_call.1} parent=1 // pred_check_branch
      %128 = sbr.rel (0) target = $region41
    $region40: #{tpu_custom_call.1} parent=1 // pred_region
      %130 = dma.done [#allocation3], 128
    $region41: #{tpu_custom_call.1} parent=1 // pred_fallthru
      _
    // Predicated region
    $region42: #{tpu_custom_call.1} parent=1 // pred_check
      _
    $region43: #{tpu_custom_call.1} parent=1 // pred_check_branch
      %132 = sbr.rel (0) target = $region45
    $region44: #{tpu_custom_call.1} parent=1 // pred_region
      %134 = dma.done [#allocation6], 512
    $region45: #{tpu_custom_call.1} parent=1 // pred_fallthru
      _
    // Predicated region
    $region46: #{tpu_custom_call.1} parent=1 // pred_check
      _
    $region47: #{tpu_custom_call.1} parent=1 // pred_check_branch
      %136 = sbr.rel (0) target = $region49
    $region48: #{tpu_custom_call.1} parent=1 // pred_region
      %138 = dma.done [#allocation6], 32
    $region49: #{tpu_custom_call.1} parent=1 // pred_fallthru
      _
    // Predicated region
    $region50: #{tpu_custom_call.1} parent=1 // pred_check
      _
    $region51: #{tpu_custom_call.1} parent=1 // pred_check_branch
      %140 = sbr.rel (0) target = $region53
    $region52: #{tpu_custom_call.1} parent=1 // pred_region
      %142 = dma.done [#allocation9], 8192
    $region53: #{tpu_custom_call.1} parent=1 // pred_fallthru
      _
    // Predicated region
    $region54: #{tpu_custom_call.1} parent=1 // pred_check
      _
    $region55: #{tpu_custom_call.1} parent=1 // pred_check_branch
      %144 = sbr.rel (0) target = $region57
    $region56: #{tpu_custom_call.1} parent=1 // pred_region
      %146 = dma.done [#allocation9], 64
    $region57: #{tpu_custom_call.1} parent=1 // pred_fallthru
      _
    // Predicated region
    $region58: #{tpu_custom_call.1} parent=1 // pred_check
      _
    $region59: #{tpu_custom_call.1} parent=1 // pred_check_branch
      %148 = sbr.rel (0) target = $region61
    $region60: #{tpu_custom_call.1} parent=1 // pred_region
      %150 = dma.done [#allocation12], 32768
    $region61: #{tpu_custom_call.1} parent=1 // pred_fallthru
      _
    // Predicated region
    $region62: #{tpu_custom_call.1} parent=1 // pred_check
      _
    $region63: #{tpu_custom_call.1} parent=1 // pred_check_branch
      %152 = sbr.rel (0) target = $region65
    $region64: #{tpu_custom_call.1} parent=1 // pred_region
      %154 = dma.done [#allocation12], 128
    $region65: #{tpu_custom_call.1} parent=1 // pred_fallthru
      _
    // Predicated region
    $region66: #{tpu_custom_call.1} parent=1 // pred_check
      _
    $region67: #{tpu_custom_call.1} parent=1 // pred_check_branch
      %156 = sbr.rel (0) target = $region69
    $region68: #{tpu_custom_call.1} parent=1 // pred_region
      %158 = dma.done [#allocation15], 57344
    $region69: #{tpu_custom_call.1} parent=1 // pred_fallthru
      _
    // Predicated region
    $region70: #{tpu_custom_call.1} parent=1 // pred_check
      _
    $region71: #{tpu_custom_call.1} parent=1 // pred_check_branch
      %160 = sbr.rel (0) target = $region73
    $region72: #{tpu_custom_call.1} parent=1 // pred_region
      %162 = dma.done [#allocation15], 112
    $region73: #{tpu_custom_call.1} parent=1 // pred_fallthru
      _
    %v164 = vld [vmem:[#allocation2] sm:$0xff]
    %v165 = vpack.c.bf16 %v164, %v164
    %v166 = vld [vmem:[#allocation5] sm:$0xff]
    %v167 = vld [vmem:[#allocation5 + $0x8] sm:$0xff]
    %v168 = vld [vmem:[#allocation5 + $0x10] sm:$0xff]
    %v169 = vld [vmem:[#allocation5 + $0x18] sm:$0xff]
    %v170 = vld [vmem:[#allocation7] sm:$0x3]
    %v172 = vperm.slane %v170, 0
    %v173 = vperm.slane %v170, 1
    %v180 = vunpack.c.l.b16 %v166
    %v181 = vunpack.c.h.b16 %v166
    %v182 = vunpack.c.l.b16 %v167
    %v183 = vunpack.c.h.b16 %v167
    %v184 = vunpack.c.l.b16 %v168
    %v185 = vunpack.c.h.b16 %v168
    %v186 = vunpack.c.l.b16 %v169
    %v187 = vunpack.c.h.b16 %v169
    %v188 = vpack.c.b16 %v182, %v180
    %v189 = vpack.c.b16 %v183, %v181
    %v190 = vpack.c.b16 %v186, %v184
    %v191 = vpack.c.b16 %v187, %v185
    %vm196 = vcmask 261120
    %v198 = vsel %vm196, %v165, 0
    %200 = vmatpush.bf16.msra.mxu0 0
    %201 = vmatpush.bf16.msra.mxu0 0
    %202 = vmatpush.bf16.msra.mxu0 0
    %203 = vmatpush.bf16.msra.mxu0 0
    %204 = vmatpush.bf16.msra.mxu0 0
    %205 = vmatpush.bf16.msra.mxu0 0
    %206 = vmatpush.bf16.msra.mxu0 %v190
    %207 = vmatpush.bf16.msra.mxu0 %v188
    %208 = vmatmul.bf16.gmra.mxu0 %v198
    %v209 = vpop.f32.mrf.mxu0
    %v210 = vadd.f32 %v172, %v209
    %v211 = vpop.f32.mrf.mxu0
    %212 = vdwg.mxu0
    %213 = vmatpush.bf16.msra.mxu0 0
    %214 = vmatpush.bf16.msra.mxu0 0
    %215 = vmatpush.bf16.msra.mxu0 0
    %216 = vmatpush.bf16.msra.mxu0 0
    %217 = vmatpush.bf16.msra.mxu0 0
    %218 = vmatpush.bf16.msra.mxu0 0
    %219 = vmatpush.bf16.msra.mxu0 %v191
    %220 = vmatpush.bf16.msra.mxu0 %v189
    %221 = vmatmul.bf16.gmra.mxu0 %v198
    %v222 = vpop.f32.mrf.mxu0
    %v223 = vadd.f32 %v173, %v222
    %v224 = vpop.f32.mrf.mxu0
    %225 = vdwg.mxu0
    %vm226 = vcmp.gt.f32.partialorder %v210, 0.0
    %vm227 = vcmp.gt.f32.partialorder %v223, 0.0
    %v228 = vmul.f32 %v210, 0.2
    %v229 = vmul.f32 %v223, 0.2
    %v230 = vsel %vm226, %v210, %v228
    %v231 = vsel %vm227, %v223, %v229
    %v232 = vpack.c.bf16 %v230, %v230
    %v233 = vpack.c.bf16 %v231, %v231
    %v234 = vld [vmem:[#allocation8] sm:$0xff]
    %v235 = vld [vmem:[#allocation8 + $0x8] sm:$0xff]
    %v236 = vld [vmem:[#allocation8 + $0x10] sm:$0xff]
    %v237 = vld [vmem:[#allocation8 + $0x18] sm:$0xff]
    %v238 = vld [vmem:[#allocation8 + $0x20] sm:$0xff]
    %v239 = vld [vmem:[#allocation8 + $0x28] sm:$0xff]
    %v240 = vld [vmem:[#allocation8 + $0x30] sm:$0xff]
    %v241 = vld [vmem:[#allocation8 + $0x38] sm:$0xff]
    %v242 = vld [vmem:[#allocation8 + $0x40] sm:$0xff]
    %v243 = vld [vmem:[#allocation8 + $0x48] sm:$0xff]
    %v244 = vld [vmem:[#allocation8 + $0x50] sm:$0xff]
    %v245 = vld [vmem:[#allocation8 + $0x58] sm:$0xff]
    %v246 = vld [vmem:[#allocation8 + $0x60] sm:$0xff]
    %v247 = vld [vmem:[#allocation8 + $0x68] sm:$0xff]
    %v248 = vld [vmem:[#allocation8 + $0x70] sm:$0xff]
    %v249 = vld [vmem:[#allocation8 + $0x78] sm:$0xff]
    %v250 = vld [vmem:[#allocation8 + $0x80] sm:$0xff]
    %v251 = vld [vmem:[#allocation8 + $0x88] sm:$0xff]
    %v252 = vld [vmem:[#allocation8 + $0x90] sm:$0xff]
    %v253 = vld [vmem:[#allocation8 + $0x98] sm:$0xff]
    %v254 = vld [vmem:[#allocation8 + $0xa0] sm:$0xff]
    %v255 = vld [vmem:[#allocation8 + $0xa8] sm:$0xff]
    %v256 = vld [vmem:[#allocation8 + $0xb0] sm:$0xff]
    %v257 = vld [vmem:[#allocation8 + $0xb8] sm:$0xff]
    %v258 = vld [vmem:[#allocation8 + $0xc0] sm:$0xff]
    %v259 = vld [vmem:[#allocation8 + $0xc8] sm:$0xff]
    %v260 = vld [vmem:[#allocation8 + $0xd0] sm:$0xff]
    %v261 = vld [vmem:[#allocation8 + $0xd8] sm:$0xff]
    %v262 = vld [vmem:[#allocation8 + $0xe0] sm:$0xff]
    %v263 = vld [vmem:[#allocation8 + $0xe8] sm:$0xff]
    %v264 = vld [vmem:[#allocation8 + $0xf0] sm:$0xff]
    %v265 = vld [vmem:[#allocation8 + $0xf8] sm:$0xff]
    %v266 = vld [vmem:[#allocation8 + $0x100] sm:$0xff]
    %v267 = vld [vmem:[#allocation8 + $0x108] sm:$0xff]
    %v268 = vld [vmem:[#allocation8 + $0x110] sm:$0xff]
    %v269 = vld [vmem:[#allocation8 + $0x118] sm:$0xff]
    %v270 = vld [vmem:[#allocation8 + $0x120] sm:$0xff]
    %v271 = vld [vmem:[#allocation8 + $0x128] sm:$0xff]
    %v272 = vld [vmem:[#allocation8 + $0x130] sm:$0xff]
    %v273 = vld [vmem:[#allocation8 + $0x138] sm:$0xff]
    %v274 = vld [vmem:[#allocation8 + $0x140] sm:$0xff]
    %v275 = vld [vmem:[#allocation8 + $0x148] sm:$0xff]
    %v276 = vld [vmem:[#allocation8 + $0x150] sm:$0xff]
    %v277 = vld [vmem:[#allocation8 + $0x158] sm:$0xff]
    %v278 = vld [vmem:[#allocation8 + $0x160] sm:$0xff]
    %v279 = vld [vmem:[#allocation8 + $0x168] sm:$0xff]
    %v280 = vld [vmem:[#allocation8 + $0x170] sm:$0xff]
    %v281 = vld [vmem:[#allocation8 + $0x178] sm:$0xff]
    %v282 = vld [vmem:[#allocation8 + $0x180] sm:$0xff]
    %v283 = vld [vmem:[#allocation8 + $0x188] sm:$0xff]
    %v284 = vld [vmem:[#allocation8 + $0x190] sm:$0xff]
    %v285 = vld [vmem:[#allocation8 + $0x198] sm:$0xff]
    %v286 = vld [vmem:[#allocation8 + $0x1a0] sm:$0xff]
    %v287 = vld [vmem:[#allocation8 + $0x1a8] sm:$0xff]
    %v288 = vld [vmem:[#allocation8 + $0x1b0] sm:$0xff]
    %v289 = vld [vmem:[#allocation8 + $0x1b8] sm:$0xff]
    %v290 = vld [vmem:[#allocation8 + $0x1c0] sm:$0xff]
    %v291 = vld [vmem:[#allocation8 + $0x1c8] sm:$0xff]
    %v292 = vld [vmem:[#allocation8 + $0x1d0] sm:$0xff]
    %v293 = vld [vmem:[#allocation8 + $0x1d8] sm:$0xff]
    %v294 = vld [vmem:[#allocation8 + $0x1e0] sm:$0xff]
    %v295 = vld [vmem:[#allocation8 + $0x1e8] sm:$0xff]
    %v296 = vld [vmem:[#allocation8 + $0x1f0] sm:$0xff]
    %v297 = vld [vmem:[#allocation8 + $0x1f8] sm:$0xff]
    %v298 = vld [vmem:[#allocation10] sm:$0xf]
    %v300 = vperm.slane %v298, 0
    %v301 = vperm.slane %v298, 1
    %v302 = vperm.slane %v298, 2
    %v303 = vperm.slane %v298, 3
    %v372 = vunpack.c.l.b16 %v234
    %v373 = vunpack.c.h.b16 %v234
    %v374 = vunpack.c.l.b16 %v235
    %v375 = vunpack.c.h.b16 %v235
    %v376 = vunpack.c.l.b16 %v236
    %v377 = vunpack.c.h.b16 %v236
    %v378 = vunpack.c.l.b16 %v237
    %v379 = vunpack.c.h.b16 %v237
    %v380 = vunpack.c.l.b16 %v238
    %v381 = vunpack.c.h.b16 %v238
    %v382 = vunpack.c.l.b16 %v239
    %v383 = vunpack.c.h.b16 %v239
    %v384 = vunpack.c.l.b16 %v240
    %v385 = vunpack.c.h.b16 %v240
    %v386 = vunpack.c.l.b16 %v241
    %v387 = vunpack.c.h.b16 %v241
    %v388 = vunpack.c.l.b16 %v242
    %v389 = vunpack.c.h.b16 %v242
    %v390 = vunpack.c.l.b16 %v243
    %v391 = vunpack.c.h.b16 %v243
    %v392 = vunpack.c.l.b16 %v244
    %v393 = vunpack.c.h.b16 %v244
    %v394 = vunpack.c.l.b16 %v245
    %v395 = vunpack.c.h.b16 %v245
    %v396 = vunpack.c.l.b16 %v246
    %v397 = vunpack.c.h.b16 %v246
    %v398 = vunpack.c.l.b16 %v247
    %v399 = vunpack.c.h.b16 %v247
    %v400 = vunpack.c.l.b16 %v248
    %v401 = vunpack.c.h.b16 %v248
    %v402 = vunpack.c.l.b16 %v249
    %v403 = vunpack.c.h.b16 %v249
    %v404 = vunpack.c.l.b16 %v250
    %v405 = vunpack.c.h.b16 %v250
    %v406 = vunpack.c.l.b16 %v251
    %v407 = vunpack.c.h.b16 %v251
    %v408 = vunpack.c.l.b16 %v252
    %v409 = vunpack.c.h.b16 %v252
    %v410 = vunpack.c.l.b16 %v253
    %v411 = vunpack.c.h.b16 %v253
    %v412 = vunpack.c.l.b16 %v254
    %v413 = vunpack.c.h.b16 %v254
    %v414 = vunpack.c.l.b16 %v255
    %v415 = vunpack.c.h.b16 %v255
    %v416 = vunpack.c.l.b16 %v256
    %v417 = vunpack.c.h.b16 %v256
    %v418 = vunpack.c.l.b16 %v257
    %v419 = vunpack.c.h.b16 %v257
    %v420 = vunpack.c.l.b16 %v258
    %v421 = vunpack.c.h.b16 %v258
    %v422 = vunpack.c.l.b16 %v259
    %v423 = vunpack.c.h.b16 %v259
    %v424 = vunpack.c.l.b16 %v260
    %v425 = vunpack.c.h.b16 %v260
    %v426 = vunpack.c.l.b16 %v261
    %v427 = vunpack.c.h.b16 %v261
    %v428 = vunpack.c.l.b16 %v262
    %v429 = vunpack.c.h.b16 %v262
    %v430 = vunpack.c.l.b16 %v263
    %v431 = vunpack.c.h.b16 %v263
    %v432 = vunpack.c.l.b16 %v264
    %v433 = vunpack.c.h.b16 %v264
    %v434 = vunpack.c.l.b16 %v265
    %v435 = vunpack.c.h.b16 %v265
    %v436 = vunpack.c.l.b16 %v266
    %v437 = vunpack.c.h.b16 %v266
    %v438 = vunpack.c.l.b16 %v267
    %v439 = vunpack.c.h.b16 %v267
    %v440 = vunpack.c.l.b16 %v268
    %v441 = vunpack.c.h.b16 %v268
    %v442 = vunpack.c.l.b16 %v269
    %v443 = vunpack.c.h.b16 %v269
    %v444 = vunpack.c.l.b16 %v270
    %v445 = vunpack.c.h.b16 %v270
    %v446 = vunpack.c.l.b16 %v271
    %v447 = vunpack.c.h.b16 %v271
    %v448 = vunpack.c.l.b16 %v272
    %v449 = vunpack.c.h.b16 %v272
    %v450 = vunpack.c.l.b16 %v273
    %v451 = vunpack.c.h.b16 %v273
    %v452 = vunpack.c.l.b16 %v274
    %v453 = vunpack.c.h.b16 %v274
    %v454 = vunpack.c.l.b16 %v275
    %v455 = vunpack.c.h.b16 %v275
    %v456 = vunpack.c.l.b16 %v276
    %v457 = vunpack.c.h.b16 %v276
    %v458 = vunpack.c.l.b16 %v277
    %v459 = vunpack.c.h.b16 %v277
    %v460 = vunpack.c.l.b16 %v278
    %v461 = vunpack.c.h.b16 %v278
    %v462 = vunpack.c.l.b16 %v279
    %v463 = vunpack.c.h.b16 %v279
    %v464 = vunpack.c.l.b16 %v280
    %v465 = vunpack.c.h.b16 %v280
    %v466 = vunpack.c.l.b16 %v281
    %v467 = vunpack.c.h.b16 %v281
    %v468 = vunpack.c.l.b16 %v282
    %v469 = vunpack.c.h.b16 %v282
    %v470 = vunpack.c.l.b16 %v283
    %v471 = vunpack.c.h.b16 %v283
    %v472 = vunpack.c.l.b16 %v284
    %v473 = vunpack.c.h.b16 %v284
    %v474 = vunpack.c.l.b16 %v285
    %v475 = vunpack.c.h.b16 %v285
    %v476 = vunpack.c.l.b16 %v286
    %v477 = vunpack.c.h.b16 %v286
    %v478 = vunpack.c.l.b16 %v287
    %v479 = vunpack.c.h.b16 %v287
    %v480 = vunpack.c.l.b16 %v288
    %v481 = vunpack.c.h.b16 %v288
    %v482 = vunpack.c.l.b16 %v289
    %v483 = vunpack.c.h.b16 %v289
    %v484 = vunpack.c.l.b16 %v290
    %v485 = vunpack.c.h.b16 %v290
    %v486 = vunpack.c.l.b16 %v291
    %v487 = vunpack.c.h.b16 %v291
    %v488 = vunpack.c.l.b16 %v292
    %v489 = vunpack.c.h.b16 %v292
    %v490 = vunpack.c.l.b16 %v293
    %v491 = vunpack.c.h.b16 %v293
    %v492 = vunpack.c.l.b16 %v294
    %v493 = vunpack.c.h.b16 %v294
    %v494 = vunpack.c.l.b16 %v295
    %v495 = vunpack.c.h.b16 %v295
    %v496 = vunpack.c.l.b16 %v296
    %v497 = vunpack.c.h.b16 %v296
    %v498 = vunpack.c.l.b16 %v297
    %v499 = vunpack.c.h.b16 %v297
    %v500 = vpack.c.b16 %v376, %v372
    %v501 = vpack.c.b16 %v377, %v373
    %v502 = vpack.c.b16 %v378, %v374
    %v503 = vpack.c.b16 %v379, %v375
    %v504 = vpack.c.b16 %v384, %v380
    %v505 = vpack.c.b16 %v385, %v381
    %v506 = vpack.c.b16 %v386, %v382
    %v507 = vpack.c.b16 %v387, %v383
    %v508 = vpack.c.b16 %v392, %v388
    %v509 = vpack.c.b16 %v393, %v389
    %v510 = vpack.c.b16 %v394, %v390
    %v511 = vpack.c.b16 %v395, %v391
    %v512 = vpack.c.b16 %v400, %v396
    %v513 = vpack.c.b16 %v401, %v397
    %v514 = vpack.c.b16 %v402, %v398
    %v515 = vpack.c.b16 %v403, %v399
    %v516 = vpack.c.b16 %v408, %v404
    %v517 = vpack.c.b16 %v409, %v405
    %v518 = vpack.c.b16 %v410, %v406
    %v519 = vpack.c.b16 %v411, %v407
    %v520 = vpack.c.b16 %v416, %v412
    %v521 = vpack.c.b16 %v417, %v413
    %v522 = vpack.c.b16 %v418, %v414
    %v523 = vpack.c.b16 %v419, %v415
    %v524 = vpack.c.b16 %v424, %v420
    %v525 = vpack.c.b16 %v425, %v421
    %v526 = vpack.c.b16 %v426, %v422
    %v527 = vpack.c.b16 %v427, %v423
    %v528 = vpack.c.b16 %v432, %v428
    %v529 = vpack.c.b16 %v433, %v429
    %v530 = vpack.c.b16 %v434, %v430
    %v531 = vpack.c.b16 %v435, %v431
    %v532 = vpack.c.b16 %v440, %v436
    %v533 = vpack.c.b16 %v441, %v437
    %v534 = vpack.c.b16 %v442, %v438
    %v535 = vpack.c.b16 %v443, %v439
    %v536 = vpack.c.b16 %v448, %v444
    %v537 = vpack.c.b16 %v449, %v445
    %v538 = vpack.c.b16 %v450, %v446
    %v539 = vpack.c.b16 %v451, %v447
    %v540 = vpack.c.b16 %v456, %v452
    %v541 = vpack.c.b16 %v457, %v453
    %v542 = vpack.c.b16 %v458, %v454
    %v543 = vpack.c.b16 %v459, %v455
    %v544 = vpack.c.b16 %v464, %v460
    %v545 = vpack.c.b16 %v465, %v461
    %v546 = vpack.c.b16 %v466, %v462
    %v547 = vpack.c.b16 %v467, %v463
    %v548 = vpack.c.b16 %v472, %v468
    %v549 = vpack.c.b16 %v473, %v469
    %v550 = vpack.c.b16 %v474, %v470
    %v551 = vpack.c.b16 %v475, %v471
    %v552 = vpack.c.b16 %v480, %v476
    %v553 = vpack.c.b16 %v481, %v477
    %v554 = vpack.c.b16 %v482, %v478
    %v555 = vpack.c.b16 %v483, %v479
    %v556 = vpack.c.b16 %v488, %v484
    %v557 = vpack.c.b16 %v489, %v485
    %v558 = vpack.c.b16 %v490, %v486
    %v559 = vpack.c.b16 %v491, %v487
    %v560 = vpack.c.b16 %v496, %v492
    %v561 = vpack.c.b16 %v497, %v493
    %v562 = vpack.c.b16 %v498, %v494
    %v563 = vpack.c.b16 %v499, %v495
    %628 = vmatpush.bf16.msra.mxu0 %v528
    %629 = vmatpush.bf16.msra.mxu0 %v524
    %630 = vmatpush.bf16.msra.mxu0 %v520
    %631 = vmatpush.bf16.msra.mxu0 %v516
    %632 = vmatpush.bf16.msra.mxu0 %v512
    %633 = vmatpush.bf16.msra.mxu0 %v508
    %634 = vmatpush.bf16.msra.mxu0 %v504
    %635 = vmatpush.bf16.msra.mxu0 %v500
    %636 = vmatmul.bf16.gmra.mxu0 %v232
    %v637 = vpop.f32.mrf.mxu0
    %v638 = vadd.f32 %v300, %v637
    %v639 = vpop.f32.mrf.mxu0
    %640 = vdwg.mxu0
    %641 = vmatpush.bf16.msra.mxu0 %v560
    %642 = vmatpush.bf16.msra.mxu0 %v556
    %643 = vmatpush.bf16.msra.mxu0 %v552
    %644 = vmatpush.bf16.msra.mxu0 %v548
    %645 = vmatpush.bf16.msra.mxu0 %v544
    %646 = vmatpush.bf16.msra.mxu0 %v540
    %647 = vmatpush.bf16.msra.mxu0 %v536
    %648 = vmatpush.bf16.msra.mxu0 %v532
    %649 = vmatmul.bf16.gmra.mxu0 %v233
    %v650 = vpop.f32.mrf.mxu0
    %v651 = vadd.f32 %v638, %v650
    %v652 = vpop.f32.mrf.mxu0
    %653 = vdwg.mxu0
    %654 = vmatpush.bf16.msra.mxu0 %v529
    %655 = vmatpush.bf16.msra.mxu0 %v525
    %656 = vmatpush.bf16.msra.mxu0 %v521
    %657 = vmatpush.bf16.msra.mxu0 %v517
    %658 = vmatpush.bf16.msra.mxu0 %v513
    %659 = vmatpush.bf16.msra.mxu0 %v509
    %660 = vmatpush.bf16.msra.mxu0 %v505
    %661 = vmatpush.bf16.msra.mxu0 %v501
    %662 = vmatmul.bf16.gmra.mxu0 %v232
    %v663 = vpop.f32.mrf.mxu0
    %v664 = vadd.f32 %v301, %v663
    %v665 = vpop.f32.mrf.mxu0
    %666 = vdwg.mxu0
    %667 = vmatpush.bf16.msra.mxu0 %v561
    %668 = vmatpush.bf16.msra.mxu0 %v557
    %669 = vmatpush.bf16.msra.mxu0 %v553
    %670 = vmatpush.bf16.msra.mxu0 %v549
    %671 = vmatpush.bf16.msra.mxu0 %v545
    %672 = vmatpush.bf16.msra.mxu0 %v541
    %673 = vmatpush.bf16.msra.mxu0 %v537
    %674 = vmatpush.bf16.msra.mxu0 %v533
    %675 = vmatmul.bf16.gmra.mxu0 %v233
    %v676 = vpop.f32.mrf.mxu0
    %v677 = vadd.f32 %v664, %v676
    %v678 = vpop.f32.mrf.mxu0
    %679 = vdwg.mxu0
    %680 = vmatpush.bf16.msra.mxu0 %v530
    %681 = vmatpush.bf16.msra.mxu0 %v526
    %682 = vmatpush.bf16.msra.mxu0 %v522
    %683 = vmatpush.bf16.msra.mxu0 %v518
    %684 = vmatpush.bf16.msra.mxu0 %v514
    %685 = vmatpush.bf16.msra.mxu0 %v510
    %686 = vmatpush.bf16.msra.mxu0 %v506
    %687 = vmatpush.bf16.msra.mxu0 %v502
    %688 = vmatmul.bf16.gmra.mxu0 %v232
    %v689 = vpop.f32.mrf.mxu0
    %v690 = vadd.f32 %v302, %v689
    %v691 = vpop.f32.mrf.mxu0
    %692 = vdwg.mxu0
    %693 = vmatpush.bf16.msra.mxu0 %v562
    %694 = vmatpush.bf16.msra.mxu0 %v558
    %695 = vmatpush.bf16.msra.mxu0 %v554
    %696 = vmatpush.bf16.msra.mxu0 %v550
    %697 = vmatpush.bf16.msra.mxu0 %v546
    %698 = vmatpush.bf16.msra.mxu0 %v542
    %699 = vmatpush.bf16.msra.mxu0 %v538
    %700 = vmatpush.bf16.msra.mxu0 %v534
    %701 = vmatmul.bf16.gmra.mxu0 %v233
    %v702 = vpop.f32.mrf.mxu0
    %v703 = vadd.f32 %v690, %v702
    %v704 = vpop.f32.mrf.mxu0
    %705 = vdwg.mxu0
    %706 = vmatpush.bf16.msra.mxu0 %v531
    %707 = vmatpush.bf16.msra.mxu0 %v527
    %708 = vmatpush.bf16.msra.mxu0 %v523
    %709 = vmatpush.bf16.msra.mxu0 %v519
    %710 = vmatpush.bf16.msra.mxu0 %v515
    %711 = vmatpush.bf16.msra.mxu0 %v511
    %712 = vmatpush.bf16.msra.mxu0 %v507
    %713 = vmatpush.bf16.msra.mxu0 %v503
    %714 = vmatmul.bf16.gmra.mxu0 %v232
    %v715 = vpop.f32.mrf.mxu0
    %v716 = vadd.f32 %v303, %v715
    %v717 = vpop.f32.mrf.mxu0
    %718 = vdwg.mxu0
    %719 = vmatpush.bf16.msra.mxu0 %v563
    %720 = vmatpush.bf16.msra.mxu0 %v559
    %721 = vmatpush.bf16.msra.mxu0 %v555
    %722 = vmatpush.bf16.msra.mxu0 %v551
    %723 = vmatpush.bf16.msra.mxu0 %v547
    %724 = vmatpush.bf16.msra.mxu0 %v543
    %725 = vmatpush.bf16.msra.mxu0 %v539
    %726 = vmatpush.bf16.msra.mxu0 %v535
    %727 = vmatmul.bf16.gmra.mxu0 %v233
    %v728 = vpop.f32.mrf.mxu0
    %v729 = vadd.f32 %v716, %v728
    %v730 = vpop.f32.mrf.mxu0
    %731 = vdwg.mxu0
    %vm732 = vcmp.gt.f32.partialorder %v651, 0.0
    %vm733 = vcmp.gt.f32.partialorder %v677, 0.0
    %vm734 = vcmp.gt.f32.partialorder %v703, 0.0
    %vm735 = vcmp.gt.f32.partialorder %v729, 0.0
    %v736 = vmul.f32 %v651, 0.2
    %v737 = vmul.f32 %v677, 0.2
    %v738 = vmul.f32 %v703, 0.2
    %v739 = vmul.f32 %v729, 0.2
    %v740 = vsel %vm732, %v651, %v736
    %v741 = vsel %vm733, %v677, %v737
    %v742 = vsel %vm734, %v703, %v738
    %v743 = vsel %vm735, %v729, %v739
    %v744 = vpack.c.bf16 %v740, %v740
    %v745 = vpack.c.bf16 %v741, %v741
    %v746 = vpack.c.bf16 %v742, %v742
    %v747 = vpack.c.bf16 %v743, %v743
    %v748 = vld [vmem:[#allocation11] sm:$0xff]
    %v749 = vld [vmem:[#allocation11 + $0x8] sm:$0xff]
    %v750 = vld [vmem:[#allocation11 + $0x10] sm:$0xff]
    %v751 = vld [vmem:[#allocation11 + $0x18] sm:$0xff]
    %v752 = vld [vmem:[#allocation11 + $0x20] sm:$0xff]
    %v753 = vld [vmem:[#allocation11 + $0x28] sm:$0xff]
    %v754 = vld [vmem:[#allocation11 + $0x30] sm:$0xff]
    %v755 = vld [vmem:[#allocation11 + $0x38] sm:$0xff]
    %v756 = vld [vmem:[#allocation11 + $0x40] sm:$0xff]
    %v757 = vld [vmem:[#allocation11 + $0x48] sm:$0xff]
    %v758 = vld [vmem:[#allocation11 + $0x50] sm:$0xff]
    %v759 = vld [vmem:[#allocation11 + $0x58] sm:$0xff]
    %v760 = vld [vmem:[#allocation11 + $0x60] sm:$0xff]
    %v761 = vld [vmem:[#allocation11 + $0x68] sm:$0xff]
    %v762 = vld [vmem:[#allocation11 + $0x70] sm:$0xff]
    %v763 = vld [vmem:[#allocation11 + $0x78] sm:$0xff]
    %v764 = vld [vmem:[#allocation11 + $0x80] sm:$0xff]
    %v765 = vld [vmem:[#allocation11 + $0x88] sm:$0xff]
    %v766 = vld [vmem:[#allocation11 + $0x90] sm:$0xff]
    %v767 = vld [vmem:[#allocation11 + $0x98] sm:$0xff]
    %v768 = vld [vmem:[#allocation11 + $0xa0] sm:$0xff]
    %v769 = vld [vmem:[#allocation11 + $0xa8] sm:$0xff]
    %v770 = vld [vmem:[#allocation11 + $0xb0] sm:$0xff]
    %v771 = vld [vmem:[#allocation11 + $0xb8] sm:$0xff]
    %v772 = vld [vmem:[#allocation11 + $0xc0] sm:$0xff]
    %v773 = vld [vmem:[#allocation11 + $0xc8] sm:$0xff]
    %v774 = vld [vmem:[#allocation11 + $0xd0] sm:$0xff]
    %v775 = vld [vmem:[#allocation11 + $0xd8] sm:$0xff]
    %v776 = vld [vmem:[#allocation11 + $0xe0] sm:$0xff]
    %v777 = vld [vmem:[#allocation11 + $0xe8] sm:$0xff]
    %v778 = vld [vmem:[#allocation11 + $0xf0] sm:$0xff]
    %v779 = vld [vmem:[#allocation11 + $0xf8] sm:$0xff]
    %v780 = vld [vmem:[#allocation11 + $0x100] sm:$0xff]
    %v781 = vld [vmem:[#allocation11 + $0x108] sm:$0xff]
    %v782 = vld [vmem:[#allocation11 + $0x110] sm:$0xff]
    %v783 = vld [vmem:[#allocation11 + $0x118] sm:$0xff]
    %v784 = vld [vmem:[#allocation11 + $0x120] sm:$0xff]
    %v785 = vld [vmem:[#allocation11 + $0x128] sm:$0xff]
    %v786 = vld [vmem:[#allocation11 + $0x130] sm:$0xff]
    %v787 = vld [vmem:[#allocation11 + $0x138] sm:$0xff]
    %v788 = vld [vmem:[#allocation11 + $0x140] sm:$0xff]
    %v789 = vld [vmem:[#allocation11 + $0x148] sm:$0xff]
    %v790 = vld [vmem:[#allocation11 + $0x150] sm:$0xff]
    %v791 = vld [vmem:[#allocation11 + $0x158] sm:$0xff]
    %v792 = vld [vmem:[#allocation11 + $0x160] sm:$0xff]
    %v793 = vld [vmem:[#allocation11 + $0x168] sm:$0xff]
    %v794 = vld [vmem:[#allocation11 + $0x170] sm:$0xff]
    %v795 = vld [vmem:[#allocation11 + $0x178] sm:$0xff]
    %v796 = vld [vmem:[#allocation11 + $0x180] sm:$0xff]
    %v797 = vld [vmem:[#allocation11 + $0x188] sm:$0xff]
    %v798 = vld [vmem:[#allocation11 + $0x190] sm:$0xff]
    %v799 = vld [vmem:[#allocation11 + $0x198] sm:$0xff]
    %v800 = vld [vmem:[#allocation11 + $0x1a0] sm:$0xff]
    %v801 = vld [vmem:[#allocation11 + $0x1a8] sm:$0xff]
    %v802 = vld [vmem:[#allocation11 + $0x1b0] sm:$0xff]
    %v803 = vld [vmem:[#allocation11 + $0x1b8] sm:$0xff]
    %v804 = vld [vmem:[#allocation11 + $0x1c0] sm:$0xff]
    %v805 = vld [vmem:[#allocation11 + $0x1c8] sm:$0xff]
    %v806 = vld [vmem:[#allocation11 + $0x1d0] sm:$0xff]
    %v807 = vld [vmem:[#allocation11 + $0x1d8] sm:$0xff]
    %v808 = vld [vmem:[#allocation11 + $0x1e0] sm:$0xff]
    %v809 = vld [vmem:[#allocation11 + $0x1e8] sm:$0xff]
    %v810 = vld [vmem:[#allocation11 + $0x1f0] sm:$0xff]
    %v811 = vld [vmem:[#allocation11 + $0x1f8] sm:$0xff]
    %v812 = vld [vmem:[#allocation11 + $0x200] sm:$0xff]
    %v813 = vld [vmem:[#allocation11 + $0x208] sm:$0xff]
    %v814 = vld [vmem:[#allocation11 + $0x210] sm:$0xff]
    %v815 = vld [vmem:[#allocation11 + $0x218] sm:$0xff]
    %v816 = vld [vmem:[#allocation11 + $0x220] sm:$0xff]
    %v817 = vld [vmem:[#allocation11 + $0x228] sm:$0xff]
    %v818 = vld [vmem:[#allocation11 + $0x230] sm:$0xff]
    %v819 = vld [vmem:[#allocation11 + $0x238] sm:$0xff]
    %v820 = vld [vmem:[#allocation11 + $0x240] sm:$0xff]
    %v821 = vld [vmem:[#allocation11 + $0x248] sm:$0xff]
    %v822 = vld [vmem:[#allocation11 + $0x250] sm:$0xff]
    %v823 = vld [vmem:[#allocation11 + $0x258] sm:$0xff]
    %v824 = vld [vmem:[#allocation11 + $0x260] sm:$0xff]
    %v825 = vld [vmem:[#allocation11 + $0x268] sm:$0xff]
    %v826 = vld [vmem:[#allocation11 + $0x270] sm:$0xff]
    %v827 = vld [vmem:[#allocation11 + $0x278] sm:$0xff]
    %v828 = vld [vmem:[#allocation11 + $0x280] sm:$0xff]
    %v829 = vld [vmem:[#allocation11 + $0x288] sm:$0xff]
    %v830 = vld [vmem:[#allocation11 + $0x290] sm:$0xff]
    %v831 = vld [vmem:[#allocation11 + $0x298] sm:$0xff]
    %v832 = vld [vmem:[#allocation11 + $0x2a0] sm:$0xff]
    %v833 = vld [vmem:[#allocation11 + $0x2a8] sm:$0xff]
    %v834 = vld [vmem:[#allocation11 + $0x2b0] sm:$0xff]
    %v835 = vld [vmem:[#allocation11 + $0x2b8] sm:$0xff]
    %v836 = vld [vmem:[#allocation11 + $0x2c0] sm:$0xff]
    %v837 = vld [vmem:[#allocation11 + $0x2c8] sm:$0xff]
    %v838 = vld [vmem:[#allocation11 + $0x2d0] sm:$0xff]
    %v839 = vld [vmem:[#allocation11 + $0x2d8] sm:$0xff]
    %v840 = vld [vmem:[#allocation11 + $0x2e0] sm:$0xff]
    %v841 = vld [vmem:[#allocation11 + $0x2e8] sm:$0xff]
    %v842 = vld [vmem:[#allocation11 + $0x2f0] sm:$0xff]
    %v843 = vld [vmem:[#allocation11 + $0x2f8] sm:$0xff]
    %v844 = vld [vmem:[#allocation11 + $0x300] sm:$0xff]
    %v845 = vld [vmem:[#allocation11 + $0x308] sm:$0xff]
    %v846 = vld [vmem:[#allocation11 + $0x310] sm:$0xff]
    %v847 = vld [vmem:[#allocation11 + $0x318] sm:$0xff]
    %v848 = vld [vmem:[#allocation11 + $0x320] sm:$0xff]
    %v849 = vld [vmem:[#allocation11 + $0x328] sm:$0xff]
    %v850 = vld [vmem:[#allocation11 + $0x330] sm:$0xff]
    %v851 = vld [vmem:[#allocation11 + $0x338] sm:$0xff]
    %v852 = vld [vmem:[#allocation11 + $0x340] sm:$0xff]
    %v853 = vld [vmem:[#allocation11 + $0x348] sm:$0xff]
    %v854 = vld [vmem:[#allocation11 + $0x350] sm:$0xff]
    %v855 = vld [vmem:[#allocation11 + $0x358] sm:$0xff]
    %v856 = vld [vmem:[#allocation11 + $0x360] sm:$0xff]
    %v857 = vld [vmem:[#allocation11 + $0x368] sm:$0xff]
    %v858 = vld [vmem:[#allocation11 + $0x370] sm:$0xff]
    %v859 = vld [vmem:[#allocation11 + $0x378] sm:$0xff]
    %v860 = vld [vmem:[#allocation11 + $0x380] sm:$0xff]
    %v861 = vld [vmem:[#allocation11 + $0x388] sm:$0xff]
    %v862 = vld [vmem:[#allocation11 + $0x390] sm:$0xff]
    %v863 = vld [vmem:[#allocation11 + $0x398] sm:$0xff]
    %v864 = vld [vmem:[#allocation11 + $0x3a0] sm:$0xff]
    %v865 = vld [vmem:[#allocation11 + $0x3a8] sm:$0xff]
    %v866 = vld [vmem:[#allocation11 + $0x3b0] sm:$0xff]
    %v867 = vld [vmem:[#allocation11 + $0x3b8] sm:$0xff]
    %v868 = vld [vmem:[#allocation11 + $0x3c0] sm:$0xff]
    %v869 = vld [vmem:[#allocation11 + $0x3c8] sm:$0xff]
    %v870 = vld [vmem:[#allocation11 + $0x3d0] sm:$0xff]
    %v871 = vld [vmem:[#allocation11 + $0x3d8] sm:$0xff]
    %v872 = vld [vmem:[#allocation11 + $0x3e0] sm:$0xff]
    %v873 = vld [vmem:[#allocation11 + $0x3e8] sm:$0xff]
    %v874 = vld [vmem:[#allocation11 + $0x3f0] sm:$0xff]
    %v875 = vld [vmem:[#allocation11 + $0x3f8] sm:$0xff]
    %v876 = vld [vmem:[#allocation11 + $0x400] sm:$0xff]
    %v877 = vld [vmem:[#allocation11 + $0x408] sm:$0xff]
    %v878 = vld [vmem:[#allocation11 + $0x410] sm:$0xff]
    %v879 = vld [vmem:[#allocation11 + $0x418] sm:$0xff]
    %v880 = vld [vmem:[#allocation11 + $0x420] sm:$0xff]
    %v881 = vld [vmem:[#allocation11 + $0x428] sm:$0xff]
    %v882 = vld [vmem:[#allocation11 + $0x430] sm:$0xff]
    %v883 = vld [vmem:[#allocation11 + $0x438] sm:$0xff]
    %v884 = vld [vmem:[#allocation11 + $0x440] sm:$0xff]
    %v885 = vld [vmem:[#allocation11 + $0x448] sm:$0xff]
    %v886 = vld [vmem:[#allocation11 + $0x450] sm:$0xff]
    %v887 = vld [vmem:[#allocation11 + $0x458] sm:$0xff]
    %v888 = vld [vmem:[#allocation11 + $0x460] sm:$0xff]
    %v889 = vld [vmem:[#allocation11 + $0x468] sm:$0xff]
    %v890 = vld [vmem:[#allocation11 + $0x470] sm:$0xff]
    %v891 = vld [vmem:[#allocation11 + $0x478] sm:$0xff]
    %v892 = vld [vmem:[#allocation11 + $0x480] sm:$0xff]
    %v893 = vld [vmem:[#allocation11 + $0x488] sm:$0xff]
    %v894 = vld [vmem:[#allocation11 + $0x490] sm:$0xff]
    %v895 = vld [vmem:[#allocation11 + $0x498] sm:$0xff]
    %v896 = vld [vmem:[#allocation11 + $0x4a0] sm:$0xff]
    %v897 = vld [vmem:[#allocation11 + $0x4a8] sm:$0xff]
    %v898 = vld [vmem:[#allocation11 + $0x4b0] sm:$0xff]
    %v899 = vld [vmem:[#allocation11 + $0x4b8] sm:$0xff]
    %v900 = vld [vmem:[#allocation11 + $0x4c0] sm:$0xff]
    %v901 = vld [vmem:[#allocation11 + $0x4c8] sm:$0xff]
    %v902 = vld [vmem:[#allocation11 + $0x4d0] sm:$0xff]
    %v903 = vld [vmem:[#allocation11 + $0x4d8] sm:$0xff]
    %v904 = vld [vmem:[#allocation11 + $0x4e0] sm:$0xff]
    %v905 = vld [vmem:[#allocation11 + $0x4e8] sm:$0xff]
    %v906 = vld [vmem:[#allocation11 + $0x4f0] sm:$0xff]
    %v907 = vld [vmem:[#allocation11 + $0x4f8] sm:$0xff]
    %v908 = vld [vmem:[#allocation11 + $0x500] sm:$0xff]
    %v909 = vld [vmem:[#allocation11 + $0x508] sm:$0xff]
    %v910 = vld [vmem:[#allocation11 + $0x510] sm:$0xff]
    %v911 = vld [vmem:[#allocation11 + $0x518] sm:$0xff]
    %v912 = vld [vmem:[#allocation11 + $0x520] sm:$0xff]
    %v913 = vld [vmem:[#allocation11 + $0x528] sm:$0xff]
    %v914 = vld [vmem:[#allocation11 + $0x530] sm:$0xff]
    %v915 = vld [vmem:[#allocation11 + $0x538] sm:$0xff]
    %v916 = vld [vmem:[#allocation11 + $0x540] sm:$0xff]
    %v917 = vld [vmem:[#allocation11 + $0x548] sm:$0xff]
    %v918 = vld [vmem:[#allocation11 + $0x550] sm:$0xff]
    %v919 = vld [vmem:[#allocation11 + $0x558] sm:$0xff]
    %v920 = vld [vmem:[#allocation11 + $0x560] sm:$0xff]
    %v921 = vld [vmem:[#allocation11 + $0x568] sm:$0xff]
    %v922 = vld [vmem:[#allocation11 + $0x570] sm:$0xff]
    %v923 = vld [vmem:[#allocation11 + $0x578] sm:$0xff]
    %v924 = vld [vmem:[#allocation11 + $0x580] sm:$0xff]
    %v925 = vld [vmem:[#allocation11 + $0x588] sm:$0xff]
    %v926 = vld [vmem:[#allocation11 + $0x590] sm:$0xff]
    %v927 = vld [vmem:[#allocation11 + $0x598] sm:$0xff]
    %v928 = vld [vmem:[#allocation11 + $0x5a0] sm:$0xff]
    %v929 = vld [vmem:[#allocation11 + $0x5a8] sm:$0xff]
    %v930 = vld [vmem:[#allocation11 + $0x5b0] sm:$0xff]
    %v931 = vld [vmem:[#allocation11 + $0x5b8] sm:$0xff]
    %v932 = vld [vmem:[#allocation11 + $0x5c0] sm:$0xff]
    %v933 = vld [vmem:[#allocation11 + $0x5c8] sm:$0xff]
    %v934 = vld [vmem:[#allocation11 + $0x5d0] sm:$0xff]
    %v935 = vld [vmem:[#allocation11 + $0x5d8] sm:$0xff]
    %v936 = vld [vmem:[#allocation11 + $0x5e0] sm:$0xff]
    %v937 = vld [vmem:[#allocation11 + $0x5e8] sm:$0xff]
    %v938 = vld [vmem:[#allocation11 + $0x5f0] sm:$0xff]
    %v939 = vld [vmem:[#allocation11 + $0x5f8] sm:$0xff]
    %v940 = vld [vmem:[#allocation11 + $0x600] sm:$0xff]
    %v941 = vld [vmem:[#allocation11 + $0x608] sm:$0xff]
    %v942 = vld [vmem:[#allocation11 + $0x610] sm:$0xff]
    %v943 = vld [vmem:[#allocation11 + $0x618] sm:$0xff]
    %v944 = vld [vmem:[#allocation11 + $0x620] sm:$0xff]
    %v945 = vld [vmem:[#allocation11 + $0x628] sm:$0xff]
    %v946 = vld [vmem:[#allocation11 + $0x630] sm:$0xff]
    %v947 = vld [vmem:[#allocation11 + $0x638] sm:$0xff]
    %v948 = vld [vmem:[#allocation11 + $0x640] sm:$0xff]
    %v949 = vld [vmem:[#allocation11 + $0x648] sm:$0xff]
    %v950 = vld [vmem:[#allocation11 + $0x650] sm:$0xff]
    %v951 = vld [vmem:[#allocation11 + $0x658] sm:$0xff]
    %v952 = vld [vmem:[#allocation11 + $0x660] sm:$0xff]
    %v953 = vld [vmem:[#allocation11 + $0x668] sm:$0xff]
    %v954 = vld [vmem:[#allocation11 + $0x670] sm:$0xff]
    %v955 = vld [vmem:[#allocation11 + $0x678] sm:$0xff]
    %v956 = vld [vmem:[#allocation11 + $0x680] sm:$0xff]
    %v957 = vld [vmem:[#allocation11 + $0x688] sm:$0xff]
    %v958 = vld [vmem:[#allocation11 + $0x690] sm:$0xff]
    %v959 = vld [vmem:[#allocation11 + $0x698] sm:$0xff]
    %v960 = vld [vmem:[#allocation11 + $0x6a0] sm:$0xff]
    %v961 = vld [vmem:[#allocation11 + $0x6a8] sm:$0xff]
    %v962 = vld [vmem:[#allocation11 + $0x6b0] sm:$0xff]
    %v963 = vld [vmem:[#allocation11 + $0x6b8] sm:$0xff]
    %v964 = vld [vmem:[#allocation11 + $0x6c0] sm:$0xff]
    %v965 = vld [vmem:[#allocation11 + $0x6c8] sm:$0xff]
    %v966 = vld [vmem:[#allocation11 + $0x6d0] sm:$0xff]
    %v967 = vld [vmem:[#allocation11 + $0x6d8] sm:$0xff]
    %v968 = vld [vmem:[#allocation11 + $0x6e0] sm:$0xff]
    %v969 = vld [vmem:[#allocation11 + $0x6e8] sm:$0xff]
    %v970 = vld [vmem:[#allocation11 + $0x6f0] sm:$0xff]
    %v971 = vld [vmem:[#allocation11 + $0x6f8] sm:$0xff]
    %v972 = vld [vmem:[#allocation11 + $0x700] sm:$0xff]
    %v973 = vld [vmem:[#allocation11 + $0x708] sm:$0xff]
    %v974 = vld [vmem:[#allocation11 + $0x710] sm:$0xff]
    %v975 = vld [vmem:[#allocation11 + $0x718] sm:$0xff]
    %v976 = vld [vmem:[#allocation11 + $0x720] sm:$0xff]
    %v977 = vld [vmem:[#allocation11 + $0x728] sm:$0xff]
    %v978 = vld [vmem:[#allocation11 + $0x730] sm:$0xff]
    %v979 = vld [vmem:[#allocation11 + $0x738] sm:$0xff]
    %v980 = vld [vmem:[#allocation11 + $0x740] sm:$0xff]
    %v981 = vld [vmem:[#allocation11 + $0x748] sm:$0xff]
    %v982 = vld [vmem:[#allocation11 + $0x750] sm:$0xff]
    %v983 = vld [vmem:[#allocation11 + $0x758] sm:$0xff]
    %v984 = vld [vmem:[#allocation11 + $0x760] sm:$0xff]
    %v985 = vld [vmem:[#allocation11 + $0x768] sm:$0xff]
    %v986 = vld [vmem:[#allocation11 + $0x770] sm:$0xff]
    %v987 = vld [vmem:[#allocation11 + $0x778] sm:$0xff]
    %v988 = vld [vmem:[#allocation11 + $0x780] sm:$0xff]
    %v989 = vld [vmem:[#allocation11 + $0x788] sm:$0xff]
    %v990 = vld [vmem:[#allocation11 + $0x790] sm:$0xff]
    %v991 = vld [vmem:[#allocation11 + $0x798] sm:$0xff]
    %v992 = vld [vmem:[#allocation11 + $0x7a0] sm:$0xff]
    %v993 = vld [vmem:[#allocation11 + $0x7a8] sm:$0xff]
    %v994 = vld [vmem:[#allocation11 + $0x7b0] sm:$0xff]
    %v995 = vld [vmem:[#allocation11 + $0x7b8] sm:$0xff]
    %v996 = vld [vmem:[#allocation11 + $0x7c0] sm:$0xff]
    %v997 = vld [vmem:[#allocation11 + $0x7c8] sm:$0xff]
    %v998 = vld [vmem:[#allocation11 + $0x7d0] sm:$0xff]
    %v999 = vld [vmem:[#allocation11 + $0x7d8] sm:$0xff]
    %v1000 = vld [vmem:[#allocation11 + $0x7e0] sm:$0xff]
    %v1001 = vld [vmem:[#allocation11 + $0x7e8] sm:$0xff]
    %v1002 = vld [vmem:[#allocation11 + $0x7f0] sm:$0xff]
    %v1003 = vld [vmem:[#allocation11 + $0x7f8] sm:$0xff]
    %v1004 = vld [vmem:[#allocation13] sm:$0xff]
    %v1006 = vperm.slane %v1004, 0
    %v1007 = vperm.slane %v1004, 1
    %v1008 = vperm.slane %v1004, 2
    %v1009 = vperm.slane %v1004, 3
    %v1010 = vperm.slane %v1004, 4
    %v1011 = vperm.slane %v1004, 5
    %v1012 = vperm.slane %v1004, 6
    %v1013 = vperm.slane %v1004, 7
    %v1278 = vunpack.c.l.b16 %v748
    %v1279 = vunpack.c.h.b16 %v748
    %v1280 = vunpack.c.l.b16 %v749
    %v1281 = vunpack.c.h.b16 %v749
    %v1282 = vunpack.c.l.b16 %v750
    %v1283 = vunpack.c.h.b16 %v750
    %v1284 = vunpack.c.l.b16 %v751
    %v1285 = vunpack.c.h.b16 %v751
    %v1286 = vunpack.c.l.b16 %v752
    %v1287 = vunpack.c.h.b16 %v752
    %v1288 = vunpack.c.l.b16 %v753
    %v1289 = vunpack.c.h.b16 %v753
    %v1290 = vunpack.c.l.b16 %v754
    %v1291 = vunpack.c.h.b16 %v754
    %v1292 = vunpack.c.l.b16 %v755
    %v1293 = vunpack.c.h.b16 %v755
    %v1294 = vunpack.c.l.b16 %v756
    %v1295 = vunpack.c.h.b16 %v756
    %v1296 = vunpack.c.l.b16 %v757
    %v1297 = vunpack.c.h.b16 %v757
    %v1298 = vunpack.c.l.b16 %v758
    %v1299 = vunpack.c.h.b16 %v758
    %v1300 = vunpack.c.l.b16 %v759
    %v1301 = vunpack.c.h.b16 %v759
    %v1302 = vunpack.c.l.b16 %v760
    %v1303 = vunpack.c.h.b16 %v760
    %v1304 = vunpack.c.l.b16 %v761
    %v1305 = vunpack.c.h.b16 %v761
    %v1306 = vunpack.c.l.b16 %v762
    %v1307 = vunpack.c.h.b16 %v762
    %v1308 = vunpack.c.l.b16 %v763
    %v1309 = vunpack.c.h.b16 %v763
    %v1310 = vunpack.c.l.b16 %v764
    %v1311 = vunpack.c.h.b16 %v764
    %v1312 = vunpack.c.l.b16 %v765
    %v1313 = vunpack.c.h.b16 %v765
    %v1314 = vunpack.c.l.b16 %v766
    %v1315 = vunpack.c.h.b16 %v766
    %v1316 = vunpack.c.l.b16 %v767
    %v1317 = vunpack.c.h.b16 %v767
    %v1318 = vunpack.c.l.b16 %v768
    %v1319 = vunpack.c.h.b16 %v768
    %v1320 = vunpack.c.l.b16 %v769
    %v1321 = vunpack.c.h.b16 %v769
    %v1322 = vunpack.c.l.b16 %v770
    %v1323 = vunpack.c.h.b16 %v770
    %v1324 = vunpack.c.l.b16 %v771
    %v1325 = vunpack.c.h.b16 %v771
    %v1326 = vunpack.c.l.b16 %v772
    %v1327 = vunpack.c.h.b16 %v772
    %v1328 = vunpack.c.l.b16 %v773
    %v1329 = vunpack.c.h.b16 %v773
    %v1330 = vunpack.c.l.b16 %v774
    %v1331 = vunpack.c.h.b16 %v774
    %v1332 = vunpack.c.l.b16 %v775
    %v1333 = vunpack.c.h.b16 %v775
    %v1334 = vunpack.c.l.b16 %v776
    %v1335 = vunpack.c.h.b16 %v776
    %v1336 = vunpack.c.l.b16 %v777
    %v1337 = vunpack.c.h.b16 %v777
    %v1338 = vunpack.c.l.b16 %v778
    %v1339 = vunpack.c.h.b16 %v778
    %v1340 = vunpack.c.l.b16 %v779
    %v1341 = vunpack.c.h.b16 %v779
    %v1342 = vunpack.c.l.b16 %v780
    %v1343 = vunpack.c.h.b16 %v780
    %v1344 = vunpack.c.l.b16 %v781
    %v1345 = vunpack.c.h.b16 %v781
    %v1346 = vunpack.c.l.b16 %v782
    %v1347 = vunpack.c.h.b16 %v782
    %v1348 = vunpack.c.l.b16 %v783
    %v1349 = vunpack.c.h.b16 %v783
    %v1350 = vunpack.c.l.b16 %v784
    %v1351 = vunpack.c.h.b16 %v784
    %v1352 = vunpack.c.l.b16 %v785
    %v1353 = vunpack.c.h.b16 %v785
    %v1354 = vunpack.c.l.b16 %v786
    %v1355 = vunpack.c.h.b16 %v786
    %v1356 = vunpack.c.l.b16 %v787
    %v1357 = vunpack.c.h.b16 %v787
    %v1358 = vunpack.c.l.b16 %v788
    %v1359 = vunpack.c.h.b16 %v788
    %v1360 = vunpack.c.l.b16 %v789
    %v1361 = vunpack.c.h.b16 %v789
    %v1362 = vunpack.c.l.b16 %v790
    %v1363 = vunpack.c.h.b16 %v790
    %v1364 = vunpack.c.l.b16 %v791
    %v1365 = vunpack.c.h.b16 %v791
    %v1366 = vunpack.c.l.b16 %v792
    %v1367 = vunpack.c.h.b16 %v792
    %v1368 = vunpack.c.l.b16 %v793
    %v1369 = vunpack.c.h.b16 %v793
    %v1370 = vunpack.c.l.b16 %v794
    %v1371 = vunpack.c.h.b16 %v794
    %v1372 = vunpack.c.l.b16 %v795
    %v1373 = vunpack.c.h.b16 %v795
    %v1374 = vunpack.c.l.b16 %v796
    %v1375 = vunpack.c.h.b16 %v796
    %v1376 = vunpack.c.l.b16 %v797
    %v1377 = vunpack.c.h.b16 %v797
    %v1378 = vunpack.c.l.b16 %v798
    %v1379 = vunpack.c.h.b16 %v798
    %v1380 = vunpack.c.l.b16 %v799
    %v1381 = vunpack.c.h.b16 %v799
    %v1382 = vunpack.c.l.b16 %v800
    %v1383 = vunpack.c.h.b16 %v800
    %v1384 = vunpack.c.l.b16 %v801
    %v1385 = vunpack.c.h.b16 %v801
    %v1386 = vunpack.c.l.b16 %v802
    %v1387 = vunpack.c.h.b16 %v802
    %v1388 = vunpack.c.l.b16 %v803
    %v1389 = vunpack.c.h.b16 %v803
    %v1390 = vunpack.c.l.b16 %v804
    %v1391 = vunpack.c.h.b16 %v804
    %v1392 = vunpack.c.l.b16 %v805
    %v1393 = vunpack.c.h.b16 %v805
    %v1394 = vunpack.c.l.b16 %v806
    %v1395 = vunpack.c.h.b16 %v806
    %v1396 = vunpack.c.l.b16 %v807
    %v1397 = vunpack.c.h.b16 %v807
    %v1398 = vunpack.c.l.b16 %v808
    %v1399 = vunpack.c.h.b16 %v808
    %v1400 = vunpack.c.l.b16 %v809
    %v1401 = vunpack.c.h.b16 %v809
    %v1402 = vunpack.c.l.b16 %v810
    %v1403 = vunpack.c.h.b16 %v810
    %v1404 = vunpack.c.l.b16 %v811
    %v1405 = vunpack.c.h.b16 %v811
    %v1406 = vunpack.c.l.b16 %v812
    %v1407 = vunpack.c.h.b16 %v812
    %v1408 = vunpack.c.l.b16 %v813
    %v1409 = vunpack.c.h.b16 %v813
    %v1410 = vunpack.c.l.b16 %v814
    %v1411 = vunpack.c.h.b16 %v814
    %v1412 = vunpack.c.l.b16 %v815
    %v1413 = vunpack.c.h.b16 %v815
    %v1414 = vunpack.c.l.b16 %v816
    %v1415 = vunpack.c.h.b16 %v816
    %v1416 = vunpack.c.l.b16 %v817
    %v1417 = vunpack.c.h.b16 %v817
    %v1418 = vunpack.c.l.b16 %v818
    %v1419 = vunpack.c.h.b16 %v818
    %v1420 = vunpack.c.l.b16 %v819
    %v1421 = vunpack.c.h.b16 %v819
    %v1422 = vunpack.c.l.b16 %v820
    %v1423 = vunpack.c.h.b16 %v820
    %v1424 = vunpack.c.l.b16 %v821
    %v1425 = vunpack.c.h.b16 %v821
    %v1426 = vunpack.c.l.b16 %v822
    %v1427 = vunpack.c.h.b16 %v822
    %v1428 = vunpack.c.l.b16 %v823
    %v1429 = vunpack.c.h.b16 %v823
    %v1430 = vunpack.c.l.b16 %v824
    %v1431 = vunpack.c.h.b16 %v824
    %v1432 = vunpack.c.l.b16 %v825
    %v1433 = vunpack.c.h.b16 %v825
    %v1434 = vunpack.c.l.b16 %v826
    %v1435 = vunpack.c.h.b16 %v826
    %v1436 = vunpack.c.l.b16 %v827
    %v1437 = vunpack.c.h.b16 %v827
    %v1438 = vunpack.c.l.b16 %v828
    %v1439 = vunpack.c.h.b16 %v828
    %v1440 = vunpack.c.l.b16 %v829
    %v1441 = vunpack.c.h.b16 %v829
    %v1442 = vunpack.c.l.b16 %v830
    %v1443 = vunpack.c.h.b16 %v830
    %v1444 = vunpack.c.l.b16 %v831
    %v1445 = vunpack.c.h.b16 %v831
    %v1446 = vunpack.c.l.b16 %v832
    %v1447 = vunpack.c.h.b16 %v832
    %v1448 = vunpack.c.l.b16 %v833
    %v1449 = vunpack.c.h.b16 %v833
    %v1450 = vunpack.c.l.b16 %v834
    %v1451 = vunpack.c.h.b16 %v834
    %v1452 = vunpack.c.l.b16 %v835
    %v1453 = vunpack.c.h.b16 %v835
    %v1454 = vunpack.c.l.b16 %v836
    %v1455 = vunpack.c.h.b16 %v836
    %v1456 = vunpack.c.l.b16 %v837
    %v1457 = vunpack.c.h.b16 %v837
    %v1458 = vunpack.c.l.b16 %v838
    %v1459 = vunpack.c.h.b16 %v838
    %v1460 = vunpack.c.l.b16 %v839
    %v1461 = vunpack.c.h.b16 %v839
    %v1462 = vunpack.c.l.b16 %v840
    %v1463 = vunpack.c.h.b16 %v840
    %v1464 = vunpack.c.l.b16 %v841
    %v1465 = vunpack.c.h.b16 %v841
    %v1466 = vunpack.c.l.b16 %v842
    %v1467 = vunpack.c.h.b16 %v842
    %v1468 = vunpack.c.l.b16 %v843
    %v1469 = vunpack.c.h.b16 %v843
    %v1470 = vunpack.c.l.b16 %v844
    %v1471 = vunpack.c.h.b16 %v844
    %v1472 = vunpack.c.l.b16 %v845
    %v1473 = vunpack.c.h.b16 %v845
    %v1474 = vunpack.c.l.b16 %v846
    %v1475 = vunpack.c.h.b16 %v846
    %v1476 = vunpack.c.l.b16 %v847
    %v1477 = vunpack.c.h.b16 %v847
    %v1478 = vunpack.c.l.b16 %v848
    %v1479 = vunpack.c.h.b16 %v848
    %v1480 = vunpack.c.l.b16 %v849
    %v1481 = vunpack.c.h.b16 %v849
    %v1482 = vunpack.c.l.b16 %v850
    %v1483 = vunpack.c.h.b16 %v850
    %v1484 = vunpack.c.l.b16 %v851
    %v1485 = vunpack.c.h.b16 %v851
    %v1486 = vunpack.c.l.b16 %v852
    %v1487 = vunpack.c.h.b16 %v852
    %v1488 = vunpack.c.l.b16 %v853
    %v1489 = vunpack.c.h.b16 %v853
    %v1490 = vunpack.c.l.b16 %v854
    %v1491 = vunpack.c.h.b16 %v854
    %v1492 = vunpack.c.l.b16 %v855
    %v1493 = vunpack.c.h.b16 %v855
    %v1494 = vunpack.c.l.b16 %v856
    %v1495 = vunpack.c.h.b16 %v856
    %v1496 = vunpack.c.l.b16 %v857
    %v1497 = vunpack.c.h.b16 %v857
    %v1498 = vunpack.c.l.b16 %v858
    %v1499 = vunpack.c.h.b16 %v858
    %v1500 = vunpack.c.l.b16 %v859
    %v1501 = vunpack.c.h.b16 %v859
    %v1502 = vunpack.c.l.b16 %v860
    %v1503 = vunpack.c.h.b16 %v860
    %v1504 = vunpack.c.l.b16 %v861
    %v1505 = vunpack.c.h.b16 %v861
    %v1506 = vunpack.c.l.b16 %v862
    %v1507 = vunpack.c.h.b16 %v862
    %v1508 = vunpack.c.l.b16 %v863
    %v1509 = vunpack.c.h.b16 %v863
    %v1510 = vunpack.c.l.b16 %v864
    %v1511 = vunpack.c.h.b16 %v864
    %v1512 = vunpack.c.l.b16 %v865
    %v1513 = vunpack.c.h.b16 %v865
    %v1514 = vunpack.c.l.b16 %v866
    %v1515 = vunpack.c.h.b16 %v866
    %v1516 = vunpack.c.l.b16 %v867
    %v1517 = vunpack.c.h.b16 %v867
    %v1518 = vunpack.c.l.b16 %v868
    %v1519 = vunpack.c.h.b16 %v868
    %v1520 = vunpack.c.l.b16 %v869
    %v1521 = vunpack.c.h.b16 %v869
    %v1522 = vunpack.c.l.b16 %v870
    %v1523 = vunpack.c.h.b16 %v870
    %v1524 = vunpack.c.l.b16 %v871
    %v1525 = vunpack.c.h.b16 %v871
    %v1526 = vunpack.c.l.b16 %v872
    %v1527 = vunpack.c.h.b16 %v872
    %v1528 = vunpack.c.l.b16 %v873
    %v1529 = vunpack.c.h.b16 %v873
    %v1530 = vunpack.c.l.b16 %v874
    %v1531 = vunpack.c.h.b16 %v874
    %v1532 = vunpack.c.l.b16 %v875
    %v1533 = vunpack.c.h.b16 %v875
    %v1534 = vunpack.c.l.b16 %v876
    %v1535 = vunpack.c.h.b16 %v876
    %v1536 = vunpack.c.l.b16 %v877
    %v1537 = vunpack.c.h.b16 %v877
    %v1538 = vunpack.c.l.b16 %v878
    %v1539 = vunpack.c.h.b16 %v878
    %v1540 = vunpack.c.l.b16 %v879
    %v1541 = vunpack.c.h.b16 %v879
    %v1542 = vunpack.c.l.b16 %v880
    %v1543 = vunpack.c.h.b16 %v880
    %v1544 = vunpack.c.l.b16 %v881
    %v1545 = vunpack.c.h.b16 %v881
    %v1546 = vunpack.c.l.b16 %v882
    %v1547 = vunpack.c.h.b16 %v882
    %v1548 = vunpack.c.l.b16 %v883
    %v1549 = vunpack.c.h.b16 %v883
    %v1550 = vunpack.c.l.b16 %v884
    %v1551 = vunpack.c.h.b16 %v884
    %v1552 = vunpack.c.l.b16 %v885
    %v1553 = vunpack.c.h.b16 %v885
    %v1554 = vunpack.c.l.b16 %v886
    %v1555 = vunpack.c.h.b16 %v886
    %v1556 = vunpack.c.l.b16 %v887
    %v1557 = vunpack.c.h.b16 %v887
    %v1558 = vunpack.c.l.b16 %v888
    %v1559 = vunpack.c.h.b16 %v888
    %v1560 = vunpack.c.l.b16 %v889
    %v1561 = vunpack.c.h.b16 %v889
    %v1562 = vunpack.c.l.b16 %v890
    %v1563 = vunpack.c.h.b16 %v890
    %v1564 = vunpack.c.l.b16 %v891
    %v1565 = vunpack.c.h.b16 %v891
    %v1566 = vunpack.c.l.b16 %v892
    %v1567 = vunpack.c.h.b16 %v892
    %v1568 = vunpack.c.l.b16 %v893
    %v1569 = vunpack.c.h.b16 %v893
    %v1570 = vunpack.c.l.b16 %v894
    %v1571 = vunpack.c.h.b16 %v894
    %v1572 = vunpack.c.l.b16 %v895
    %v1573 = vunpack.c.h.b16 %v895
    %v1574 = vunpack.c.l.b16 %v896
    %v1575 = vunpack.c.h.b16 %v896
    %v1576 = vunpack.c.l.b16 %v897
    %v1577 = vunpack.c.h.b16 %v897
    %v1578 = vunpack.c.l.b16 %v898
    %v1579 = vunpack.c.h.b16 %v898
    %v1580 = vunpack.c.l.b16 %v899
    %v1581 = vunpack.c.h.b16 %v899
    %v1582 = vunpack.c.l.b16 %v900
    %v1583 = vunpack.c.h.b16 %v900
    %v1584 = vunpack.c.l.b16 %v901
    %v1585 = vunpack.c.h.b16 %v901
    %v1586 = vunpack.c.l.b16 %v902
    %v1587 = vunpack.c.h.b16 %v902
    %v1588 = vunpack.c.l.b16 %v903
    %v1589 = vunpack.c.h.b16 %v903
    %v1590 = vunpack.c.l.b16 %v904
    %v1591 = vunpack.c.h.b16 %v904
    %v1592 = vunpack.c.l.b16 %v905
    %v1593 = vunpack.c.h.b16 %v905
    %v1594 = vunpack.c.l.b16 %v906
    %v1595 = vunpack.c.h.b16 %v906
    %v1596 = vunpack.c.l.b16 %v907
    %v1597 = vunpack.c.h.b16 %v907
    %v1598 = vunpack.c.l.b16 %v908
    %v1599 = vunpack.c.h.b16 %v908
    %v1600 = vunpack.c.l.b16 %v909
    %v1601 = vunpack.c.h.b16 %v909
    %v1602 = vunpack.c.l.b16 %v910
    %v1603 = vunpack.c.h.b16 %v910
    %v1604 = vunpack.c.l.b16 %v911
    %v1605 = vunpack.c.h.b16 %v911
    %v1606 = vunpack.c.l.b16 %v912
    %v1607 = vunpack.c.h.b16 %v912
    %v1608 = vunpack.c.l.b16 %v913
    %v1609 = vunpack.c.h.b16 %v913
    %v1610 = vunpack.c.l.b16 %v914
    %v1611 = vunpack.c.h.b16 %v914
    %v1612 = vunpack.c.l.b16 %v915
    %v1613 = vunpack.c.h.b16 %v915
    %v1614 = vunpack.c.l.b16 %v916
    %v1615 = vunpack.c.h.b16 %v916
    %v1616 = vunpack.c.l.b16 %v917
    %v1617 = vunpack.c.h.b16 %v917
    %v1618 = vunpack.c.l.b16 %v918
    %v1619 = vunpack.c.h.b16 %v918
    %v1620 = vunpack.c.l.b16 %v919
    %v1621 = vunpack.c.h.b16 %v919
    %v1622 = vunpack.c.l.b16 %v920
    %v1623 = vunpack.c.h.b16 %v920
    %v1624 = vunpack.c.l.b16 %v921
    %v1625 = vunpack.c.h.b16 %v921
    %v1626 = vunpack.c.l.b16 %v922
    %v1627 = vunpack.c.h.b16 %v922
    %v1628 = vunpack.c.l.b16 %v923
    %v1629 = vunpack.c.h.b16 %v923
    %v1630 = vunpack.c.l.b16 %v924
    %v1631 = vunpack.c.h.b16 %v924
    %v1632 = vunpack.c.l.b16 %v925
    %v1633 = vunpack.c.h.b16 %v925
    %v1634 = vunpack.c.l.b16 %v926
    %v1635 = vunpack.c.h.b16 %v926
    %v1636 = vunpack.c.l.b16 %v927
    %v1637 = vunpack.c.h.b16 %v927
    %v1638 = vunpack.c.l.b16 %v928
    %v1639 = vunpack.c.h.b16 %v928
    %v1640 = vunpack.c.l.b16 %v929
    %v1641 = vunpack.c.h.b16 %v929
    %v1642 = vunpack.c.l.b16 %v930
    %v1643 = vunpack.c.h.b16 %v930
    %v1644 = vunpack.c.l.b16 %v931
    %v1645 = vunpack.c.h.b16 %v931
    %v1646 = vunpack.c.l.b16 %v932
    %v1647 = vunpack.c.h.b16 %v932
    %v1648 = vunpack.c.l.b16 %v933
    %v1649 = vunpack.c.h.b16 %v933
    %v1650 = vunpack.c.l.b16 %v934
    %v1651 = vunpack.c.h.b16 %v934
    %v1652 = vunpack.c.l.b16 %v935
    %v1653 = vunpack.c.h.b16 %v935
    %v1654 = vunpack.c.l.b16 %v936
    %v1655 = vunpack.c.h.b16 %v936
    %v1656 = vunpack.c.l.b16 %v937
    %v1657 = vunpack.c.h.b16 %v937
    %v1658 = vunpack.c.l.b16 %v938
    %v1659 = vunpack.c.h.b16 %v938
    %v1660 = vunpack.c.l.b16 %v939
    %v1661 = vunpack.c.h.b16 %v939
    %v1662 = vunpack.c.l.b16 %v940
    %v1663 = vunpack.c.h.b16 %v940
    %v1664 = vunpack.c.l.b16 %v941
    %v1665 = vunpack.c.h.b16 %v941
    %v1666 = vunpack.c.l.b16 %v942
    %v1667 = vunpack.c.h.b16 %v942
    %v1668 = vunpack.c.l.b16 %v943
    %v1669 = vunpack.c.h.b16 %v943
    %v1670 = vunpack.c.l.b16 %v944
    %v1671 = vunpack.c.h.b16 %v944
    %v1672 = vunpack.c.l.b16 %v945
    %v1673 = vunpack.c.h.b16 %v945
    %v1674 = vunpack.c.l.b16 %v946
    %v1675 = vunpack.c.h.b16 %v946
    %v1676 = vunpack.c.l.b16 %v947
    %v1677 = vunpack.c.h.b16 %v947
    %v1678 = vunpack.c.l.b16 %v948
    %v1679 = vunpack.c.h.b16 %v948
    %v1680 = vunpack.c.l.b16 %v949
    %v1681 = vunpack.c.h.b16 %v949
    %v1682 = vunpack.c.l.b16 %v950
    %v1683 = vunpack.c.h.b16 %v950
    %v1684 = vunpack.c.l.b16 %v951
    %v1685 = vunpack.c.h.b16 %v951
    %v1686 = vunpack.c.l.b16 %v952
    %v1687 = vunpack.c.h.b16 %v952
    %v1688 = vunpack.c.l.b16 %v953
    %v1689 = vunpack.c.h.b16 %v953
    %v1690 = vunpack.c.l.b16 %v954
    %v1691 = vunpack.c.h.b16 %v954
    %v1692 = vunpack.c.l.b16 %v955
    %v1693 = vunpack.c.h.b16 %v955
    %v1694 = vunpack.c.l.b16 %v956
    %v1695 = vunpack.c.h.b16 %v956
    %v1696 = vunpack.c.l.b16 %v957
    %v1697 = vunpack.c.h.b16 %v957
    %v1698 = vunpack.c.l.b16 %v958
    %v1699 = vunpack.c.h.b16 %v958
    %v1700 = vunpack.c.l.b16 %v959
    %v1701 = vunpack.c.h.b16 %v959
    %v1702 = vunpack.c.l.b16 %v960
    %v1703 = vunpack.c.h.b16 %v960
    %v1704 = vunpack.c.l.b16 %v961
    %v1705 = vunpack.c.h.b16 %v961
    %v1706 = vunpack.c.l.b16 %v962
    %v1707 = vunpack.c.h.b16 %v962
    %v1708 = vunpack.c.l.b16 %v963
    %v1709 = vunpack.c.h.b16 %v963
    %v1710 = vunpack.c.l.b16 %v964
    %v1711 = vunpack.c.h.b16 %v964
    %v1712 = vunpack.c.l.b16 %v965
    %v1713 = vunpack.c.h.b16 %v965
    %v1714 = vunpack.c.l.b16 %v966
    %v1715 = vunpack.c.h.b16 %v966
    %v1716 = vunpack.c.l.b16 %v967
    %v1717 = vunpack.c.h.b16 %v967
    %v1718 = vunpack.c.l.b16 %v968
    %v1719 = vunpack.c.h.b16 %v968
    %v1720 = vunpack.c.l.b16 %v969
    %v1721 = vunpack.c.h.b16 %v969
    %v1722 = vunpack.c.l.b16 %v970
    %v1723 = vunpack.c.h.b16 %v970
    %v1724 = vunpack.c.l.b16 %v971
    %v1725 = vunpack.c.h.b16 %v971
    %v1726 = vunpack.c.l.b16 %v972
    %v1727 = vunpack.c.h.b16 %v972
    %v1728 = vunpack.c.l.b16 %v973
    %v1729 = vunpack.c.h.b16 %v973
    %v1730 = vunpack.c.l.b16 %v974
    %v1731 = vunpack.c.h.b16 %v974
    %v1732 = vunpack.c.l.b16 %v975
    %v1733 = vunpack.c.h.b16 %v975
    %v1734 = vunpack.c.l.b16 %v976
    %v1735 = vunpack.c.h.b16 %v976
    %v1736 = vunpack.c.l.b16 %v977
    %v1737 = vunpack.c.h.b16 %v977
    %v1738 = vunpack.c.l.b16 %v978
    %v1739 = vunpack.c.h.b16 %v978
    %v1740 = vunpack.c.l.b16 %v979
    %v1741 = vunpack.c.h.b16 %v979
    %v1742 = vunpack.c.l.b16 %v980
    %v1743 = vunpack.c.h.b16 %v980
    %v1744 = vunpack.c.l.b16 %v981
    %v1745 = vunpack.c.h.b16 %v981
    %v1746 = vunpack.c.l.b16 %v982
    %v1747 = vunpack.c.h.b16 %v982
    %v1748 = vunpack.c.l.b16 %v983
    %v1749 = vunpack.c.h.b16 %v983
    %v1750 = vunpack.c.l.b16 %v984
    %v1751 = vunpack.c.h.b16 %v984
    %v1752 = vunpack.c.l.b16 %v985
    %v1753 = vunpack.c.h.b16 %v985
    %v1754 = vunpack.c.l.b16 %v986
    %v1755 = vunpack.c.h.b16 %v986
    %v1756 = vunpack.c.l.b16 %v987
    %v1757 = vunpack.c.h.b16 %v987
    %v1758 = vunpack.c.l.b16 %v988
    %v1759 = vunpack.c.h.b16 %v988
    %v1760 = vunpack.c.l.b16 %v989
    %v1761 = vunpack.c.h.b16 %v989
    %v1762 = vunpack.c.l.b16 %v990
    %v1763 = vunpack.c.h.b16 %v990
    %v1764 = vunpack.c.l.b16 %v991
    %v1765 = vunpack.c.h.b16 %v991
    %v1766 = vunpack.c.l.b16 %v992
    %v1767 = vunpack.c.h.b16 %v992
    %v1768 = vunpack.c.l.b16 %v993
    %v1769 = vunpack.c.h.b16 %v993
    %v1770 = vunpack.c.l.b16 %v994
    %v1771 = vunpack.c.h.b16 %v994
    %v1772 = vunpack.c.l.b16 %v995
    %v1773 = vunpack.c.h.b16 %v995
    %v1774 = vunpack.c.l.b16 %v996
    %v1775 = vunpack.c.h.b16 %v996
    %v1776 = vunpack.c.l.b16 %v997
    %v1777 = vunpack.c.h.b16 %v997
    %v1778 = vunpack.c.l.b16 %v998
    %v1779 = vunpack.c.h.b16 %v998
    %v1780 = vunpack.c.l.b16 %v999
    %v1781 = vunpack.c.h.b16 %v999
    %v1782 = vunpack.c.l.b16 %v1000
    %v1783 = vunpack.c.h.b16 %v1000
    %v1784 = vunpack.c.l.b16 %v1001
    %v1785 = vunpack.c.h.b16 %v1001
    %v1786 = vunpack.c.l.b16 %v1002
    %v1787 = vunpack.c.h.b16 %v1002
    %v1788 = vunpack.c.l.b16 %v1003
    %v1789 = vunpack.c.h.b16 %v1003
    %v1790 = vpack.c.b16 %v1286, %v1278
    %v1791 = vpack.c.b16 %v1287, %v1279
    %v1792 = vpack.c.b16 %v1288, %v1280
    %v1793 = vpack.c.b16 %v1289, %v1281
    %v1794 = vpack.c.b16 %v1290, %v1282
    %v1795 = vpack.c.b16 %v1291, %v1283
    %v1796 = vpack.c.b16 %v1292, %v1284
    %v1797 = vpack.c.b16 %v1293, %v1285
    %v1798 = vpack.c.b16 %v1302, %v1294
    %v1799 = vpack.c.b16 %v1303, %v1295
    %v1800 = vpack.c.b16 %v1304, %v1296
    %v1801 = vpack.c.b16 %v1305, %v1297
    %v1802 = vpack.c.b16 %v1306, %v1298
    %v1803 = vpack.c.b16 %v1307, %v1299
    %v1804 = vpack.c.b16 %v1308, %v1300
    %v1805 = vpack.c.b16 %v1309, %v1301
    %v1806 = vpack.c.b16 %v1318, %v1310
    %v1807 = vpack.c.b16 %v1319, %v1311
    %v1808 = vpack.c.b16 %v1320, %v1312
    %v1809 = vpack.c.b16 %v1321, %v1313
    %v1810 = vpack.c.b16 %v1322, %v1314
    %v1811 = vpack.c.b16 %v1323, %v1315
    %v1812 = vpack.c.b16 %v1324, %v1316
    %v1813 = vpack.c.b16 %v1325, %v1317
    %v1814 = vpack.c.b16 %v1334, %v1326
    %v1815 = vpack.c.b16 %v1335, %v1327
    %v1816 = vpack.c.b16 %v1336, %v1328
    %v1817 = vpack.c.b16 %v1337, %v1329
    %v1818 = vpack.c.b16 %v1338, %v1330
    %v1819 = vpack.c.b16 %v1339, %v1331
    %v1820 = vpack.c.b16 %v1340, %v1332
    %v1821 = vpack.c.b16 %v1341, %v1333
    %v1822 = vpack.c.b16 %v1350, %v1342
    %v1823 = vpack.c.b16 %v1351, %v1343
    %v1824 = vpack.c.b16 %v1352, %v1344
    %v1825 = vpack.c.b16 %v1353, %v1345
    %v1826 = vpack.c.b16 %v1354, %v1346
    %v1827 = vpack.c.b16 %v1355, %v1347
    %v1828 = vpack.c.b16 %v1356, %v1348
    %v1829 = vpack.c.b16 %v1357, %v1349
    %v1830 = vpack.c.b16 %v1366, %v1358
    %v1831 = vpack.c.b16 %v1367, %v1359
    %v1832 = vpack.c.b16 %v1368, %v1360
    %v1833 = vpack.c.b16 %v1369, %v1361
    %v1834 = vpack.c.b16 %v1370, %v1362
    %v1835 = vpack.c.b16 %v1371, %v1363
    %v1836 = vpack.c.b16 %v1372, %v1364
    %v1837 = vpack.c.b16 %v1373, %v1365
    %v1838 = vpack.c.b16 %v1382, %v1374
    %v1839 = vpack.c.b16 %v1383, %v1375
    %v1840 = vpack.c.b16 %v1384, %v1376
    %v1841 = vpack.c.b16 %v1385, %v1377
    %v1842 = vpack.c.b16 %v1386, %v1378
    %v1843 = vpack.c.b16 %v1387, %v1379
    %v1844 = vpack.c.b16 %v1388, %v1380
    %v1845 = vpack.c.b16 %v1389, %v1381
    %v1846 = vpack.c.b16 %v1398, %v1390
    %v1847 = vpack.c.b16 %v1399, %v1391
    %v1848 = vpack.c.b16 %v1400, %v1392
    %v1849 = vpack.c.b16 %v1401, %v1393
    %v1850 = vpack.c.b16 %v1402, %v1394
    %v1851 = vpack.c.b16 %v1403, %v1395
    %v1852 = vpack.c.b16 %v1404, %v1396
    %v1853 = vpack.c.b16 %v1405, %v1397
    %v1854 = vpack.c.b16 %v1414, %v1406
    %v1855 = vpack.c.b16 %v1415, %v1407
    %v1856 = vpack.c.b16 %v1416, %v1408
    %v1857 = vpack.c.b16 %v1417, %v1409
    %v1858 = vpack.c.b16 %v1418, %v1410
    %v1859 = vpack.c.b16 %v1419, %v1411
    %v1860 = vpack.c.b16 %v1420, %v1412
    %v1861 = vpack.c.b16 %v1421, %v1413
    %v1862 = vpack.c.b16 %v1430, %v1422
    %v1863 = vpack.c.b16 %v1431, %v1423
    %v1864 = vpack.c.b16 %v1432, %v1424
    %v1865 = vpack.c.b16 %v1433, %v1425
    %v1866 = vpack.c.b16 %v1434, %v1426
    %v1867 = vpack.c.b16 %v1435, %v1427
    %v1868 = vpack.c.b16 %v1436, %v1428
    %v1869 = vpack.c.b16 %v1437, %v1429
    %v1870 = vpack.c.b16 %v1446, %v1438
    %v1871 = vpack.c.b16 %v1447, %v1439
    %v1872 = vpack.c.b16 %v1448, %v1440
    %v1873 = vpack.c.b16 %v1449, %v1441
    %v1874 = vpack.c.b16 %v1450, %v1442
    %v1875 = vpack.c.b16 %v1451, %v1443
    %v1876 = vpack.c.b16 %v1452, %v1444
    %v1877 = vpack.c.b16 %v1453, %v1445
    %v1878 = vpack.c.b16 %v1462, %v1454
    %v1879 = vpack.c.b16 %v1463, %v1455
    %v1880 = vpack.c.b16 %v1464, %v1456
    %v1881 = vpack.c.b16 %v1465, %v1457
    %v1882 = vpack.c.b16 %v1466, %v1458
    %v1883 = vpack.c.b16 %v1467, %v1459
    %v1884 = vpack.c.b16 %v1468, %v1460
    %v1885 = vpack.c.b16 %v1469, %v1461
    %v1886 = vpack.c.b16 %v1478, %v1470
    %v1887 = vpack.c.b16 %v1479, %v1471
    %v1888 = vpack.c.b16 %v1480, %v1472
    %v1889 = vpack.c.b16 %v1481, %v1473
    %v1890 = vpack.c.b16 %v1482, %v1474
    %v1891 = vpack.c.b16 %v1483, %v1475
    %v1892 = vpack.c.b16 %v1484, %v1476
    %v1893 = vpack.c.b16 %v1485, %v1477
    %v1894 = vpack.c.b16 %v1494, %v1486
    %v1895 = vpack.c.b16 %v1495, %v1487
    %v1896 = vpack.c.b16 %v1496, %v1488
    %v1897 = vpack.c.b16 %v1497, %v1489
    %v1898 = vpack.c.b16 %v1498, %v1490
    %v1899 = vpack.c.b16 %v1499, %v1491
    %v1900 = vpack.c.b16 %v1500, %v1492
    %v1901 = vpack.c.b16 %v1501, %v1493
    %v1902 = vpack.c.b16 %v1510, %v1502
    %v1903 = vpack.c.b16 %v1511, %v1503
    %v1904 = vpack.c.b16 %v1512, %v1504
    %v1905 = vpack.c.b16 %v1513, %v1505
    %v1906 = vpack.c.b16 %v1514, %v1506
    %v1907 = vpack.c.b16 %v1515, %v1507
    %v1908 = vpack.c.b16 %v1516, %v1508
    %v1909 = vpack.c.b16 %v1517, %v1509
    %v1910 = vpack.c.b16 %v1526, %v1518
    %v1911 = vpack.c.b16 %v1527, %v1519
    %v1912 = vpack.c.b16 %v1528, %v1520
    %v1913 = vpack.c.b16 %v1529, %v1521
    %v1914 = vpack.c.b16 %v1530, %v1522
    %v1915 = vpack.c.b16 %v1531, %v1523
    %v1916 = vpack.c.b16 %v1532, %v1524
    %v1917 = vpack.c.b16 %v1533, %v1525
    %v1918 = vpack.c.b16 %v1542, %v1534
    %v1919 = vpack.c.b16 %v1543, %v1535
    %v1920 = vpack.c.b16 %v1544, %v1536
    %v1921 = vpack.c.b16 %v1545, %v1537
    %v1922 = vpack.c.b16 %v1546, %v1538
    %v1923 = vpack.c.b16 %v1547, %v1539
    %v1924 = vpack.c.b16 %v1548, %v1540
    %v1925 = vpack.c.b16 %v1549, %v1541
    %v1926 = vpack.c.b16 %v1558, %v1550
    %v1927 = vpack.c.b16 %v1559, %v1551
    %v1928 = vpack.c.b16 %v1560, %v1552
    %v1929 = vpack.c.b16 %v1561, %v1553
    %v1930 = vpack.c.b16 %v1562, %v1554
    %v1931 = vpack.c.b16 %v1563, %v1555
    %v1932 = vpack.c.b16 %v1564, %v1556
    %v1933 = vpack.c.b16 %v1565, %v1557
    %v1934 = vpack.c.b16 %v1574, %v1566
    %v1935 = vpack.c.b16 %v1575, %v1567
    %v1936 = vpack.c.b16 %v1576, %v1568
    %v1937 = vpack.c.b16 %v1577, %v1569
    %v1938 = vpack.c.b16 %v1578, %v1570
    %v1939 = vpack.c.b16 %v1579, %v1571
    %v1940 = vpack.c.b16 %v1580, %v1572
    %v1941 = vpack.c.b16 %v1581, %v1573
    %v1942 = vpack.c.b16 %v1590, %v1582
    %v1943 = vpack.c.b16 %v1591, %v1583
    %v1944 = vpack.c.b16 %v1592, %v1584
    %v1945 = vpack.c.b16 %v1593, %v1585
    %v1946 = vpack.c.b16 %v1594, %v1586
    %v1947 = vpack.c.b16 %v1595, %v1587
    %v1948 = vpack.c.b16 %v1596, %v1588
    %v1949 = vpack.c.b16 %v1597, %v1589
    %v1950 = vpack.c.b16 %v1606, %v1598
    %v1951 = vpack.c.b16 %v1607, %v1599
    %v1952 = vpack.c.b16 %v1608, %v1600
    %v1953 = vpack.c.b16 %v1609, %v1601
    %v1954 = vpack.c.b16 %v1610, %v1602
    %v1955 = vpack.c.b16 %v1611, %v1603
    %v1956 = vpack.c.b16 %v1612, %v1604
    %v1957 = vpack.c.b16 %v1613, %v1605
    %v1958 = vpack.c.b16 %v1622, %v1614
    %v1959 = vpack.c.b16 %v1623, %v1615
    %v1960 = vpack.c.b16 %v1624, %v1616
    %v1961 = vpack.c.b16 %v1625, %v1617
    %v1962 = vpack.c.b16 %v1626, %v1618
    %v1963 = vpack.c.b16 %v1627, %v1619
    %v1964 = vpack.c.b16 %v1628, %v1620
    %v1965 = vpack.c.b16 %v1629, %v1621
    %v1966 = vpack.c.b16 %v1638, %v1630
    %v1967 = vpack.c.b16 %v1639, %v1631
    %v1968 = vpack.c.b16 %v1640, %v1632
    %v1969 = vpack.c.b16 %v1641, %v1633
    %v1970 = vpack.c.b16 %v1642, %v1634
    %v1971 = vpack.c.b16 %v1643, %v1635
    %v1972 = vpack.c.b16 %v1644, %v1636
    %v1973 = vpack.c.b16 %v1645, %v1637
    %v1974 = vpack.c.b16 %v1654, %v1646
    %v1975 = vpack.c.b16 %v1655, %v1647
    %v1976 = vpack.c.b16 %v1656, %v1648
    %v1977 = vpack.c.b16 %v1657, %v1649
    %v1978 = vpack.c.b16 %v1658, %v1650
    %v1979 = vpack.c.b16 %v1659, %v1651
    %v1980 = vpack.c.b16 %v1660, %v1652
    %v1981 = vpack.c.b16 %v1661, %v1653
    %v1982 = vpack.c.b16 %v1670, %v1662
    %v1983 = vpack.c.b16 %v1671, %v1663
    %v1984 = vpack.c.b16 %v1672, %v1664
    %v1985 = vpack.c.b16 %v1673, %v1665
    %v1986 = vpack.c.b16 %v1674, %v1666
    %v1987 = vpack.c.b16 %v1675, %v1667
    %v1988 = vpack.c.b16 %v1676, %v1668
    %v1989 = vpack.c.b16 %v1677, %v1669
    %v1990 = vpack.c.b16 %v1686, %v1678
    %v1991 = vpack.c.b16 %v1687, %v1679
    %v1992 = vpack.c.b16 %v1688, %v1680
    %v1993 = vpack.c.b16 %v1689, %v1681
    %v1994 = vpack.c.b16 %v1690, %v1682
    %v1995 = vpack.c.b16 %v1691, %v1683
    %v1996 = vpack.c.b16 %v1692, %v1684
    %v1997 = vpack.c.b16 %v1693, %v1685
    %v1998 = vpack.c.b16 %v1702, %v1694
    %v1999 = vpack.c.b16 %v1703, %v1695
    %v2000 = vpack.c.b16 %v1704, %v1696
    %v2001 = vpack.c.b16 %v1705, %v1697
    %v2002 = vpack.c.b16 %v1706, %v1698
    %v2003 = vpack.c.b16 %v1707, %v1699
    %v2004 = vpack.c.b16 %v1708, %v1700
    %v2005 = vpack.c.b16 %v1709, %v1701
    %v2006 = vpack.c.b16 %v1718, %v1710
    %v2007 = vpack.c.b16 %v1719, %v1711
    %v2008 = vpack.c.b16 %v1720, %v1712
    %v2009 = vpack.c.b16 %v1721, %v1713
    %v2010 = vpack.c.b16 %v1722, %v1714
    %v2011 = vpack.c.b16 %v1723, %v1715
    %v2012 = vpack.c.b16 %v1724, %v1716
    %v2013 = vpack.c.b16 %v1725, %v1717
    %v2014 = vpack.c.b16 %v1734, %v1726
    %v2015 = vpack.c.b16 %v1735, %v1727
    %v2016 = vpack.c.b16 %v1736, %v1728
    %v2017 = vpack.c.b16 %v1737, %v1729
    %v2018 = vpack.c.b16 %v1738, %v1730
    %v2019 = vpack.c.b16 %v1739, %v1731
    %v2020 = vpack.c.b16 %v1740, %v1732
    %v2021 = vpack.c.b16 %v1741, %v1733
    %v2022 = vpack.c.b16 %v1750, %v1742
    %v2023 = vpack.c.b16 %v1751, %v1743
    %v2024 = vpack.c.b16 %v1752, %v1744
    %v2025 = vpack.c.b16 %v1753, %v1745
    %v2026 = vpack.c.b16 %v1754, %v1746
    %v2027 = vpack.c.b16 %v1755, %v1747
    %v2028 = vpack.c.b16 %v1756, %v1748
    %v2029 = vpack.c.b16 %v1757, %v1749
    %v2030 = vpack.c.b16 %v1766, %v1758
    %v2031 = vpack.c.b16 %v1767, %v1759
    %v2032 = vpack.c.b16 %v1768, %v1760
    %v2033 = vpack.c.b16 %v1769, %v1761
    %v2034 = vpack.c.b16 %v1770, %v1762
    %v2035 = vpack.c.b16 %v1771, %v1763
    %v2036 = vpack.c.b16 %v1772, %v1764
    %v2037 = vpack.c.b16 %v1773, %v1765
    %v2038 = vpack.c.b16 %v1782, %v1774
    %v2039 = vpack.c.b16 %v1783, %v1775
    %v2040 = vpack.c.b16 %v1784, %v1776
    %v2041 = vpack.c.b16 %v1785, %v1777
    %v2042 = vpack.c.b16 %v1786, %v1778
    %v2043 = vpack.c.b16 %v1787, %v1779
    %v2044 = vpack.c.b16 %v1788, %v1780
    %v2045 = vpack.c.b16 %v1789, %v1781
    %2302 = vmatpush.bf16.msra.mxu0 %v1846
    %2303 = vmatpush.bf16.msra.mxu0 %v1838
    %2304 = vmatpush.bf16.msra.mxu0 %v1830
    %2305 = vmatpush.bf16.msra.mxu0 %v1822
    %2306 = vmatpush.bf16.msra.mxu0 %v1814
    %2307 = vmatpush.bf16.msra.mxu0 %v1806
    %2308 = vmatpush.bf16.msra.mxu0 %v1798
    %2309 = vmatpush.bf16.msra.mxu0 %v1790
    %2310 = vmatmul.bf16.gmra.mxu0 %v744
    %v2311 = vpop.f32.mrf.mxu0
    %v2312 = vadd.f32 %v1006, %v2311
    %v2313 = vpop.f32.mrf.mxu0
    %2314 = vdwg.mxu0
    %2315 = vmatpush.bf16.msra.mxu0 %v1910
    %2316 = vmatpush.bf16.msra.mxu0 %v1902
    %2317 = vmatpush.bf16.msra.mxu0 %v1894
    %2318 = vmatpush.bf16.msra.mxu0 %v1886
    %2319 = vmatpush.bf16.msra.mxu0 %v1878
    %2320 = vmatpush.bf16.msra.mxu0 %v1870
    %2321 = vmatpush.bf16.msra.mxu0 %v1862
    %2322 = vmatpush.bf16.msra.mxu0 %v1854
    %2323 = vmatmul.bf16.gmra.mxu0 %v745
    %v2324 = vpop.f32.mrf.mxu0
    %v2325 = vadd.f32 %v2312, %v2324
    %v2326 = vpop.f32.mrf.mxu0
    %2327 = vdwg.mxu0
    %2328 = vmatpush.bf16.msra.mxu0 %v1974
    %2329 = vmatpush.bf16.msra.mxu0 %v1966
    %2330 = vmatpush.bf16.msra.mxu0 %v1958
    %2331 = vmatpush.bf16.msra.mxu0 %v1950
    %2332 = vmatpush.bf16.msra.mxu0 %v1942
    %2333 = vmatpush.bf16.msra.mxu0 %v1934
    %2334 = vmatpush.bf16.msra.mxu0 %v1926
    %2335 = vmatpush.bf16.msra.mxu0 %v1918
    %2336 = vmatmul.bf16.gmra.mxu0 %v746
    %v2337 = vpop.f32.mrf.mxu0
    %v2338 = vadd.f32 %v2325, %v2337
    %v2339 = vpop.f32.mrf.mxu0
    %2340 = vdwg.mxu0
    %2341 = vmatpush.bf16.msra.mxu0 %v2038
    %2342 = vmatpush.bf16.msra.mxu0 %v2030
    %2343 = vmatpush.bf16.msra.mxu0 %v2022
    %2344 = vmatpush.bf16.msra.mxu0 %v2014
    %2345 = vmatpush.bf16.msra.mxu0 %v2006
    %2346 = vmatpush.bf16.msra.mxu0 %v1998
    %2347 = vmatpush.bf16.msra.mxu0 %v1990
    %2348 = vmatpush.bf16.msra.mxu0 %v1982
    %2349 = vmatmul.bf16.gmra.mxu0 %v747
    %v2350 = vpop.f32.mrf.mxu0
    %v2351 = vadd.f32 %v2338, %v2350
    %v2352 = vpop.f32.mrf.mxu0
    %2353 = vdwg.mxu0
    %2354 = vmatpush.bf16.msra.mxu0 %v1847
    %2355 = vmatpush.bf16.msra.mxu0 %v1839
    %2356 = vmatpush.bf16.msra.mxu0 %v1831
    %2357 = vmatpush.bf16.msra.mxu0 %v1823
    %2358 = vmatpush.bf16.msra.mxu0 %v1815
    %2359 = vmatpush.bf16.msra.mxu0 %v1807
    %2360 = vmatpush.bf16.msra.mxu0 %v1799
    %2361 = vmatpush.bf16.msra.mxu0 %v1791
    %2362 = vmatmul.bf16.gmra.mxu0 %v744
    %v2363 = vpop.f32.mrf.mxu0
    %v2364 = vadd.f32 %v1007, %v2363
    %v2365 = vpop.f32.mrf.mxu0
    %2366 = vdwg.mxu0
    %2367 = vmatpush.bf16.msra.mxu0 %v1911
    %2368 = vmatpush.bf16.msra.mxu0 %v1903
    %2369 = vmatpush.bf16.msra.mxu0 %v1895
    %2370 = vmatpush.bf16.msra.mxu0 %v1887
    %2371 = vmatpush.bf16.msra.mxu0 %v1879
    %2372 = vmatpush.bf16.msra.mxu0 %v1871
    %2373 = vmatpush.bf16.msra.mxu0 %v1863
    %2374 = vmatpush.bf16.msra.mxu0 %v1855
    %2375 = vmatmul.bf16.gmra.mxu0 %v745
    %v2376 = vpop.f32.mrf.mxu0
    %v2377 = vadd.f32 %v2364, %v2376
    %v2378 = vpop.f32.mrf.mxu0
    %2379 = vdwg.mxu0
    %2380 = vmatpush.bf16.msra.mxu0 %v1975
    %2381 = vmatpush.bf16.msra.mxu0 %v1967
    %2382 = vmatpush.bf16.msra.mxu0 %v1959
    %2383 = vmatpush.bf16.msra.mxu0 %v1951
    %2384 = vmatpush.bf16.msra.mxu0 %v1943
    %2385 = vmatpush.bf16.msra.mxu0 %v1935
    %2386 = vmatpush.bf16.msra.mxu0 %v1927
    %2387 = vmatpush.bf16.msra.mxu0 %v1919
    %2388 = vmatmul.bf16.gmra.mxu0 %v746
    %v2389 = vpop.f32.mrf.mxu0
    %v2390 = vadd.f32 %v2377, %v2389
    %v2391 = vpop.f32.mrf.mxu0
    %2392 = vdwg.mxu0
    %2393 = vmatpush.bf16.msra.mxu0 %v2039
    %2394 = vmatpush.bf16.msra.mxu0 %v2031
    %2395 = vmatpush.bf16.msra.mxu0 %v2023
    %2396 = vmatpush.bf16.msra.mxu0 %v2015
    %2397 = vmatpush.bf16.msra.mxu0 %v2007
    %2398 = vmatpush.bf16.msra.mxu0 %v1999
    %2399 = vmatpush.bf16.msra.mxu0 %v1991
    %2400 = vmatpush.bf16.msra.mxu0 %v1983
    %2401 = vmatmul.bf16.gmra.mxu0 %v747
    %v2402 = vpop.f32.mrf.mxu0
    %v2403 = vadd.f32 %v2390, %v2402
    %v2404 = vpop.f32.mrf.mxu0
    %2405 = vdwg.mxu0
    %2406 = vmatpush.bf16.msra.mxu0 %v1848
    %2407 = vmatpush.bf16.msra.mxu0 %v1840
    %2408 = vmatpush.bf16.msra.mxu0 %v1832
    %2409 = vmatpush.bf16.msra.mxu0 %v1824
    %2410 = vmatpush.bf16.msra.mxu0 %v1816
    %2411 = vmatpush.bf16.msra.mxu0 %v1808
    %2412 = vmatpush.bf16.msra.mxu0 %v1800
    %2413 = vmatpush.bf16.msra.mxu0 %v1792
    %2414 = vmatmul.bf16.gmra.mxu0 %v744
    %v2415 = vpop.f32.mrf.mxu0
    %v2416 = vadd.f32 %v1008, %v2415
    %v2417 = vpop.f32.mrf.mxu0
    %2418 = vdwg.mxu0
    %2419 = vmatpush.bf16.msra.mxu0 %v1912
    %2420 = vmatpush.bf16.msra.mxu0 %v1904
    %2421 = vmatpush.bf16.msra.mxu0 %v1896
    %2422 = vmatpush.bf16.msra.mxu0 %v1888
    %2423 = vmatpush.bf16.msra.mxu0 %v1880
    %2424 = vmatpush.bf16.msra.mxu0 %v1872
    %2425 = vmatpush.bf16.msra.mxu0 %v1864
    %2426 = vmatpush.bf16.msra.mxu0 %v1856
    %2427 = vmatmul.bf16.gmra.mxu0 %v745
    %v2428 = vpop.f32.mrf.mxu0
    %v2429 = vadd.f32 %v2416, %v2428
    %v2430 = vpop.f32.mrf.mxu0
    %2431 = vdwg.mxu0
    %2432 = vmatpush.bf16.msra.mxu0 %v1976
    %2433 = vmatpush.bf16.msra.mxu0 %v1968
    %2434 = vmatpush.bf16.msra.mxu0 %v1960
    %2435 = vmatpush.bf16.msra.mxu0 %v1952
    %2436 = vmatpush.bf16.msra.mxu0 %v1944
    %2437 = vmatpush.bf16.msra.mxu0 %v1936
    %2438 = vmatpush.bf16.msra.mxu0 %v1928
    %2439 = vmatpush.bf16.msra.mxu0 %v1920
    %2440 = vmatmul.bf16.gmra.mxu0 %v746
    %v2441 = vpop.f32.mrf.mxu0
    %v2442 = vadd.f32 %v2429, %v2441
    %v2443 = vpop.f32.mrf.mxu0
    %2444 = vdwg.mxu0
    %2445 = vmatpush.bf16.msra.mxu0 %v2040
    %2446 = vmatpush.bf16.msra.mxu0 %v2032
    %2447 = vmatpush.bf16.msra.mxu0 %v2024
    %2448 = vmatpush.bf16.msra.mxu0 %v2016
    %2449 = vmatpush.bf16.msra.mxu0 %v2008
    %2450 = vmatpush.bf16.msra.mxu0 %v2000
    %2451 = vmatpush.bf16.msra.mxu0 %v1992
    %2452 = vmatpush.bf16.msra.mxu0 %v1984
    %2453 = vmatmul.bf16.gmra.mxu0 %v747
    %v2454 = vpop.f32.mrf.mxu0
    %v2455 = vadd.f32 %v2442, %v2454
    %v2456 = vpop.f32.mrf.mxu0
    %2457 = vdwg.mxu0
    %2458 = vmatpush.bf16.msra.mxu0 %v1849
    %2459 = vmatpush.bf16.msra.mxu0 %v1841
    %2460 = vmatpush.bf16.msra.mxu0 %v1833
    %2461 = vmatpush.bf16.msra.mxu0 %v1825
    %2462 = vmatpush.bf16.msra.mxu0 %v1817
    %2463 = vmatpush.bf16.msra.mxu0 %v1809
    %2464 = vmatpush.bf16.msra.mxu0 %v1801
    %2465 = vmatpush.bf16.msra.mxu0 %v1793
    %2466 = vmatmul.bf16.gmra.mxu0 %v744
    %v2467 = vpop.f32.mrf.mxu0
    %v2468 = vadd.f32 %v1009, %v2467
    %v2469 = vpop.f32.mrf.mxu0
    %2470 = vdwg.mxu0
    %2471 = vmatpush.bf16.msra.mxu0 %v1913
    %2472 = vmatpush.bf16.msra.mxu0 %v1905
    %2473 = vmatpush.bf16.msra.mxu0 %v1897
    %2474 = vmatpush.bf16.msra.mxu0 %v1889
    %2475 = vmatpush.bf16.msra.mxu0 %v1881
    %2476 = vmatpush.bf16.msra.mxu0 %v1873
    %2477 = vmatpush.bf16.msra.mxu0 %v1865
    %2478 = vmatpush.bf16.msra.mxu0 %v1857
    %2479 = vmatmul.bf16.gmra.mxu0 %v745
    %v2480 = vpop.f32.mrf.mxu0
    %v2481 = vadd.f32 %v2468, %v2480
    %v2482 = vpop.f32.mrf.mxu0
    %2483 = vdwg.mxu0
    %2484 = vmatpush.bf16.msra.mxu0 %v1977
    %2485 = vmatpush.bf16.msra.mxu0 %v1969
    %2486 = vmatpush.bf16.msra.mxu0 %v1961
    %2487 = vmatpush.bf16.msra.mxu0 %v1953
    %2488 = vmatpush.bf16.msra.mxu0 %v1945
    %2489 = vmatpush.bf16.msra.mxu0 %v1937
    %2490 = vmatpush.bf16.msra.mxu0 %v1929
    %2491 = vmatpush.bf16.msra.mxu0 %v1921
    %2492 = vmatmul.bf16.gmra.mxu0 %v746
    %v2493 = vpop.f32.mrf.mxu0
    %v2494 = vadd.f32 %v2481, %v2493
    %v2495 = vpop.f32.mrf.mxu0
    %2496 = vdwg.mxu0
    %2497 = vmatpush.bf16.msra.mxu0 %v2041
    %2498 = vmatpush.bf16.msra.mxu0 %v2033
    %2499 = vmatpush.bf16.msra.mxu0 %v2025
    %2500 = vmatpush.bf16.msra.mxu0 %v2017
    %2501 = vmatpush.bf16.msra.mxu0 %v2009
    %2502 = vmatpush.bf16.msra.mxu0 %v2001
    %2503 = vmatpush.bf16.msra.mxu0 %v1993
    %2504 = vmatpush.bf16.msra.mxu0 %v1985
    %2505 = vmatmul.bf16.gmra.mxu0 %v747
    %v2506 = vpop.f32.mrf.mxu0
    %v2507 = vadd.f32 %v2494, %v2506
    %v2508 = vpop.f32.mrf.mxu0
    %2509 = vdwg.mxu0
    %2510 = vmatpush.bf16.msra.mxu0 %v1850
    %2511 = vmatpush.bf16.msra.mxu0 %v1842
    %2512 = vmatpush.bf16.msra.mxu0 %v1834
    %2513 = vmatpush.bf16.msra.mxu0 %v1826
    %2514 = vmatpush.bf16.msra.mxu0 %v1818
    %2515 = vmatpush.bf16.msra.mxu0 %v1810
    %2516 = vmatpush.bf16.msra.mxu0 %v1802
    %2517 = vmatpush.bf16.msra.mxu0 %v1794
    %2518 = vmatmul.bf16.gmra.mxu0 %v744
    %v2519 = vpop.f32.mrf.mxu0
    %v2520 = vadd.f32 %v1010, %v2519
    %v2521 = vpop.f32.mrf.mxu0
    %2522 = vdwg.mxu0
    %2523 = vmatpush.bf16.msra.mxu0 %v1914
    %2524 = vmatpush.bf16.msra.mxu0 %v1906
    %2525 = vmatpush.bf16.msra.mxu0 %v1898
    %2526 = vmatpush.bf16.msra.mxu0 %v1890
    %2527 = vmatpush.bf16.msra.mxu0 %v1882
    %2528 = vmatpush.bf16.msra.mxu0 %v1874
    %2529 = vmatpush.bf16.msra.mxu0 %v1866
    %2530 = vmatpush.bf16.msra.mxu0 %v1858
    %2531 = vmatmul.bf16.gmra.mxu0 %v745
    %v2532 = vpop.f32.mrf.mxu0
    %v2533 = vadd.f32 %v2520, %v2532
    %v2534 = vpop.f32.mrf.mxu0
    %2535 = vdwg.mxu0
    %2536 = vmatpush.bf16.msra.mxu0 %v1978
    %2537 = vmatpush.bf16.msra.mxu0 %v1970
    %2538 = vmatpush.bf16.msra.mxu0 %v1962
    %2539 = vmatpush.bf16.msra.mxu0 %v1954
    %2540 = vmatpush.bf16.msra.mxu0 %v1946
    %2541 = vmatpush.bf16.msra.mxu0 %v1938
    %2542 = vmatpush.bf16.msra.mxu0 %v1930
    %2543 = vmatpush.bf16.msra.mxu0 %v1922
    %2544 = vmatmul.bf16.gmra.mxu0 %v746
    %v2545 = vpop.f32.mrf.mxu0
    %v2546 = vadd.f32 %v2533, %v2545
    %v2547 = vpop.f32.mrf.mxu0
    %2548 = vdwg.mxu0
    %2549 = vmatpush.bf16.msra.mxu0 %v2042
    %2550 = vmatpush.bf16.msra.mxu0 %v2034
    %2551 = vmatpush.bf16.msra.mxu0 %v2026
    %2552 = vmatpush.bf16.msra.mxu0 %v2018
    %2553 = vmatpush.bf16.msra.mxu0 %v2010
    %2554 = vmatpush.bf16.msra.mxu0 %v2002
    %2555 = vmatpush.bf16.msra.mxu0 %v1994
    %2556 = vmatpush.bf16.msra.mxu0 %v1986
    %2557 = vmatmul.bf16.gmra.mxu0 %v747
    %v2558 = vpop.f32.mrf.mxu0
    %v2559 = vadd.f32 %v2546, %v2558
    %v2560 = vpop.f32.mrf.mxu0
    %2561 = vdwg.mxu0
    %2562 = vmatpush.bf16.msra.mxu0 %v1851
    %2563 = vmatpush.bf16.msra.mxu0 %v1843
    %2564 = vmatpush.bf16.msra.mxu0 %v1835
    %2565 = vmatpush.bf16.msra.mxu0 %v1827
    %2566 = vmatpush.bf16.msra.mxu0 %v1819
    %2567 = vmatpush.bf16.msra.mxu0 %v1811
    %2568 = vmatpush.bf16.msra.mxu0 %v1803
    %2569 = vmatpush.bf16.msra.mxu0 %v1795
    %2570 = vmatmul.bf16.gmra.mxu0 %v744
    %v2571 = vpop.f32.mrf.mxu0
    %v2572 = vadd.f32 %v1011, %v2571
    %v2573 = vpop.f32.mrf.mxu0
    %2574 = vdwg.mxu0
    %2575 = vmatpush.bf16.msra.mxu0 %v1915
    %2576 = vmatpush.bf16.msra.mxu0 %v1907
    %2577 = vmatpush.bf16.msra.mxu0 %v1899
    %2578 = vmatpush.bf16.msra.mxu0 %v1891
    %2579 = vmatpush.bf16.msra.mxu0 %v1883
    %2580 = vmatpush.bf16.msra.mxu0 %v1875
    %2581 = vmatpush.bf16.msra.mxu0 %v1867
    %2582 = vmatpush.bf16.msra.mxu0 %v1859
    %2583 = vmatmul.bf16.gmra.mxu0 %v745
    %v2584 = vpop.f32.mrf.mxu0
    %v2585 = vadd.f32 %v2572, %v2584
    %v2586 = vpop.f32.mrf.mxu0
    %2587 = vdwg.mxu0
    %2588 = vmatpush.bf16.msra.mxu0 %v1979
    %2589 = vmatpush.bf16.msra.mxu0 %v1971
    %2590 = vmatpush.bf16.msra.mxu0 %v1963
    %2591 = vmatpush.bf16.msra.mxu0 %v1955
    %2592 = vmatpush.bf16.msra.mxu0 %v1947
    %2593 = vmatpush.bf16.msra.mxu0 %v1939
    %2594 = vmatpush.bf16.msra.mxu0 %v1931
    %2595 = vmatpush.bf16.msra.mxu0 %v1923
    %2596 = vmatmul.bf16.gmra.mxu0 %v746
    %v2597 = vpop.f32.mrf.mxu0
    %v2598 = vadd.f32 %v2585, %v2597
    %v2599 = vpop.f32.mrf.mxu0
    %2600 = vdwg.mxu0
    %2601 = vmatpush.bf16.msra.mxu0 %v2043
    %2602 = vmatpush.bf16.msra.mxu0 %v2035
    %2603 = vmatpush.bf16.msra.mxu0 %v2027
    %2604 = vmatpush.bf16.msra.mxu0 %v2019
    %2605 = vmatpush.bf16.msra.mxu0 %v2011
    %2606 = vmatpush.bf16.msra.mxu0 %v2003
    %2607 = vmatpush.bf16.msra.mxu0 %v1995
    %2608 = vmatpush.bf16.msra.mxu0 %v1987
    %2609 = vmatmul.bf16.gmra.mxu0 %v747
    %v2610 = vpop.f32.mrf.mxu0
    %v2611 = vadd.f32 %v2598, %v2610
    %v2612 = vpop.f32.mrf.mxu0
    %2613 = vdwg.mxu0
    %2614 = vmatpush.bf16.msra.mxu0 %v1852
    %2615 = vmatpush.bf16.msra.mxu0 %v1844
    %2616 = vmatpush.bf16.msra.mxu0 %v1836
    %2617 = vmatpush.bf16.msra.mxu0 %v1828
    %2618 = vmatpush.bf16.msra.mxu0 %v1820
    %2619 = vmatpush.bf16.msra.mxu0 %v1812
    %2620 = vmatpush.bf16.msra.mxu0 %v1804
    %2621 = vmatpush.bf16.msra.mxu0 %v1796
    %2622 = vmatmul.bf16.gmra.mxu0 %v744
    %v2623 = vpop.f32.mrf.mxu0
    %v2624 = vadd.f32 %v1012, %v2623
    %v2625 = vpop.f32.mrf.mxu0
    %2626 = vdwg.mxu0
    %2627 = vmatpush.bf16.msra.mxu0 %v1916
    %2628 = vmatpush.bf16.msra.mxu0 %v1908
    %2629 = vmatpush.bf16.msra.mxu0 %v1900
    %2630 = vmatpush.bf16.msra.mxu0 %v1892
    %2631 = vmatpush.bf16.msra.mxu0 %v1884
    %2632 = vmatpush.bf16.msra.mxu0 %v1876
    %2633 = vmatpush.bf16.msra.mxu0 %v1868
    %2634 = vmatpush.bf16.msra.mxu0 %v1860
    %2635 = vmatmul.bf16.gmra.mxu0 %v745
    %v2636 = vpop.f32.mrf.mxu0
    %v2637 = vadd.f32 %v2624, %v2636
    %v2638 = vpop.f32.mrf.mxu0
    %2639 = vdwg.mxu0
    %2640 = vmatpush.bf16.msra.mxu0 %v1980
    %2641 = vmatpush.bf16.msra.mxu0 %v1972
    %2642 = vmatpush.bf16.msra.mxu0 %v1964
    %2643 = vmatpush.bf16.msra.mxu0 %v1956
    %2644 = vmatpush.bf16.msra.mxu0 %v1948
    %2645 = vmatpush.bf16.msra.mxu0 %v1940
    %2646 = vmatpush.bf16.msra.mxu0 %v1932
    %2647 = vmatpush.bf16.msra.mxu0 %v1924
    %2648 = vmatmul.bf16.gmra.mxu0 %v746
    %v2649 = vpop.f32.mrf.mxu0
    %v2650 = vadd.f32 %v2637, %v2649
    %v2651 = vpop.f32.mrf.mxu0
    %2652 = vdwg.mxu0
    %2653 = vmatpush.bf16.msra.mxu0 %v2044
    %2654 = vmatpush.bf16.msra.mxu0 %v2036
    %2655 = vmatpush.bf16.msra.mxu0 %v2028
    %2656 = vmatpush.bf16.msra.mxu0 %v2020
    %2657 = vmatpush.bf16.msra.mxu0 %v2012
    %2658 = vmatpush.bf16.msra.mxu0 %v2004
    %2659 = vmatpush.bf16.msra.mxu0 %v1996
    %2660 = vmatpush.bf16.msra.mxu0 %v1988
    %2661 = vmatmul.bf16.gmra.mxu0 %v747
    %v2662 = vpop.f32.mrf.mxu0
    %v2663 = vadd.f32 %v2650, %v2662
    %v2664 = vpop.f32.mrf.mxu0
    %2665 = vdwg.mxu0
    %2666 = vmatpush.bf16.msra.mxu0 %v1853
    %2667 = vmatpush.bf16.msra.mxu0 %v1845
    %2668 = vmatpush.bf16.msra.mxu0 %v1837
    %2669 = vmatpush.bf16.msra.mxu0 %v1829
    %2670 = vmatpush.bf16.msra.mxu0 %v1821
    %2671 = vmatpush.bf16.msra.mxu0 %v1813
    %2672 = vmatpush.bf16.msra.mxu0 %v1805
    %2673 = vmatpush.bf16.msra.mxu0 %v1797
    %2674 = vmatmul.bf16.gmra.mxu0 %v744
    %v2675 = vpop.f32.mrf.mxu0
    %v2676 = vadd.f32 %v1013, %v2675
    %v2677 = vpop.f32.mrf.mxu0
    %2678 = vdwg.mxu0
    %2679 = vmatpush.bf16.msra.mxu0 %v1917
    %2680 = vmatpush.bf16.msra.mxu0 %v1909
    %2681 = vmatpush.bf16.msra.mxu0 %v1901
    %2682 = vmatpush.bf16.msra.mxu0 %v1893
    %2683 = vmatpush.bf16.msra.mxu0 %v1885
    %2684 = vmatpush.bf16.msra.mxu0 %v1877
    %2685 = vmatpush.bf16.msra.mxu0 %v1869
    %2686 = vmatpush.bf16.msra.mxu0 %v1861
    %2687 = vmatmul.bf16.gmra.mxu0 %v745
    %v2688 = vpop.f32.mrf.mxu0
    %v2689 = vadd.f32 %v2676, %v2688
    %v2690 = vpop.f32.mrf.mxu0
    %2691 = vdwg.mxu0
    %2692 = vmatpush.bf16.msra.mxu0 %v1981
    %2693 = vmatpush.bf16.msra.mxu0 %v1973
    %2694 = vmatpush.bf16.msra.mxu0 %v1965
    %2695 = vmatpush.bf16.msra.mxu0 %v1957
    %2696 = vmatpush.bf16.msra.mxu0 %v1949
    %2697 = vmatpush.bf16.msra.mxu0 %v1941
    %2698 = vmatpush.bf16.msra.mxu0 %v1933
    %2699 = vmatpush.bf16.msra.mxu0 %v1925
    %2700 = vmatmul.bf16.gmra.mxu0 %v746
    %v2701 = vpop.f32.mrf.mxu0
    %v2702 = vadd.f32 %v2689, %v2701
    %v2703 = vpop.f32.mrf.mxu0
    %2704 = vdwg.mxu0
    %2705 = vmatpush.bf16.msra.mxu0 %v2045
    %2706 = vmatpush.bf16.msra.mxu0 %v2037
    %2707 = vmatpush.bf16.msra.mxu0 %v2029
    %2708 = vmatpush.bf16.msra.mxu0 %v2021
    %2709 = vmatpush.bf16.msra.mxu0 %v2013
    %2710 = vmatpush.bf16.msra.mxu0 %v2005
    %2711 = vmatpush.bf16.msra.mxu0 %v1997
    %2712 = vmatpush.bf16.msra.mxu0 %v1989
    %2713 = vmatmul.bf16.gmra.mxu0 %v747
    %v2714 = vpop.f32.mrf.mxu0
    %v2715 = vadd.f32 %v2702, %v2714
    %v2716 = vpop.f32.mrf.mxu0
    %2717 = vdwg.mxu0
    %vm2718 = vcmp.gt.f32.partialorder %v2351, 0.0
    %vm2719 = vcmp.gt.f32.partialorder %v2403, 0.0
    %vm2720 = vcmp.gt.f32.partialorder %v2455, 0.0
    %vm2721 = vcmp.gt.f32.partialorder %v2507, 0.0
    %vm2722 = vcmp.gt.f32.partialorder %v2559, 0.0
    %vm2723 = vcmp.gt.f32.partialorder %v2611, 0.0
    %vm2724 = vcmp.gt.f32.partialorder %v2663, 0.0
    %vm2725 = vcmp.gt.f32.partialorder %v2715, 0.0
    %v2726 = vmul.f32 %v2351, 0.2
    %v2727 = vmul.f32 %v2403, 0.2
    %v2728 = vmul.f32 %v2455, 0.2
    %v2729 = vmul.f32 %v2507, 0.2
    %v2730 = vmul.f32 %v2559, 0.2
    %v2731 = vmul.f32 %v2611, 0.2
    %v2732 = vmul.f32 %v2663, 0.2
    %v2733 = vmul.f32 %v2715, 0.2
    %v2734 = vsel %vm2718, %v2351, %v2726
    %v2735 = vsel %vm2719, %v2403, %v2727
    %v2736 = vsel %vm2720, %v2455, %v2728
    %v2737 = vsel %vm2721, %v2507, %v2729
    %v2738 = vsel %vm2722, %v2559, %v2730
    %v2739 = vsel %vm2723, %v2611, %v2731
    %v2740 = vsel %vm2724, %v2663, %v2732
    %v2741 = vsel %vm2725, %v2715, %v2733
    %v2742 = vpack.c.bf16 %v2734, %v2734
    %v2743 = vpack.c.bf16 %v2735, %v2735
    %v2744 = vpack.c.bf16 %v2736, %v2736
    %v2745 = vpack.c.bf16 %v2737, %v2737
    %v2746 = vpack.c.bf16 %v2738, %v2738
    %v2747 = vpack.c.bf16 %v2739, %v2739
    %v2748 = vpack.c.bf16 %v2740, %v2740
    %v2749 = vpack.c.bf16 %v2741, %v2741
    %v2750 = vld [vmem:[#allocation14] sm:$0xff]
    %v2751 = vld [vmem:[#allocation14 + $0x8] sm:$0xff]
    %v2752 = vld [vmem:[#allocation14 + $0x10] sm:$0xff]
    %v2753 = vld [vmem:[#allocation14 + $0x18] sm:$0xf]
    %v2754 = vld [vmem:[#allocation14 + $0x1c] sm:$0xff]
    %v2755 = vld [vmem:[#allocation14 + $0x24] sm:$0xff]
    %v2756 = vld [vmem:[#allocation14 + $0x2c] sm:$0xff]
    %v2757 = vld [vmem:[#allocation14 + $0x34] sm:$0xf]
    %v2758 = vld [vmem:[#allocation14 + $0x38] sm:$0xff]
    %v2759 = vld [vmem:[#allocation14 + $0x40] sm:$0xff]
    %v2760 = vld [vmem:[#allocation14 + $0x48] sm:$0xff]
    %v2761 = vld [vmem:[#allocation14 + $0x50] sm:$0xf]
    %v2762 = vld [vmem:[#allocation14 + $0x54] sm:$0xff]
    %v2763 = vld [vmem:[#allocation14 + $0x5c] sm:$0xff]
    %v2764 = vld [vmem:[#allocation14 + $0x64] sm:$0xff]
    %v2765 = vld [vmem:[#allocation14 + $0x6c] sm:$0xf]
    %v2766 = vld [vmem:[#allocation14 + $0x70] sm:$0xff]
    %v2767 = vld [vmem:[#allocation14 + $0x78] sm:$0xff]
    %v2768 = vld [vmem:[#allocation14 + $0x80] sm:$0xff]
    %v2769 = vld [vmem:[#allocation14 + $0x88] sm:$0xf]
    %v2770 = vld [vmem:[#allocation14 + $0x8c] sm:$0xff]
    %v2771 = vld [vmem:[#allocation14 + $0x94] sm:$0xff]
    %v2772 = vld [vmem:[#allocation14 + $0x9c] sm:$0xff]
    %v2773 = vld [vmem:[#allocation14 + $0xa4] sm:$0xf]
    %v2774 = vld [vmem:[#allocation14 + $0xa8] sm:$0xff]
    %v2775 = vld [vmem:[#allocation14 + $0xb0] sm:$0xff]
    %v2776 = vld [vmem:[#allocation14 + $0xb8] sm:$0xff]
    %v2777 = vld [vmem:[#allocation14 + $0xc0] sm:$0xf]
    %v2778 = vld [vmem:[#allocation14 + $0xc4] sm:$0xff]
    %v2779 = vld [vmem:[#allocation14 + $0xcc] sm:$0xff]
    %v2780 = vld [vmem:[#allocation14 + $0xd4] sm:$0xff]
    %v2781 = vld [vmem:[#allocation14 + $0xdc] sm:$0xf]
    %v2782 = vld [vmem:[#allocation14 + $0xe0] sm:$0xff]
    %v2783 = vld [vmem:[#allocation14 + $0xe8] sm:$0xff]
    %v2784 = vld [vmem:[#allocation14 + $0xf0] sm:$0xff]
    %v2785 = vld [vmem:[#allocation14 + $0xf8] sm:$0xf]
    %v2786 = vld [vmem:[#allocation14 + $0xfc] sm:$0xff]
    %v2787 = vld [vmem:[#allocation14 + $0x104] sm:$0xff]
    %v2788 = vld [vmem:[#allocation14 + $0x10c] sm:$0xff]
    %v2789 = vld [vmem:[#allocation14 + $0x114] sm:$0xf]
    %v2790 = vld [vmem:[#allocation14 + $0x118] sm:$0xff]
    %v2791 = vld [vmem:[#allocation14 + $0x120] sm:$0xff]
    %v2792 = vld [vmem:[#allocation14 + $0x128] sm:$0xff]
    %v2793 = vld [vmem:[#allocation14 + $0x130] sm:$0xf]
    %v2794 = vld [vmem:[#allocation14 + $0x134] sm:$0xff]
    %v2795 = vld [vmem:[#allocation14 + $0x13c] sm:$0xff]
    %v2796 = vld [vmem:[#allocation14 + $0x144] sm:$0xff]
    %v2797 = vld [vmem:[#allocation14 + $0x14c] sm:$0xf]
    %v2798 = vld [vmem:[#allocation14 + $0x150] sm:$0xff]
    %v2799 = vld [vmem:[#allocation14 + $0x158] sm:$0xff]
    %v2800 = vld [vmem:[#allocation14 + $0x160] sm:$0xff]
    %v2801 = vld [vmem:[#allocation14 + $0x168] sm:$0xf]
    %v2802 = vld [vmem:[#allocation14 + $0x16c] sm:$0xff]
    %v2803 = vld [vmem:[#allocation14 + $0x174] sm:$0xff]
    %v2804 = vld [vmem:[#allocation14 + $0x17c] sm:$0xff]
    %v2805 = vld [vmem:[#allocation14 + $0x184] sm:$0xf]
    %v2806 = vld [vmem:[#allocation14 + $0x188] sm:$0xff]
    %v2807 = vld [vmem:[#allocation14 + $0x190] sm:$0xff]
    %v2808 = vld [vmem:[#allocation14 + $0x198] sm:$0xff]
    %v2809 = vld [vmem:[#allocation14 + $0x1a0] sm:$0xf]
    %v2810 = vld [vmem:[#allocation14 + $0x1a4] sm:$0xff]
    %v2811 = vld [vmem:[#allocation14 + $0x1ac] sm:$0xff]
    %v2812 = vld [vmem:[#allocation14 + $0x1b4] sm:$0xff]
    %v2813 = vld [vmem:[#allocation14 + $0x1bc] sm:$0xf]
    %v2814 = vld [vmem:[#allocation14 + $0x1c0] sm:$0xff]
    %v2815 = vld [vmem:[#allocation14 + $0x1c8] sm:$0xff]
    %v2816 = vld [vmem:[#allocation14 + $0x1d0] sm:$0xff]
    %v2817 = vld [vmem:[#allocation14 + $0x1d8] sm:$0xf]
    %v2818 = vld [vmem:[#allocation14 + $0x1dc] sm:$0xff]
    %v2819 = vld [vmem:[#allocation14 + $0x1e4] sm:$0xff]
    %v2820 = vld [vmem:[#allocation14 + $0x1ec] sm:$0xff]
    %v2821 = vld [vmem:[#allocation14 + $0x1f4] sm:$0xf]
    %v2822 = vld [vmem:[#allocation14 + $0x1f8] sm:$0xff]
    %v2823 = vld [vmem:[#allocation14 + $0x200] sm:$0xff]
    %v2824 = vld [vmem:[#allocation14 + $0x208] sm:$0xff]
    %v2825 = vld [vmem:[#allocation14 + $0x210] sm:$0xf]
    %v2826 = vld [vmem:[#allocation14 + $0x214] sm:$0xff]
    %v2827 = vld [vmem:[#allocation14 + $0x21c] sm:$0xff]
    %v2828 = vld [vmem:[#allocation14 + $0x224] sm:$0xff]
    %v2829 = vld [vmem:[#allocation14 + $0x22c] sm:$0xf]
    %v2830 = vld [vmem:[#allocation14 + $0x230] sm:$0xff]
    %v2831 = vld [vmem:[#allocation14 + $0x238] sm:$0xff]
    %v2832 = vld [vmem:[#allocation14 + $0x240] sm:$0xff]
    %v2833 = vld [vmem:[#allocation14 + $0x248] sm:$0xf]
    %v2834 = vld [vmem:[#allocation14 + $0x24c] sm:$0xff]
    %v2835 = vld [vmem:[#allocation14 + $0x254] sm:$0xff]
    %v2836 = vld [vmem:[#allocation14 + $0x25c] sm:$0xff]
    %v2837 = vld [vmem:[#allocation14 + $0x264] sm:$0xf]
    %v2838 = vld [vmem:[#allocation14 + $0x268] sm:$0xff]
    %v2839 = vld [vmem:[#allocation14 + $0x270] sm:$0xff]
    %v2840 = vld [vmem:[#allocation14 + $0x278] sm:$0xff]
    %v2841 = vld [vmem:[#allocation14 + $0x280] sm:$0xf]
    %v2842 = vld [vmem:[#allocation14 + $0x284] sm:$0xff]
    %v2843 = vld [vmem:[#allocation14 + $0x28c] sm:$0xff]
    %v2844 = vld [vmem:[#allocation14 + $0x294] sm:$0xff]
    %v2845 = vld [vmem:[#allocation14 + $0x29c] sm:$0xf]
    %v2846 = vld [vmem:[#allocation14 + $0x2a0] sm:$0xff]
    %v2847 = vld [vmem:[#allocation14 + $0x2a8] sm:$0xff]
    %v2848 = vld [vmem:[#allocation14 + $0x2b0] sm:$0xff]
    %v2849 = vld [vmem:[#allocation14 + $0x2b8] sm:$0xf]
    %v2850 = vld [vmem:[#allocation14 + $0x2bc] sm:$0xff]
    %v2851 = vld [vmem:[#allocation14 + $0x2c4] sm:$0xff]
    %v2852 = vld [vmem:[#allocation14 + $0x2cc] sm:$0xff]
    %v2853 = vld [vmem:[#allocation14 + $0x2d4] sm:$0xf]
    %v2854 = vld [vmem:[#allocation14 + $0x2d8] sm:$0xff]
    %v2855 = vld [vmem:[#allocation14 + $0x2e0] sm:$0xff]
    %v2856 = vld [vmem:[#allocation14 + $0x2e8] sm:$0xff]
    %v2857 = vld [vmem:[#allocation14 + $0x2f0] sm:$0xf]
    %v2858 = vld [vmem:[#allocation14 + $0x2f4] sm:$0xff]
    %v2859 = vld [vmem:[#allocation14 + $0x2fc] sm:$0xff]
    %v2860 = vld [vmem:[#allocation14 + $0x304] sm:$0xff]
    %v2861 = vld [vmem:[#allocation14 + $0x30c] sm:$0xf]
    %v2862 = vld [vmem:[#allocation14 + $0x310] sm:$0xff]
    %v2863 = vld [vmem:[#allocation14 + $0x318] sm:$0xff]
    %v2864 = vld [vmem:[#allocation14 + $0x320] sm:$0xff]
    %v2865 = vld [vmem:[#allocation14 + $0x328] sm:$0xf]
    %v2866 = vld [vmem:[#allocation14 + $0x32c] sm:$0xff]
    %v2867 = vld [vmem:[#allocation14 + $0x334] sm:$0xff]
    %v2868 = vld [vmem:[#allocation14 + $0x33c] sm:$0xff]
    %v2869 = vld [vmem:[#allocation14 + $0x344] sm:$0xf]
    %v2870 = vld [vmem:[#allocation14 + $0x348] sm:$0xff]
    %v2871 = vld [vmem:[#allocation14 + $0x350] sm:$0xff]
    %v2872 = vld [vmem:[#allocation14 + $0x358] sm:$0xff]
    %v2873 = vld [vmem:[#allocation14 + $0x360] sm:$0xf]
    %v2874 = vld [vmem:[#allocation14 + $0x364] sm:$0xff]
    %v2875 = vld [vmem:[#allocation14 + $0x36c] sm:$0xff]
    %v2876 = vld [vmem:[#allocation14 + $0x374] sm:$0xff]
    %v2877 = vld [vmem:[#allocation14 + $0x37c] sm:$0xf]
    %v2878 = vld [vmem:[#allocation14 + $0x380] sm:$0xff]
    %v2879 = vld [vmem:[#allocation14 + $0x388] sm:$0xff]
    %v2880 = vld [vmem:[#allocation14 + $0x390] sm:$0xff]
    %v2881 = vld [vmem:[#allocation14 + $0x398] sm:$0xf]
    %v2882 = vld [vmem:[#allocation14 + $0x39c] sm:$0xff]
    %v2883 = vld [vmem:[#allocation14 + $0x3a4] sm:$0xff]
    %v2884 = vld [vmem:[#allocation14 + $0x3ac] sm:$0xff]
    %v2885 = vld [vmem:[#allocation14 + $0x3b4] sm:$0xf]
    %v2886 = vld [vmem:[#allocation14 + $0x3b8] sm:$0xff]
    %v2887 = vld [vmem:[#allocation14 + $0x3c0] sm:$0xff]
    %v2888 = vld [vmem:[#allocation14 + $0x3c8] sm:$0xff]
    %v2889 = vld [vmem:[#allocation14 + $0x3d0] sm:$0xf]
    %v2890 = vld [vmem:[#allocation14 + $0x3d4] sm:$0xff]
    %v2891 = vld [vmem:[#allocation14 + $0x3dc] sm:$0xff]
    %v2892 = vld [vmem:[#allocation14 + $0x3e4] sm:$0xff]
    %v2893 = vld [vmem:[#allocation14 + $0x3ec] sm:$0xf]
    %v2894 = vld [vmem:[#allocation14 + $0x3f0] sm:$0xff]
    %v2895 = vld [vmem:[#allocation14 + $0x3f8] sm:$0xff]
    %v2896 = vld [vmem:[#allocation14 + $0x400] sm:$0xff]
    %v2897 = vld [vmem:[#allocation14 + $0x408] sm:$0xf]
    %v2898 = vld [vmem:[#allocation14 + $0x40c] sm:$0xff]
    %v2899 = vld [vmem:[#allocation14 + $0x414] sm:$0xff]
    %v2900 = vld [vmem:[#allocation14 + $0x41c] sm:$0xff]
    %v2901 = vld [vmem:[#allocation14 + $0x424] sm:$0xf]
    %v2902 = vld [vmem:[#allocation14 + $0x428] sm:$0xff]
    %v2903 = vld [vmem:[#allocation14 + $0x430] sm:$0xff]
    %v2904 = vld [vmem:[#allocation14 + $0x438] sm:$0xff]
    %v2905 = vld [vmem:[#allocation14 + $0x440] sm:$0xf]
    %v2906 = vld [vmem:[#allocation14 + $0x444] sm:$0xff]
    %v2907 = vld [vmem:[#allocation14 + $0x44c] sm:$0xff]
    %v2908 = vld [vmem:[#allocation14 + $0x454] sm:$0xff]
    %v2909 = vld [vmem:[#allocation14 + $0x45c] sm:$0xf]
    %v2910 = vld [vmem:[#allocation14 + $0x460] sm:$0xff]
    %v2911 = vld [vmem:[#allocation14 + $0x468] sm:$0xff]
    %v2912 = vld [vmem:[#allocation14 + $0x470] sm:$0xff]
    %v2913 = vld [vmem:[#allocation14 + $0x478] sm:$0xf]
    %v2914 = vld [vmem:[#allocation14 + $0x47c] sm:$0xff]
    %v2915 = vld [vmem:[#allocation14 + $0x484] sm:$0xff]
    %v2916 = vld [vmem:[#allocation14 + $0x48c] sm:$0xff]
    %v2917 = vld [vmem:[#allocation14 + $0x494] sm:$0xf]
    %v2918 = vld [vmem:[#allocation14 + $0x498] sm:$0xff]
    %v2919 = vld [vmem:[#allocation14 + $0x4a0] sm:$0xff]
    %v2920 = vld [vmem:[#allocation14 + $0x4a8] sm:$0xff]
    %v2921 = vld [vmem:[#allocation14 + $0x4b0] sm:$0xf]
    %v2922 = vld [vmem:[#allocation14 + $0x4b4] sm:$0xff]
    %v2923 = vld [vmem:[#allocation14 + $0x4bc] sm:$0xff]
    %v2924 = vld [vmem:[#allocation14 + $0x4c4] sm:$0xff]
    %v2925 = vld [vmem:[#allocation14 + $0x4cc] sm:$0xf]
    %v2926 = vld [vmem:[#allocation14 + $0x4d0] sm:$0xff]
    %v2927 = vld [vmem:[#allocation14 + $0x4d8] sm:$0xff]
    %v2928 = vld [vmem:[#allocation14 + $0x4e0] sm:$0xff]
    %v2929 = vld [vmem:[#allocation14 + $0x4e8] sm:$0xf]
    %v2930 = vld [vmem:[#allocation14 + $0x4ec] sm:$0xff]
    %v2931 = vld [vmem:[#allocation14 + $0x4f4] sm:$0xff]
    %v2932 = vld [vmem:[#allocation14 + $0x4fc] sm:$0xff]
    %v2933 = vld [vmem:[#allocation14 + $0x504] sm:$0xf]
    %v2934 = vld [vmem:[#allocation14 + $0x508] sm:$0xff]
    %v2935 = vld [vmem:[#allocation14 + $0x510] sm:$0xff]
    %v2936 = vld [vmem:[#allocation14 + $0x518] sm:$0xff]
    %v2937 = vld [vmem:[#allocation14 + $0x520] sm:$0xf]
    %v2938 = vld [vmem:[#allocation14 + $0x524] sm:$0xff]
    %v2939 = vld [vmem:[#allocation14 + $0x52c] sm:$0xff]
    %v2940 = vld [vmem:[#allocation14 + $0x534] sm:$0xff]
    %v2941 = vld [vmem:[#allocation14 + $0x53c] sm:$0xf]
    %v2942 = vld [vmem:[#allocation14 + $0x540] sm:$0xff]
    %v2943 = vld [vmem:[#allocation14 + $0x548] sm:$0xff]
    %v2944 = vld [vmem:[#allocation14 + $0x550] sm:$0xff]
    %v2945 = vld [vmem:[#allocation14 + $0x558] sm:$0xf]
    %v2946 = vld [vmem:[#allocation14 + $0x55c] sm:$0xff]
    %v2947 = vld [vmem:[#allocation14 + $0x564] sm:$0xff]
    %v2948 = vld [vmem:[#allocation14 + $0x56c] sm:$0xff]
    %v2949 = vld [vmem:[#allocation14 + $0x574] sm:$0xf]
    %v2950 = vld [vmem:[#allocation14 + $0x578] sm:$0xff]
    %v2951 = vld [vmem:[#allocation14 + $0x580] sm:$0xff]
    %v2952 = vld [vmem:[#allocation14 + $0x588] sm:$0xff]
    %v2953 = vld [vmem:[#allocation14 + $0x590] sm:$0xf]
    %v2954 = vld [vmem:[#allocation14 + $0x594] sm:$0xff]
    %v2955 = vld [vmem:[#allocation14 + $0x59c] sm:$0xff]
    %v2956 = vld [vmem:[#allocation14 + $0x5a4] sm:$0xff]
    %v2957 = vld [vmem:[#allocation14 + $0x5ac] sm:$0xf]
    %v2958 = vld [vmem:[#allocation14 + $0x5b0] sm:$0xff]
    %v2959 = vld [vmem:[#allocation14 + $0x5b8] sm:$0xff]
    %v2960 = vld [vmem:[#allocation14 + $0x5c0] sm:$0xff]
    %v2961 = vld [vmem:[#allocation14 + $0x5c8] sm:$0xf]
    %v2962 = vld [vmem:[#allocation14 + $0x5cc] sm:$0xff]
    %v2963 = vld [vmem:[#allocation14 + $0x5d4] sm:$0xff]
    %v2964 = vld [vmem:[#allocation14 + $0x5dc] sm:$0xff]
    %v2965 = vld [vmem:[#allocation14 + $0x5e4] sm:$0xf]
    %v2966 = vld [vmem:[#allocation14 + $0x5e8] sm:$0xff]
    %v2967 = vld [vmem:[#allocation14 + $0x5f0] sm:$0xff]
    %v2968 = vld [vmem:[#allocation14 + $0x5f8] sm:$0xff]
    %v2969 = vld [vmem:[#allocation14 + $0x600] sm:$0xf]
    %v2970 = vld [vmem:[#allocation14 + $0x604] sm:$0xff]
    %v2971 = vld [vmem:[#allocation14 + $0x60c] sm:$0xff]
    %v2972 = vld [vmem:[#allocation14 + $0x614] sm:$0xff]
    %v2973 = vld [vmem:[#allocation14 + $0x61c] sm:$0xf]
    %v2974 = vld [vmem:[#allocation14 + $0x620] sm:$0xff]
    %v2975 = vld [vmem:[#allocation14 + $0x628] sm:$0xff]
    %v2976 = vld [vmem:[#allocation14 + $0x630] sm:$0xff]
    %v2977 = vld [vmem:[#allocation14 + $0x638] sm:$0xf]
    %v2978 = vld [vmem:[#allocation14 + $0x63c] sm:$0xff]
    %v2979 = vld [vmem:[#allocation14 + $0x644] sm:$0xff]
    %v2980 = vld [vmem:[#allocation14 + $0x64c] sm:$0xff]
    %v2981 = vld [vmem:[#allocation14 + $0x654] sm:$0xf]
    %v2982 = vld [vmem:[#allocation14 + $0x658] sm:$0xff]
    %v2983 = vld [vmem:[#allocation14 + $0x660] sm:$0xff]
    %v2984 = vld [vmem:[#allocation14 + $0x668] sm:$0xff]
    %v2985 = vld [vmem:[#allocation14 + $0x670] sm:$0xf]
    %v2986 = vld [vmem:[#allocation14 + $0x674] sm:$0xff]
    %v2987 = vld [vmem:[#allocation14 + $0x67c] sm:$0xff]
    %v2988 = vld [vmem:[#allocation14 + $0x684] sm:$0xff]
    %v2989 = vld [vmem:[#allocation14 + $0x68c] sm:$0xf]
    %v2990 = vld [vmem:[#allocation14 + $0x690] sm:$0xff]
    %v2991 = vld [vmem:[#allocation14 + $0x698] sm:$0xff]
    %v2992 = vld [vmem:[#allocation14 + $0x6a0] sm:$0xff]
    %v2993 = vld [vmem:[#allocation14 + $0x6a8] sm:$0xf]
    %v2994 = vld [vmem:[#allocation14 + $0x6ac] sm:$0xff]
    %v2995 = vld [vmem:[#allocation14 + $0x6b4] sm:$0xff]
    %v2996 = vld [vmem:[#allocation14 + $0x6bc] sm:$0xff]
    %v2997 = vld [vmem:[#allocation14 + $0x6c4] sm:$0xf]
    %v2998 = vld [vmem:[#allocation14 + $0x6c8] sm:$0xff]
    %v2999 = vld [vmem:[#allocation14 + $0x6d0] sm:$0xff]
    %v3000 = vld [vmem:[#allocation14 + $0x6d8] sm:$0xff]
    %v3001 = vld [vmem:[#allocation14 + $0x6e0] sm:$0xf]
    %v3002 = vld [vmem:[#allocation14 + $0x6e4] sm:$0xff]
    %v3003 = vld [vmem:[#allocation14 + $0x6ec] sm:$0xff]
    %v3004 = vld [vmem:[#allocation14 + $0x6f4] sm:$0xff]
    %v3005 = vld [vmem:[#allocation14 + $0x6fc] sm:$0xf]
    %v3006 = vld [vmem:[#allocation14 + $0x700] sm:$0xff]
    %v3007 = vld [vmem:[#allocation14 + $0x708] sm:$0xff]
    %v3008 = vld [vmem:[#allocation14 + $0x710] sm:$0xff]
    %v3009 = vld [vmem:[#allocation14 + $0x718] sm:$0xf]
    %v3010 = vld [vmem:[#allocation14 + $0x71c] sm:$0xff]
    %v3011 = vld [vmem:[#allocation14 + $0x724] sm:$0xff]
    %v3012 = vld [vmem:[#allocation14 + $0x72c] sm:$0xff]
    %v3013 = vld [vmem:[#allocation14 + $0x734] sm:$0xf]
    %v3014 = vld [vmem:[#allocation14 + $0x738] sm:$0xff]
    %v3015 = vld [vmem:[#allocation14 + $0x740] sm:$0xff]
    %v3016 = vld [vmem:[#allocation14 + $0x748] sm:$0xff]
    %v3017 = vld [vmem:[#allocation14 + $0x750] sm:$0xf]
    %v3018 = vld [vmem:[#allocation14 + $0x754] sm:$0xff]
    %v3019 = vld [vmem:[#allocation14 + $0x75c] sm:$0xff]
    %v3020 = vld [vmem:[#allocation14 + $0x764] sm:$0xff]
    %v3021 = vld [vmem:[#allocation14 + $0x76c] sm:$0xf]
    %v3022 = vld [vmem:[#allocation14 + $0x770] sm:$0xff]
    %v3023 = vld [vmem:[#allocation14 + $0x778] sm:$0xff]
    %v3024 = vld [vmem:[#allocation14 + $0x780] sm:$0xff]
    %v3025 = vld [vmem:[#allocation14 + $0x788] sm:$0xf]
    %v3026 = vld [vmem:[#allocation14 + $0x78c] sm:$0xff]
    %v3027 = vld [vmem:[#allocation14 + $0x794] sm:$0xff]
    %v3028 = vld [vmem:[#allocation14 + $0x79c] sm:$0xff]
    %v3029 = vld [vmem:[#allocation14 + $0x7a4] sm:$0xf]
    %v3030 = vld [vmem:[#allocation14 + $0x7a8] sm:$0xff]
    %v3031 = vld [vmem:[#allocation14 + $0x7b0] sm:$0xff]
    %v3032 = vld [vmem:[#allocation14 + $0x7b8] sm:$0xff]
    %v3033 = vld [vmem:[#allocation14 + $0x7c0] sm:$0xf]
    %v3034 = vld [vmem:[#allocation14 + $0x7c4] sm:$0xff]
    %v3035 = vld [vmem:[#allocation14 + $0x7cc] sm:$0xff]
    %v3036 = vld [vmem:[#allocation14 + $0x7d4] sm:$0xff]
    %v3037 = vld [vmem:[#allocation14 + $0x7dc] sm:$0xf]
    %v3038 = vld [vmem:[#allocation14 + $0x7e0] sm:$0xff]
    %v3039 = vld [vmem:[#allocation14 + $0x7e8] sm:$0xff]
    %v3040 = vld [vmem:[#allocation14 + $0x7f0] sm:$0xff]
    %v3041 = vld [vmem:[#allocation14 + $0x7f8] sm:$0xf]
    %v3042 = vld [vmem:[#allocation14 + $0x7fc] sm:$0xff]
    %v3043 = vld [vmem:[#allocation14 + $0x804] sm:$0xff]
    %v3044 = vld [vmem:[#allocation14 + $0x80c] sm:$0xff]
    %v3045 = vld [vmem:[#allocation14 + $0x814] sm:$0xf]
    %v3046 = vld [vmem:[#allocation14 + $0x818] sm:$0xff]
    %v3047 = vld [vmem:[#allocation14 + $0x820] sm:$0xff]
    %v3048 = vld [vmem:[#allocation14 + $0x828] sm:$0xff]
    %v3049 = vld [vmem:[#allocation14 + $0x830] sm:$0xf]
    %v3050 = vld [vmem:[#allocation14 + $0x834] sm:$0xff]
    %v3051 = vld [vmem:[#allocation14 + $0x83c] sm:$0xff]
    %v3052 = vld [vmem:[#allocation14 + $0x844] sm:$0xff]
    %v3053 = vld [vmem:[#allocation14 + $0x84c] sm:$0xf]
    %v3054 = vld [vmem:[#allocation14 + $0x850] sm:$0xff]
    %v3055 = vld [vmem:[#allocation14 + $0x858] sm:$0xff]
    %v3056 = vld [vmem:[#allocation14 + $0x860] sm:$0xff]
    %v3057 = vld [vmem:[#allocation14 + $0x868] sm:$0xf]
    %v3058 = vld [vmem:[#allocation14 + $0x86c] sm:$0xff]
    %v3059 = vld [vmem:[#allocation14 + $0x874] sm:$0xff]
    %v3060 = vld [vmem:[#allocation14 + $0x87c] sm:$0xff]
    %v3061 = vld [vmem:[#allocation14 + $0x884] sm:$0xf]
    %v3062 = vld [vmem:[#allocation14 + $0x888] sm:$0xff]
    %v3063 = vld [vmem:[#allocation14 + $0x890] sm:$0xff]
    %v3064 = vld [vmem:[#allocation14 + $0x898] sm:$0xff]
    %v3065 = vld [vmem:[#allocation14 + $0x8a0] sm:$0xf]
    %v3066 = vld [vmem:[#allocation14 + $0x8a4] sm:$0xff]
    %v3067 = vld [vmem:[#allocation14 + $0x8ac] sm:$0xff]
    %v3068 = vld [vmem:[#allocation14 + $0x8b4] sm:$0xff]
    %v3069 = vld [vmem:[#allocation14 + $0x8bc] sm:$0xf]
    %v3070 = vld [vmem:[#allocation14 + $0x8c0] sm:$0xff]
    %v3071 = vld [vmem:[#allocation14 + $0x8c8] sm:$0xff]
    %v3072 = vld [vmem:[#allocation14 + $0x8d0] sm:$0xff]
    %v3073 = vld [vmem:[#allocation14 + $0x8d8] sm:$0xf]
    %v3074 = vld [vmem:[#allocation14 + $0x8dc] sm:$0xff]
    %v3075 = vld [vmem:[#allocation14 + $0x8e4] sm:$0xff]
    %v3076 = vld [vmem:[#allocation14 + $0x8ec] sm:$0xff]
    %v3077 = vld [vmem:[#allocation14 + $0x8f4] sm:$0xf]
    %v3078 = vld [vmem:[#allocation14 + $0x8f8] sm:$0xff]
    %v3079 = vld [vmem:[#allocation14 + $0x900] sm:$0xff]
    %v3080 = vld [vmem:[#allocation14 + $0x908] sm:$0xff]
    %v3081 = vld [vmem:[#allocation14 + $0x910] sm:$0xf]
    %v3082 = vld [vmem:[#allocation14 + $0x914] sm:$0xff]
    %v3083 = vld [vmem:[#allocation14 + $0x91c] sm:$0xff]
    %v3084 = vld [vmem:[#allocation14 + $0x924] sm:$0xff]
    %v3085 = vld [vmem:[#allocation14 + $0x92c] sm:$0xf]
    %v3086 = vld [vmem:[#allocation14 + $0x930] sm:$0xff]
    %v3087 = vld [vmem:[#allocation14 + $0x938] sm:$0xff]
    %v3088 = vld [vmem:[#allocation14 + $0x940] sm:$0xff]
    %v3089 = vld [vmem:[#allocation14 + $0x948] sm:$0xf]
    %v3090 = vld [vmem:[#allocation14 + $0x94c] sm:$0xff]
    %v3091 = vld [vmem:[#allocation14 + $0x954] sm:$0xff]
    %v3092 = vld [vmem:[#allocation14 + $0x95c] sm:$0xff]
    %v3093 = vld [vmem:[#allocation14 + $0x964] sm:$0xf]
    %v3094 = vld [vmem:[#allocation14 + $0x968] sm:$0xff]
    %v3095 = vld [vmem:[#allocation14 + $0x970] sm:$0xff]
    %v3096 = vld [vmem:[#allocation14 + $0x978] sm:$0xff]
    %v3097 = vld [vmem:[#allocation14 + $0x980] sm:$0xf]
    %v3098 = vld [vmem:[#allocation14 + $0x984] sm:$0xff]
    %v3099 = vld [vmem:[#allocation14 + $0x98c] sm:$0xff]
    %v3100 = vld [vmem:[#allocation14 + $0x994] sm:$0xff]
    %v3101 = vld [vmem:[#allocation14 + $0x99c] sm:$0xf]
    %v3102 = vld [vmem:[#allocation14 + $0x9a0] sm:$0xff]
    %v3103 = vld [vmem:[#allocation14 + $0x9a8] sm:$0xff]
    %v3104 = vld [vmem:[#allocation14 + $0x9b0] sm:$0xff]
    %v3105 = vld [vmem:[#allocation14 + $0x9b8] sm:$0xf]
    %v3106 = vld [vmem:[#allocation14 + $0x9bc] sm:$0xff]
    %v3107 = vld [vmem:[#allocation14 + $0x9c4] sm:$0xff]
    %v3108 = vld [vmem:[#allocation14 + $0x9cc] sm:$0xff]
    %v3109 = vld [vmem:[#allocation14 + $0x9d4] sm:$0xf]
    %v3110 = vld [vmem:[#allocation14 + $0x9d8] sm:$0xff]
    %v3111 = vld [vmem:[#allocation14 + $0x9e0] sm:$0xff]
    %v3112 = vld [vmem:[#allocation14 + $0x9e8] sm:$0xff]
    %v3113 = vld [vmem:[#allocation14 + $0x9f0] sm:$0xf]
    %v3114 = vld [vmem:[#allocation14 + $0x9f4] sm:$0xff]
    %v3115 = vld [vmem:[#allocation14 + $0x9fc] sm:$0xff]
    %v3116 = vld [vmem:[#allocation14 + $0xa04] sm:$0xff]
    %v3117 = vld [vmem:[#allocation14 + $0xa0c] sm:$0xf]
    %v3118 = vld [vmem:[#allocation14 + $0xa10] sm:$0xff]
    %v3119 = vld [vmem:[#allocation14 + $0xa18] sm:$0xff]
    %v3120 = vld [vmem:[#allocation14 + $0xa20] sm:$0xff]
    %v3121 = vld [vmem:[#allocation14 + $0xa28] sm:$0xf]
    %v3122 = vld [vmem:[#allocation14 + $0xa2c] sm:$0xff]
    %v3123 = vld [vmem:[#allocation14 + $0xa34] sm:$0xff]
    %v3124 = vld [vmem:[#allocation14 + $0xa3c] sm:$0xff]
    %v3125 = vld [vmem:[#allocation14 + $0xa44] sm:$0xf]
    %v3126 = vld [vmem:[#allocation14 + $0xa48] sm:$0xff]
    %v3127 = vld [vmem:[#allocation14 + $0xa50] sm:$0xff]
    %v3128 = vld [vmem:[#allocation14 + $0xa58] sm:$0xff]
    %v3129 = vld [vmem:[#allocation14 + $0xa60] sm:$0xf]
    %v3130 = vld [vmem:[#allocation14 + $0xa64] sm:$0xff]
    %v3131 = vld [vmem:[#allocation14 + $0xa6c] sm:$0xff]
    %v3132 = vld [vmem:[#allocation14 + $0xa74] sm:$0xff]
    %v3133 = vld [vmem:[#allocation14 + $0xa7c] sm:$0xf]
    %v3134 = vld [vmem:[#allocation14 + $0xa80] sm:$0xff]
    %v3135 = vld [vmem:[#allocation14 + $0xa88] sm:$0xff]
    %v3136 = vld [vmem:[#allocation14 + $0xa90] sm:$0xff]
    %v3137 = vld [vmem:[#allocation14 + $0xa98] sm:$0xf]
    %v3138 = vld [vmem:[#allocation14 + $0xa9c] sm:$0xff]
    %v3139 = vld [vmem:[#allocation14 + $0xaa4] sm:$0xff]
    %v3140 = vld [vmem:[#allocation14 + $0xaac] sm:$0xff]
    %v3141 = vld [vmem:[#allocation14 + $0xab4] sm:$0xf]
    %v3142 = vld [vmem:[#allocation14 + $0xab8] sm:$0xff]
    %v3143 = vld [vmem:[#allocation14 + $0xac0] sm:$0xff]
    %v3144 = vld [vmem:[#allocation14 + $0xac8] sm:$0xff]
    %v3145 = vld [vmem:[#allocation14 + $0xad0] sm:$0xf]
    %v3146 = vld [vmem:[#allocation14 + $0xad4] sm:$0xff]
    %v3147 = vld [vmem:[#allocation14 + $0xadc] sm:$0xff]
    %v3148 = vld [vmem:[#allocation14 + $0xae4] sm:$0xff]
    %v3149 = vld [vmem:[#allocation14 + $0xaec] sm:$0xf]
    %v3150 = vld [vmem:[#allocation14 + $0xaf0] sm:$0xff]
    %v3151 = vld [vmem:[#allocation14 + $0xaf8] sm:$0xff]
    %v3152 = vld [vmem:[#allocation14 + $0xb00] sm:$0xff]
    %v3153 = vld [vmem:[#allocation14 + $0xb08] sm:$0xf]
    %v3154 = vld [vmem:[#allocation14 + $0xb0c] sm:$0xff]
    %v3155 = vld [vmem:[#allocation14 + $0xb14] sm:$0xff]
    %v3156 = vld [vmem:[#allocation14 + $0xb1c] sm:$0xff]
    %v3157 = vld [vmem:[#allocation14 + $0xb24] sm:$0xf]
    %v3158 = vld [vmem:[#allocation14 + $0xb28] sm:$0xff]
    %v3159 = vld [vmem:[#allocation14 + $0xb30] sm:$0xff]
    %v3160 = vld [vmem:[#allocation14 + $0xb38] sm:$0xff]
    %v3161 = vld [vmem:[#allocation14 + $0xb40] sm:$0xf]
    %v3162 = vld [vmem:[#allocation14 + $0xb44] sm:$0xff]
    %v3163 = vld [vmem:[#allocation14 + $0xb4c] sm:$0xff]
    %v3164 = vld [vmem:[#allocation14 + $0xb54] sm:$0xff]
    %v3165 = vld [vmem:[#allocation14 + $0xb5c] sm:$0xf]
    %v3166 = vld [vmem:[#allocation14 + $0xb60] sm:$0xff]
    %v3167 = vld [vmem:[#allocation14 + $0xb68] sm:$0xff]
    %v3168 = vld [vmem:[#allocation14 + $0xb70] sm:$0xff]
    %v3169 = vld [vmem:[#allocation14 + $0xb78] sm:$0xf]
    %v3170 = vld [vmem:[#allocation14 + $0xb7c] sm:$0xff]
    %v3171 = vld [vmem:[#allocation14 + $0xb84] sm:$0xff]
    %v3172 = vld [vmem:[#allocation14 + $0xb8c] sm:$0xff]
    %v3173 = vld [vmem:[#allocation14 + $0xb94] sm:$0xf]
    %v3174 = vld [vmem:[#allocation14 + $0xb98] sm:$0xff]
    %v3175 = vld [vmem:[#allocation14 + $0xba0] sm:$0xff]
    %v3176 = vld [vmem:[#allocation14 + $0xba8] sm:$0xff]
    %v3177 = vld [vmem:[#allocation14 + $0xbb0] sm:$0xf]
    %v3178 = vld [vmem:[#allocation14 + $0xbb4] sm:$0xff]
    %v3179 = vld [vmem:[#allocation14 + $0xbbc] sm:$0xff]
    %v3180 = vld [vmem:[#allocation14 + $0xbc4] sm:$0xff]
    %v3181 = vld [vmem:[#allocation14 + $0xbcc] sm:$0xf]
    %v3182 = vld [vmem:[#allocation14 + $0xbd0] sm:$0xff]
    %v3183 = vld [vmem:[#allocation14 + $0xbd8] sm:$0xff]
    %v3184 = vld [vmem:[#allocation14 + $0xbe0] sm:$0xff]
    %v3185 = vld [vmem:[#allocation14 + $0xbe8] sm:$0xf]
    %v3186 = vld [vmem:[#allocation14 + $0xbec] sm:$0xff]
    %v3187 = vld [vmem:[#allocation14 + $0xbf4] sm:$0xff]
    %v3188 = vld [vmem:[#allocation14 + $0xbfc] sm:$0xff]
    %v3189 = vld [vmem:[#allocation14 + $0xc04] sm:$0xf]
    %v3190 = vld [vmem:[#allocation14 + $0xc08] sm:$0xff]
    %v3191 = vld [vmem:[#allocation14 + $0xc10] sm:$0xff]
    %v3192 = vld [vmem:[#allocation14 + $0xc18] sm:$0xff]
    %v3193 = vld [vmem:[#allocation14 + $0xc20] sm:$0xf]
    %v3194 = vld [vmem:[#allocation14 + $0xc24] sm:$0xff]
    %v3195 = vld [vmem:[#allocation14 + $0xc2c] sm:$0xff]
    %v3196 = vld [vmem:[#allocation14 + $0xc34] sm:$0xff]
    %v3197 = vld [vmem:[#allocation14 + $0xc3c] sm:$0xf]
    %v3198 = vld [vmem:[#allocation14 + $0xc40] sm:$0xff]
    %v3199 = vld [vmem:[#allocation14 + $0xc48] sm:$0xff]
    %v3200 = vld [vmem:[#allocation14 + $0xc50] sm:$0xff]
    %v3201 = vld [vmem:[#allocation14 + $0xc58] sm:$0xf]
    %v3202 = vld [vmem:[#allocation14 + $0xc5c] sm:$0xff]
    %v3203 = vld [vmem:[#allocation14 + $0xc64] sm:$0xff]
    %v3204 = vld [vmem:[#allocation14 + $0xc6c] sm:$0xff]
    %v3205 = vld [vmem:[#allocation14 + $0xc74] sm:$0xf]
    %v3206 = vld [vmem:[#allocation14 + $0xc78] sm:$0xff]
    %v3207 = vld [vmem:[#allocation14 + $0xc80] sm:$0xff]
    %v3208 = vld [vmem:[#allocation14 + $0xc88] sm:$0xff]
    %v3209 = vld [vmem:[#allocation14 + $0xc90] sm:$0xf]
    %v3210 = vld [vmem:[#allocation14 + $0xc94] sm:$0xff]
    %v3211 = vld [vmem:[#allocation14 + $0xc9c] sm:$0xff]
    %v3212 = vld [vmem:[#allocation14 + $0xca4] sm:$0xff]
    %v3213 = vld [vmem:[#allocation14 + $0xcac] sm:$0xf]
    %v3214 = vld [vmem:[#allocation14 + $0xcb0] sm:$0xff]
    %v3215 = vld [vmem:[#allocation14 + $0xcb8] sm:$0xff]
    %v3216 = vld [vmem:[#allocation14 + $0xcc0] sm:$0xff]
    %v3217 = vld [vmem:[#allocation14 + $0xcc8] sm:$0xf]
    %v3218 = vld [vmem:[#allocation14 + $0xccc] sm:$0xff]
    %v3219 = vld [vmem:[#allocation14 + $0xcd4] sm:$0xff]
    %v3220 = vld [vmem:[#allocation14 + $0xcdc] sm:$0xff]
    %v3221 = vld [vmem:[#allocation14 + $0xce4] sm:$0xf]
    %v3222 = vld [vmem:[#allocation14 + $0xce8] sm:$0xff]
    %v3223 = vld [vmem:[#allocation14 + $0xcf0] sm:$0xff]
    %v3224 = vld [vmem:[#allocation14 + $0xcf8] sm:$0xff]
    %v3225 = vld [vmem:[#allocation14 + $0xd00] sm:$0xf]
    %v3226 = vld [vmem:[#allocation14 + $0xd04] sm:$0xff]
    %v3227 = vld [vmem:[#allocation14 + $0xd0c] sm:$0xff]
    %v3228 = vld [vmem:[#allocation14 + $0xd14] sm:$0xff]
    %v3229 = vld [vmem:[#allocation14 + $0xd1c] sm:$0xf]
    %v3230 = vld [vmem:[#allocation14 + $0xd20] sm:$0xff]
    %v3231 = vld [vmem:[#allocation14 + $0xd28] sm:$0xff]
    %v3232 = vld [vmem:[#allocation14 + $0xd30] sm:$0xff]
    %v3233 = vld [vmem:[#allocation14 + $0xd38] sm:$0xf]
    %v3234 = vld [vmem:[#allocation14 + $0xd3c] sm:$0xff]
    %v3235 = vld [vmem:[#allocation14 + $0xd44] sm:$0xff]
    %v3236 = vld [vmem:[#allocation14 + $0xd4c] sm:$0xff]
    %v3237 = vld [vmem:[#allocation14 + $0xd54] sm:$0xf]
    %v3238 = vld [vmem:[#allocation14 + $0xd58] sm:$0xff]
    %v3239 = vld [vmem:[#allocation14 + $0xd60] sm:$0xff]
    %v3240 = vld [vmem:[#allocation14 + $0xd68] sm:$0xff]
    %v3241 = vld [vmem:[#allocation14 + $0xd70] sm:$0xf]
    %v3242 = vld [vmem:[#allocation14 + $0xd74] sm:$0xff]
    %v3243 = vld [vmem:[#allocation14 + $0xd7c] sm:$0xff]
    %v3244 = vld [vmem:[#allocation14 + $0xd84] sm:$0xff]
    %v3245 = vld [vmem:[#allocation14 + $0xd8c] sm:$0xf]
    %v3246 = vld [vmem:[#allocation14 + $0xd90] sm:$0xff]
    %v3247 = vld [vmem:[#allocation14 + $0xd98] sm:$0xff]
    %v3248 = vld [vmem:[#allocation14 + $0xda0] sm:$0xff]
    %v3249 = vld [vmem:[#allocation14 + $0xda8] sm:$0xf]
    %v3250 = vld [vmem:[#allocation14 + $0xdac] sm:$0xff]
    %v3251 = vld [vmem:[#allocation14 + $0xdb4] sm:$0xff]
    %v3252 = vld [vmem:[#allocation14 + $0xdbc] sm:$0xff]
    %v3253 = vld [vmem:[#allocation14 + $0xdc4] sm:$0xf]
    %v3254 = vld [vmem:[#allocation14 + $0xdc8] sm:$0xff]
    %v3255 = vld [vmem:[#allocation14 + $0xdd0] sm:$0xff]
    %v3256 = vld [vmem:[#allocation14 + $0xdd8] sm:$0xff]
    %v3257 = vld [vmem:[#allocation14 + $0xde0] sm:$0xf]
    %v3258 = vld [vmem:[#allocation14 + $0xde4] sm:$0xff]
    %v3259 = vld [vmem:[#allocation14 + $0xdec] sm:$0xff]
    %v3260 = vld [vmem:[#allocation14 + $0xdf4] sm:$0xff]
    %v3261 = vld [vmem:[#allocation14 + $0xdfc] sm:$0xf]
    %v3262 = vld [vmem:[#allocation16] sm:$0xff]
    %v3264 = vperm.slane %v3262, 0
    %v3265 = vperm.slane %v3262, 1
    %v3266 = vperm.slane %v3262, 2
    %v3267 = vperm.slane %v3262, 3
    %v3268 = vperm.slane %v3262, 4
    %v3269 = vperm.slane %v3262, 5
    %v3270 = vperm.slane %v3262, 6
    %v3790 = vunpack.c.l.b16 %v2750
    %v3791 = vunpack.c.h.b16 %v2750
    %v3792 = vunpack.c.l.b16 %v2751
    %v3793 = vunpack.c.h.b16 %v2751
    %v3794 = vunpack.c.l.b16 %v2752
    %v3795 = vunpack.c.h.b16 %v2752
    %v3796 = vunpack.c.l.b16 %v2753
    %v3797 = vunpack.c.l.b16 %v2754
    %v3798 = vunpack.c.h.b16 %v2754
    %v3799 = vunpack.c.l.b16 %v2755
    %v3800 = vunpack.c.h.b16 %v2755
    %v3801 = vunpack.c.l.b16 %v2756
    %v3802 = vunpack.c.h.b16 %v2756
    %v3803 = vunpack.c.l.b16 %v2757
    %v3804 = vunpack.c.l.b16 %v2758
    %v3805 = vunpack.c.h.b16 %v2758
    %v3806 = vunpack.c.l.b16 %v2759
    %v3807 = vunpack.c.h.b16 %v2759
    %v3808 = vunpack.c.l.b16 %v2760
    %v3809 = vunpack.c.h.b16 %v2760
    %v3810 = vunpack.c.l.b16 %v2761
    %v3811 = vunpack.c.l.b16 %v2762
    %v3812 = vunpack.c.h.b16 %v2762
    %v3813 = vunpack.c.l.b16 %v2763
    %v3814 = vunpack.c.h.b16 %v2763
    %v3815 = vunpack.c.l.b16 %v2764
    %v3816 = vunpack.c.h.b16 %v2764
    %v3817 = vunpack.c.l.b16 %v2765
    %v3818 = vunpack.c.l.b16 %v2766
    %v3819 = vunpack.c.h.b16 %v2766
    %v3820 = vunpack.c.l.b16 %v2767
    %v3821 = vunpack.c.h.b16 %v2767
    %v3822 = vunpack.c.l.b16 %v2768
    %v3823 = vunpack.c.h.b16 %v2768
    %v3824 = vunpack.c.l.b16 %v2769
    %v3825 = vunpack.c.l.b16 %v2770
    %v3826 = vunpack.c.h.b16 %v2770
    %v3827 = vunpack.c.l.b16 %v2771
    %v3828 = vunpack.c.h.b16 %v2771
    %v3829 = vunpack.c.l.b16 %v2772
    %v3830 = vunpack.c.h.b16 %v2772
    %v3831 = vunpack.c.l.b16 %v2773
    %v3832 = vunpack.c.l.b16 %v2774
    %v3833 = vunpack.c.h.b16 %v2774
    %v3834 = vunpack.c.l.b16 %v2775
    %v3835 = vunpack.c.h.b16 %v2775
    %v3836 = vunpack.c.l.b16 %v2776
    %v3837 = vunpack.c.h.b16 %v2776
    %v3838 = vunpack.c.l.b16 %v2777
    %v3839 = vunpack.c.l.b16 %v2778
    %v3840 = vunpack.c.h.b16 %v2778
    %v3841 = vunpack.c.l.b16 %v2779
    %v3842 = vunpack.c.h.b16 %v2779
    %v3843 = vunpack.c.l.b16 %v2780
    %v3844 = vunpack.c.h.b16 %v2780
    %v3845 = vunpack.c.l.b16 %v2781
    %v3846 = vunpack.c.l.b16 %v2782
    %v3847 = vunpack.c.h.b16 %v2782
    %v3848 = vunpack.c.l.b16 %v2783
    %v3849 = vunpack.c.h.b16 %v2783
    %v3850 = vunpack.c.l.b16 %v2784
    %v3851 = vunpack.c.h.b16 %v2784
    %v3852 = vunpack.c.l.b16 %v2785
    %v3853 = vunpack.c.l.b16 %v2786
    %v3854 = vunpack.c.h.b16 %v2786
    %v3855 = vunpack.c.l.b16 %v2787
    %v3856 = vunpack.c.h.b16 %v2787
    %v3857 = vunpack.c.l.b16 %v2788
    %v3858 = vunpack.c.h.b16 %v2788
    %v3859 = vunpack.c.l.b16 %v2789
    %v3860 = vunpack.c.l.b16 %v2790
    %v3861 = vunpack.c.h.b16 %v2790
    %v3862 = vunpack.c.l.b16 %v2791
    %v3863 = vunpack.c.h.b16 %v2791
    %v3864 = vunpack.c.l.b16 %v2792
    %v3865 = vunpack.c.h.b16 %v2792
    %v3866 = vunpack.c.l.b16 %v2793
    %v3867 = vunpack.c.l.b16 %v2794
    %v3868 = vunpack.c.h.b16 %v2794
    %v3869 = vunpack.c.l.b16 %v2795
    %v3870 = vunpack.c.h.b16 %v2795
    %v3871 = vunpack.c.l.b16 %v2796
    %v3872 = vunpack.c.h.b16 %v2796
    %v3873 = vunpack.c.l.b16 %v2797
    %v3874 = vunpack.c.l.b16 %v2798
    %v3875 = vunpack.c.h.b16 %v2798
    %v3876 = vunpack.c.l.b16 %v2799
    %v3877 = vunpack.c.h.b16 %v2799
    %v3878 = vunpack.c.l.b16 %v2800
    %v3879 = vunpack.c.h.b16 %v2800
    %v3880 = vunpack.c.l.b16 %v2801
    %v3881 = vunpack.c.l.b16 %v2802
    %v3882 = vunpack.c.h.b16 %v2802
    %v3883 = vunpack.c.l.b16 %v2803
    %v3884 = vunpack.c.h.b16 %v2803
    %v3885 = vunpack.c.l.b16 %v2804
    %v3886 = vunpack.c.h.b16 %v2804
    %v3887 = vunpack.c.l.b16 %v2805
    %v3888 = vunpack.c.l.b16 %v2806
    %v3889 = vunpack.c.h.b16 %v2806
    %v3890 = vunpack.c.l.b16 %v2807
    %v3891 = vunpack.c.h.b16 %v2807
    %v3892 = vunpack.c.l.b16 %v2808
    %v3893 = vunpack.c.h.b16 %v2808
    %v3894 = vunpack.c.l.b16 %v2809
    %v3895 = vunpack.c.l.b16 %v2810
    %v3896 = vunpack.c.h.b16 %v2810
    %v3897 = vunpack.c.l.b16 %v2811
    %v3898 = vunpack.c.h.b16 %v2811
    %v3899 = vunpack.c.l.b16 %v2812
    %v3900 = vunpack.c.h.b16 %v2812
    %v3901 = vunpack.c.l.b16 %v2813
    %v3902 = vunpack.c.l.b16 %v2814
    %v3903 = vunpack.c.h.b16 %v2814
    %v3904 = vunpack.c.l.b16 %v2815
    %v3905 = vunpack.c.h.b16 %v2815
    %v3906 = vunpack.c.l.b16 %v2816
    %v3907 = vunpack.c.h.b16 %v2816
    %v3908 = vunpack.c.l.b16 %v2817
    %v3909 = vunpack.c.l.b16 %v2818
    %v3910 = vunpack.c.h.b16 %v2818
    %v3911 = vunpack.c.l.b16 %v2819
    %v3912 = vunpack.c.h.b16 %v2819
    %v3913 = vunpack.c.l.b16 %v2820
    %v3914 = vunpack.c.h.b16 %v2820
    %v3915 = vunpack.c.l.b16 %v2821
    %v3916 = vunpack.c.l.b16 %v2822
    %v3917 = vunpack.c.h.b16 %v2822
    %v3918 = vunpack.c.l.b16 %v2823
    %v3919 = vunpack.c.h.b16 %v2823
    %v3920 = vunpack.c.l.b16 %v2824
    %v3921 = vunpack.c.h.b16 %v2824
    %v3922 = vunpack.c.l.b16 %v2825
    %v3923 = vunpack.c.l.b16 %v2826
    %v3924 = vunpack.c.h.b16 %v2826
    %v3925 = vunpack.c.l.b16 %v2827
    %v3926 = vunpack.c.h.b16 %v2827
    %v3927 = vunpack.c.l.b16 %v2828
    %v3928 = vunpack.c.h.b16 %v2828
    %v3929 = vunpack.c.l.b16 %v2829
    %v3930 = vunpack.c.l.b16 %v2830
    %v3931 = vunpack.c.h.b16 %v2830
    %v3932 = vunpack.c.l.b16 %v2831
    %v3933 = vunpack.c.h.b16 %v2831
    %v3934 = vunpack.c.l.b16 %v2832
    %v3935 = vunpack.c.h.b16 %v2832
    %v3936 = vunpack.c.l.b16 %v2833
    %v3937 = vunpack.c.l.b16 %v2834
    %v3938 = vunpack.c.h.b16 %v2834
    %v3939 = vunpack.c.l.b16 %v2835
    %v3940 = vunpack.c.h.b16 %v2835
    %v3941 = vunpack.c.l.b16 %v2836
    %v3942 = vunpack.c.h.b16 %v2836
    %v3943 = vunpack.c.l.b16 %v2837
    %v3944 = vunpack.c.l.b16 %v2838
    %v3945 = vunpack.c.h.b16 %v2838
    %v3946 = vunpack.c.l.b16 %v2839
    %v3947 = vunpack.c.h.b16 %v2839
    %v3948 = vunpack.c.l.b16 %v2840
    %v3949 = vunpack.c.h.b16 %v2840
    %v3950 = vunpack.c.l.b16 %v2841
    %v3951 = vunpack.c.l.b16 %v2842
    %v3952 = vunpack.c.h.b16 %v2842
    %v3953 = vunpack.c.l.b16 %v2843
    %v3954 = vunpack.c.h.b16 %v2843
    %v3955 = vunpack.c.l.b16 %v2844
    %v3956 = vunpack.c.h.b16 %v2844
    %v3957 = vunpack.c.l.b16 %v2845
    %v3958 = vunpack.c.l.b16 %v2846
    %v3959 = vunpack.c.h.b16 %v2846
    %v3960 = vunpack.c.l.b16 %v2847
    %v3961 = vunpack.c.h.b16 %v2847
    %v3962 = vunpack.c.l.b16 %v2848
    %v3963 = vunpack.c.h.b16 %v2848
    %v3964 = vunpack.c.l.b16 %v2849
    %v3965 = vunpack.c.l.b16 %v2850
    %v3966 = vunpack.c.h.b16 %v2850
    %v3967 = vunpack.c.l.b16 %v2851
    %v3968 = vunpack.c.h.b16 %v2851
    %v3969 = vunpack.c.l.b16 %v2852
    %v3970 = vunpack.c.h.b16 %v2852
    %v3971 = vunpack.c.l.b16 %v2853
    %v3972 = vunpack.c.l.b16 %v2854
    %v3973 = vunpack.c.h.b16 %v2854
    %v3974 = vunpack.c.l.b16 %v2855
    %v3975 = vunpack.c.h.b16 %v2855
    %v3976 = vunpack.c.l.b16 %v2856
    %v3977 = vunpack.c.h.b16 %v2856
    %v3978 = vunpack.c.l.b16 %v2857
    %v3979 = vunpack.c.l.b16 %v2858
    %v3980 = vunpack.c.h.b16 %v2858
    %v3981 = vunpack.c.l.b16 %v2859
    %v3982 = vunpack.c.h.b16 %v2859
    %v3983 = vunpack.c.l.b16 %v2860
    %v3984 = vunpack.c.h.b16 %v2860
    %v3985 = vunpack.c.l.b16 %v2861
    %v3986 = vunpack.c.l.b16 %v2862
    %v3987 = vunpack.c.h.b16 %v2862
    %v3988 = vunpack.c.l.b16 %v2863
    %v3989 = vunpack.c.h.b16 %v2863
    %v3990 = vunpack.c.l.b16 %v2864
    %v3991 = vunpack.c.h.b16 %v2864
    %v3992 = vunpack.c.l.b16 %v2865
    %v3993 = vunpack.c.l.b16 %v2866
    %v3994 = vunpack.c.h.b16 %v2866
    %v3995 = vunpack.c.l.b16 %v2867
    %v3996 = vunpack.c.h.b16 %v2867
    %v3997 = vunpack.c.l.b16 %v2868
    %v3998 = vunpack.c.h.b16 %v2868
    %v3999 = vunpack.c.l.b16 %v2869
    %v4000 = vunpack.c.l.b16 %v2870
    %v4001 = vunpack.c.h.b16 %v2870
    %v4002 = vunpack.c.l.b16 %v2871
    %v4003 = vunpack.c.h.b16 %v2871
    %v4004 = vunpack.c.l.b16 %v2872
    %v4005 = vunpack.c.h.b16 %v2872
    %v4006 = vunpack.c.l.b16 %v2873
    %v4007 = vunpack.c.l.b16 %v2874
    %v4008 = vunpack.c.h.b16 %v2874
    %v4009 = vunpack.c.l.b16 %v2875
    %v4010 = vunpack.c.h.b16 %v2875
    %v4011 = vunpack.c.l.b16 %v2876
    %v4012 = vunpack.c.h.b16 %v2876
    %v4013 = vunpack.c.l.b16 %v2877
    %v4014 = vunpack.c.l.b16 %v2878
    %v4015 = vunpack.c.h.b16 %v2878
    %v4016 = vunpack.c.l.b16 %v2879
    %v4017 = vunpack.c.h.b16 %v2879
    %v4018 = vunpack.c.l.b16 %v2880
    %v4019 = vunpack.c.h.b16 %v2880
    %v4020 = vunpack.c.l.b16 %v2881
    %v4021 = vunpack.c.l.b16 %v2882
    %v4022 = vunpack.c.h.b16 %v2882
    %v4023 = vunpack.c.l.b16 %v2883
    %v4024 = vunpack.c.h.b16 %v2883
    %v4025 = vunpack.c.l.b16 %v2884
    %v4026 = vunpack.c.h.b16 %v2884
    %v4027 = vunpack.c.l.b16 %v2885
    %v4028 = vunpack.c.l.b16 %v2886
    %v4029 = vunpack.c.h.b16 %v2886
    %v4030 = vunpack.c.l.b16 %v2887
    %v4031 = vunpack.c.h.b16 %v2887
    %v4032 = vunpack.c.l.b16 %v2888
    %v4033 = vunpack.c.h.b16 %v2888
    %v4034 = vunpack.c.l.b16 %v2889
    %v4035 = vunpack.c.l.b16 %v2890
    %v4036 = vunpack.c.h.b16 %v2890
    %v4037 = vunpack.c.l.b16 %v2891
    %v4038 = vunpack.c.h.b16 %v2891
    %v4039 = vunpack.c.l.b16 %v2892
    %v4040 = vunpack.c.h.b16 %v2892
    %v4041 = vunpack.c.l.b16 %v2893
    %v4042 = vunpack.c.l.b16 %v2894
    %v4043 = vunpack.c.h.b16 %v2894
    %v4044 = vunpack.c.l.b16 %v2895
    %v4045 = vunpack.c.h.b16 %v2895
    %v4046 = vunpack.c.l.b16 %v2896
    %v4047 = vunpack.c.h.b16 %v2896
    %v4048 = vunpack.c.l.b16 %v2897
    %v4049 = vunpack.c.l.b16 %v2898
    %v4050 = vunpack.c.h.b16 %v2898
    %v4051 = vunpack.c.l.b16 %v2899
    %v4052 = vunpack.c.h.b16 %v2899
    %v4053 = vunpack.c.l.b16 %v2900
    %v4054 = vunpack.c.h.b16 %v2900
    %v4055 = vunpack.c.l.b16 %v2901
    %v4056 = vunpack.c.l.b16 %v2902
    %v4057 = vunpack.c.h.b16 %v2902
    %v4058 = vunpack.c.l.b16 %v2903
    %v4059 = vunpack.c.h.b16 %v2903
    %v4060 = vunpack.c.l.b16 %v2904
    %v4061 = vunpack.c.h.b16 %v2904
    %v4062 = vunpack.c.l.b16 %v2905
    %v4063 = vunpack.c.l.b16 %v2906
    %v4064 = vunpack.c.h.b16 %v2906
    %v4065 = vunpack.c.l.b16 %v2907
    %v4066 = vunpack.c.h.b16 %v2907
    %v4067 = vunpack.c.l.b16 %v2908
    %v4068 = vunpack.c.h.b16 %v2908
    %v4069 = vunpack.c.l.b16 %v2909
    %v4070 = vunpack.c.l.b16 %v2910
    %v4071 = vunpack.c.h.b16 %v2910
    %v4072 = vunpack.c.l.b16 %v2911
    %v4073 = vunpack.c.h.b16 %v2911
    %v4074 = vunpack.c.l.b16 %v2912
    %v4075 = vunpack.c.h.b16 %v2912
    %v4076 = vunpack.c.l.b16 %v2913
    %v4077 = vunpack.c.l.b16 %v2914
    %v4078 = vunpack.c.h.b16 %v2914
    %v4079 = vunpack.c.l.b16 %v2915
    %v4080 = vunpack.c.h.b16 %v2915
    %v4081 = vunpack.c.l.b16 %v2916
    %v4082 = vunpack.c.h.b16 %v2916
    %v4083 = vunpack.c.l.b16 %v2917
    %v4084 = vunpack.c.l.b16 %v2918
    %v4085 = vunpack.c.h.b16 %v2918
    %v4086 = vunpack.c.l.b16 %v2919
    %v4087 = vunpack.c.h.b16 %v2919
    %v4088 = vunpack.c.l.b16 %v2920
    %v4089 = vunpack.c.h.b16 %v2920
    %v4090 = vunpack.c.l.b16 %v2921
    %v4091 = vunpack.c.l.b16 %v2922
    %v4092 = vunpack.c.h.b16 %v2922
    %v4093 = vunpack.c.l.b16 %v2923
    %v4094 = vunpack.c.h.b16 %v2923
    %v4095 = vunpack.c.l.b16 %v2924
    %v4096 = vunpack.c.h.b16 %v2924
    %v4097 = vunpack.c.l.b16 %v2925
    %v4098 = vunpack.c.l.b16 %v2926
    %v4099 = vunpack.c.h.b16 %v2926
    %v4100 = vunpack.c.l.b16 %v2927
    %v4101 = vunpack.c.h.b16 %v2927
    %v4102 = vunpack.c.l.b16 %v2928
    %v4103 = vunpack.c.h.b16 %v2928
    %v4104 = vunpack.c.l.b16 %v2929
    %v4105 = vunpack.c.l.b16 %v2930
    %v4106 = vunpack.c.h.b16 %v2930
    %v4107 = vunpack.c.l.b16 %v2931
    %v4108 = vunpack.c.h.b16 %v2931
    %v4109 = vunpack.c.l.b16 %v2932
    %v4110 = vunpack.c.h.b16 %v2932
    %v4111 = vunpack.c.l.b16 %v2933
    %v4112 = vunpack.c.l.b16 %v2934
    %v4113 = vunpack.c.h.b16 %v2934
    %v4114 = vunpack.c.l.b16 %v2935
    %v4115 = vunpack.c.h.b16 %v2935
    %v4116 = vunpack.c.l.b16 %v2936
    %v4117 = vunpack.c.h.b16 %v2936
    %v4118 = vunpack.c.l.b16 %v2937
    %v4119 = vunpack.c.l.b16 %v2938
    %v4120 = vunpack.c.h.b16 %v2938
    %v4121 = vunpack.c.l.b16 %v2939
    %v4122 = vunpack.c.h.b16 %v2939
    %v4123 = vunpack.c.l.b16 %v2940
    %v4124 = vunpack.c.h.b16 %v2940
    %v4125 = vunpack.c.l.b16 %v2941
    %v4126 = vunpack.c.l.b16 %v2942
    %v4127 = vunpack.c.h.b16 %v2942
    %v4128 = vunpack.c.l.b16 %v2943
    %v4129 = vunpack.c.h.b16 %v2943
    %v4130 = vunpack.c.l.b16 %v2944
    %v4131 = vunpack.c.h.b16 %v2944
    %v4132 = vunpack.c.l.b16 %v2945
    %v4133 = vunpack.c.l.b16 %v2946
    %v4134 = vunpack.c.h.b16 %v2946
    %v4135 = vunpack.c.l.b16 %v2947
    %v4136 = vunpack.c.h.b16 %v2947
    %v4137 = vunpack.c.l.b16 %v2948
    %v4138 = vunpack.c.h.b16 %v2948
    %v4139 = vunpack.c.l.b16 %v2949
    %v4140 = vunpack.c.l.b16 %v2950
    %v4141 = vunpack.c.h.b16 %v2950
    %v4142 = vunpack.c.l.b16 %v2951
    %v4143 = vunpack.c.h.b16 %v2951
    %v4144 = vunpack.c.l.b16 %v2952
    %v4145 = vunpack.c.h.b16 %v2952
    %v4146 = vunpack.c.l.b16 %v2953
    %v4147 = vunpack.c.l.b16 %v2954
    %v4148 = vunpack.c.h.b16 %v2954
    %v4149 = vunpack.c.l.b16 %v2955
    %v4150 = vunpack.c.h.b16 %v2955
    %v4151 = vunpack.c.l.b16 %v2956
    %v4152 = vunpack.c.h.b16 %v2956
    %v4153 = vunpack.c.l.b16 %v2957
    %v4154 = vunpack.c.l.b16 %v2958
    %v4155 = vunpack.c.h.b16 %v2958
    %v4156 = vunpack.c.l.b16 %v2959
    %v4157 = vunpack.c.h.b16 %v2959
    %v4158 = vunpack.c.l.b16 %v2960
    %v4159 = vunpack.c.h.b16 %v2960
    %v4160 = vunpack.c.l.b16 %v2961
    %v4161 = vunpack.c.l.b16 %v2962
    %v4162 = vunpack.c.h.b16 %v2962
    %v4163 = vunpack.c.l.b16 %v2963
    %v4164 = vunpack.c.h.b16 %v2963
    %v4165 = vunpack.c.l.b16 %v2964
    %v4166 = vunpack.c.h.b16 %v2964
    %v4167 = vunpack.c.l.b16 %v2965
    %v4168 = vunpack.c.l.b16 %v2966
    %v4169 = vunpack.c.h.b16 %v2966
    %v4170 = vunpack.c.l.b16 %v2967
    %v4171 = vunpack.c.h.b16 %v2967
    %v4172 = vunpack.c.l.b16 %v2968
    %v4173 = vunpack.c.h.b16 %v2968
    %v4174 = vunpack.c.l.b16 %v2969
    %v4175 = vunpack.c.l.b16 %v2970
    %v4176 = vunpack.c.h.b16 %v2970
    %v4177 = vunpack.c.l.b16 %v2971
    %v4178 = vunpack.c.h.b16 %v2971
    %v4179 = vunpack.c.l.b16 %v2972
    %v4180 = vunpack.c.h.b16 %v2972
    %v4181 = vunpack.c.l.b16 %v2973
    %v4182 = vunpack.c.l.b16 %v2974
    %v4183 = vunpack.c.h.b16 %v2974
    %v4184 = vunpack.c.l.b16 %v2975
    %v4185 = vunpack.c.h.b16 %v2975
    %v4186 = vunpack.c.l.b16 %v2976
    %v4187 = vunpack.c.h.b16 %v2976
    %v4188 = vunpack.c.l.b16 %v2977
    %v4189 = vunpack.c.l.b16 %v2978
    %v4190 = vunpack.c.h.b16 %v2978
    %v4191 = vunpack.c.l.b16 %v2979
    %v4192 = vunpack.c.h.b16 %v2979
    %v4193 = vunpack.c.l.b16 %v2980
    %v4194 = vunpack.c.h.b16 %v2980
    %v4195 = vunpack.c.l.b16 %v2981
    %v4196 = vunpack.c.l.b16 %v2982
    %v4197 = vunpack.c.h.b16 %v2982
    %v4198 = vunpack.c.l.b16 %v2983
    %v4199 = vunpack.c.h.b16 %v2983
    %v4200 = vunpack.c.l.b16 %v2984
    %v4201 = vunpack.c.h.b16 %v2984
    %v4202 = vunpack.c.l.b16 %v2985
    %v4203 = vunpack.c.l.b16 %v2986
    %v4204 = vunpack.c.h.b16 %v2986
    %v4205 = vunpack.c.l.b16 %v2987
    %v4206 = vunpack.c.h.b16 %v2987
    %v4207 = vunpack.c.l.b16 %v2988
    %v4208 = vunpack.c.h.b16 %v2988
    %v4209 = vunpack.c.l.b16 %v2989
    %v4210 = vunpack.c.l.b16 %v2990
    %v4211 = vunpack.c.h.b16 %v2990
    %v4212 = vunpack.c.l.b16 %v2991
    %v4213 = vunpack.c.h.b16 %v2991
    %v4214 = vunpack.c.l.b16 %v2992
    %v4215 = vunpack.c.h.b16 %v2992
    %v4216 = vunpack.c.l.b16 %v2993
    %v4217 = vunpack.c.l.b16 %v2994
    %v4218 = vunpack.c.h.b16 %v2994
    %v4219 = vunpack.c.l.b16 %v2995
    %v4220 = vunpack.c.h.b16 %v2995
    %v4221 = vunpack.c.l.b16 %v2996
    %v4222 = vunpack.c.h.b16 %v2996
    %v4223 = vunpack.c.l.b16 %v2997
    %v4224 = vunpack.c.l.b16 %v2998
    %v4225 = vunpack.c.h.b16 %v2998
    %v4226 = vunpack.c.l.b16 %v2999
    %v4227 = vunpack.c.h.b16 %v2999
    %v4228 = vunpack.c.l.b16 %v3000
    %v4229 = vunpack.c.h.b16 %v3000
    %v4230 = vunpack.c.l.b16 %v3001
    %v4231 = vunpack.c.l.b16 %v3002
    %v4232 = vunpack.c.h.b16 %v3002
    %v4233 = vunpack.c.l.b16 %v3003
    %v4234 = vunpack.c.h.b16 %v3003
    %v4235 = vunpack.c.l.b16 %v3004
    %v4236 = vunpack.c.h.b16 %v3004
    %v4237 = vunpack.c.l.b16 %v3005
    %v4238 = vunpack.c.l.b16 %v3006
    %v4239 = vunpack.c.h.b16 %v3006
    %v4240 = vunpack.c.l.b16 %v3007
    %v4241 = vunpack.c.h.b16 %v3007
    %v4242 = vunpack.c.l.b16 %v3008
    %v4243 = vunpack.c.h.b16 %v3008
    %v4244 = vunpack.c.l.b16 %v3009
    %v4245 = vunpack.c.l.b16 %v3010
    %v4246 = vunpack.c.h.b16 %v3010
    %v4247 = vunpack.c.l.b16 %v3011
    %v4248 = vunpack.c.h.b16 %v3011
    %v4249 = vunpack.c.l.b16 %v3012
    %v4250 = vunpack.c.h.b16 %v3012
    %v4251 = vunpack.c.l.b16 %v3013
    %v4252 = vunpack.c.l.b16 %v3014
    %v4253 = vunpack.c.h.b16 %v3014
    %v4254 = vunpack.c.l.b16 %v3015
    %v4255 = vunpack.c.h.b16 %v3015
    %v4256 = vunpack.c.l.b16 %v3016
    %v4257 = vunpack.c.h.b16 %v3016
    %v4258 = vunpack.c.l.b16 %v3017
    %v4259 = vunpack.c.l.b16 %v3018
    %v4260 = vunpack.c.h.b16 %v3018
    %v4261 = vunpack.c.l.b16 %v3019
    %v4262 = vunpack.c.h.b16 %v3019
    %v4263 = vunpack.c.l.b16 %v3020
    %v4264 = vunpack.c.h.b16 %v3020
    %v4265 = vunpack.c.l.b16 %v3021
    %v4266 = vunpack.c.l.b16 %v3022
    %v4267 = vunpack.c.h.b16 %v3022
    %v4268 = vunpack.c.l.b16 %v3023
    %v4269 = vunpack.c.h.b16 %v3023
    %v4270 = vunpack.c.l.b16 %v3024
    %v4271 = vunpack.c.h.b16 %v3024
    %v4272 = vunpack.c.l.b16 %v3025
    %v4273 = vunpack.c.l.b16 %v3026
    %v4274 = vunpack.c.h.b16 %v3026
    %v4275 = vunpack.c.l.b16 %v3027
    %v4276 = vunpack.c.h.b16 %v3027
    %v4277 = vunpack.c.l.b16 %v3028
    %v4278 = vunpack.c.h.b16 %v3028
    %v4279 = vunpack.c.l.b16 %v3029
    %v4280 = vunpack.c.l.b16 %v3030
    %v4281 = vunpack.c.h.b16 %v3030
    %v4282 = vunpack.c.l.b16 %v3031
    %v4283 = vunpack.c.h.b16 %v3031
    %v4284 = vunpack.c.l.b16 %v3032
    %v4285 = vunpack.c.h.b16 %v3032
    %v4286 = vunpack.c.l.b16 %v3033
    %v4287 = vunpack.c.l.b16 %v3034
    %v4288 = vunpack.c.h.b16 %v3034
    %v4289 = vunpack.c.l.b16 %v3035
    %v4290 = vunpack.c.h.b16 %v3035
    %v4291 = vunpack.c.l.b16 %v3036
    %v4292 = vunpack.c.h.b16 %v3036
    %v4293 = vunpack.c.l.b16 %v3037
    %v4294 = vunpack.c.l.b16 %v3038
    %v4295 = vunpack.c.h.b16 %v3038
    %v4296 = vunpack.c.l.b16 %v3039
    %v4297 = vunpack.c.h.b16 %v3039
    %v4298 = vunpack.c.l.b16 %v3040
    %v4299 = vunpack.c.h.b16 %v3040
    %v4300 = vunpack.c.l.b16 %v3041
    %v4301 = vunpack.c.l.b16 %v3042
    %v4302 = vunpack.c.h.b16 %v3042
    %v4303 = vunpack.c.l.b16 %v3043
    %v4304 = vunpack.c.h.b16 %v3043
    %v4305 = vunpack.c.l.b16 %v3044
    %v4306 = vunpack.c.h.b16 %v3044
    %v4307 = vunpack.c.l.b16 %v3045
    %v4308 = vunpack.c.l.b16 %v3046
    %v4309 = vunpack.c.h.b16 %v3046
    %v4310 = vunpack.c.l.b16 %v3047
    %v4311 = vunpack.c.h.b16 %v3047
    %v4312 = vunpack.c.l.b16 %v3048
    %v4313 = vunpack.c.h.b16 %v3048
    %v4314 = vunpack.c.l.b16 %v3049
    %v4315 = vunpack.c.l.b16 %v3050
    %v4316 = vunpack.c.h.b16 %v3050
    %v4317 = vunpack.c.l.b16 %v3051
    %v4318 = vunpack.c.h.b16 %v3051
    %v4319 = vunpack.c.l.b16 %v3052
    %v4320 = vunpack.c.h.b16 %v3052
    %v4321 = vunpack.c.l.b16 %v3053
    %v4322 = vunpack.c.l.b16 %v3054
    %v4323 = vunpack.c.h.b16 %v3054
    %v4324 = vunpack.c.l.b16 %v3055
    %v4325 = vunpack.c.h.b16 %v3055
    %v4326 = vunpack.c.l.b16 %v3056
    %v4327 = vunpack.c.h.b16 %v3056
    %v4328 = vunpack.c.l.b16 %v3057
    %v4329 = vunpack.c.l.b16 %v3058
    %v4330 = vunpack.c.h.b16 %v3058
    %v4331 = vunpack.c.l.b16 %v3059
    %v4332 = vunpack.c.h.b16 %v3059
    %v4333 = vunpack.c.l.b16 %v3060
    %v4334 = vunpack.c.h.b16 %v3060
    %v4335 = vunpack.c.l.b16 %v3061
    %v4336 = vunpack.c.l.b16 %v3062
    %v4337 = vunpack.c.h.b16 %v3062
    %v4338 = vunpack.c.l.b16 %v3063
    %v4339 = vunpack.c.h.b16 %v3063
    %v4340 = vunpack.c.l.b16 %v3064
    %v4341 = vunpack.c.h.b16 %v3064
    %v4342 = vunpack.c.l.b16 %v3065
    %v4343 = vunpack.c.l.b16 %v3066
    %v4344 = vunpack.c.h.b16 %v3066
    %v4345 = vunpack.c.l.b16 %v3067
    %v4346 = vunpack.c.h.b16 %v3067
    %v4347 = vunpack.c.l.b16 %v3068
    %v4348 = vunpack.c.h.b16 %v3068
    %v4349 = vunpack.c.l.b16 %v3069
    %v4350 = vunpack.c.l.b16 %v3070
    %v4351 = vunpack.c.h.b16 %v3070
    %v4352 = vunpack.c.l.b16 %v3071
    %v4353 = vunpack.c.h.b16 %v3071
    %v4354 = vunpack.c.l.b16 %v3072
    %v4355 = vunpack.c.h.b16 %v3072
    %v4356 = vunpack.c.l.b16 %v3073
    %v4357 = vunpack.c.l.b16 %v3074
    %v4358 = vunpack.c.h.b16 %v3074
    %v4359 = vunpack.c.l.b16 %v3075
    %v4360 = vunpack.c.h.b16 %v3075
    %v4361 = vunpack.c.l.b16 %v3076
    %v4362 = vunpack.c.h.b16 %v3076
    %v4363 = vunpack.c.l.b16 %v3077
    %v4364 = vunpack.c.l.b16 %v3078
    %v4365 = vunpack.c.h.b16 %v3078
    %v4366 = vunpack.c.l.b16 %v3079
    %v4367 = vunpack.c.h.b16 %v3079
    %v4368 = vunpack.c.l.b16 %v3080
    %v4369 = vunpack.c.h.b16 %v3080
    %v4370 = vunpack.c.l.b16 %v3081
    %v4371 = vunpack.c.l.b16 %v3082
    %v4372 = vunpack.c.h.b16 %v3082
    %v4373 = vunpack.c.l.b16 %v3083
    %v4374 = vunpack.c.h.b16 %v3083
    %v4375 = vunpack.c.l.b16 %v3084
    %v4376 = vunpack.c.h.b16 %v3084
    %v4377 = vunpack.c.l.b16 %v3085
    %v4378 = vunpack.c.l.b16 %v3086
    %v4379 = vunpack.c.h.b16 %v3086
    %v4380 = vunpack.c.l.b16 %v3087
    %v4381 = vunpack.c.h.b16 %v3087
    %v4382 = vunpack.c.l.b16 %v3088
    %v4383 = vunpack.c.h.b16 %v3088
    %v4384 = vunpack.c.l.b16 %v3089
    %v4385 = vunpack.c.l.b16 %v3090
    %v4386 = vunpack.c.h.b16 %v3090
    %v4387 = vunpack.c.l.b16 %v3091
    %v4388 = vunpack.c.h.b16 %v3091
    %v4389 = vunpack.c.l.b16 %v3092
    %v4390 = vunpack.c.h.b16 %v3092
    %v4391 = vunpack.c.l.b16 %v3093
    %v4392 = vunpack.c.l.b16 %v3094
    %v4393 = vunpack.c.h.b16 %v3094
    %v4394 = vunpack.c.l.b16 %v3095
    %v4395 = vunpack.c.h.b16 %v3095
    %v4396 = vunpack.c.l.b16 %v3096
    %v4397 = vunpack.c.h.b16 %v3096
    %v4398 = vunpack.c.l.b16 %v3097
    %v4399 = vunpack.c.l.b16 %v3098
    %v4400 = vunpack.c.h.b16 %v3098
    %v4401 = vunpack.c.l.b16 %v3099
    %v4402 = vunpack.c.h.b16 %v3099
    %v4403 = vunpack.c.l.b16 %v3100
    %v4404 = vunpack.c.h.b16 %v3100
    %v4405 = vunpack.c.l.b16 %v3101
    %v4406 = vunpack.c.l.b16 %v3102
    %v4407 = vunpack.c.h.b16 %v3102
    %v4408 = vunpack.c.l.b16 %v3103
    %v4409 = vunpack.c.h.b16 %v3103
    %v4410 = vunpack.c.l.b16 %v3104
    %v4411 = vunpack.c.h.b16 %v3104
    %v4412 = vunpack.c.l.b16 %v3105
    %v4413 = vunpack.c.l.b16 %v3106
    %v4414 = vunpack.c.h.b16 %v3106
    %v4415 = vunpack.c.l.b16 %v3107
    %v4416 = vunpack.c.h.b16 %v3107
    %v4417 = vunpack.c.l.b16 %v3108
    %v4418 = vunpack.c.h.b16 %v3108
    %v4419 = vunpack.c.l.b16 %v3109
    %v4420 = vunpack.c.l.b16 %v3110
    %v4421 = vunpack.c.h.b16 %v3110
    %v4422 = vunpack.c.l.b16 %v3111
    %v4423 = vunpack.c.h.b16 %v3111
    %v4424 = vunpack.c.l.b16 %v3112
    %v4425 = vunpack.c.h.b16 %v3112
    %v4426 = vunpack.c.l.b16 %v3113
    %v4427 = vunpack.c.l.b16 %v3114
    %v4428 = vunpack.c.h.b16 %v3114
    %v4429 = vunpack.c.l.b16 %v3115
    %v4430 = vunpack.c.h.b16 %v3115
    %v4431 = vunpack.c.l.b16 %v3116
    %v4432 = vunpack.c.h.b16 %v3116
    %v4433 = vunpack.c.l.b16 %v3117
    %v4434 = vunpack.c.l.b16 %v3118
    %v4435 = vunpack.c.h.b16 %v3118
    %v4436 = vunpack.c.l.b16 %v3119
    %v4437 = vunpack.c.h.b16 %v3119
    %v4438 = vunpack.c.l.b16 %v3120
    %v4439 = vunpack.c.h.b16 %v3120
    %v4440 = vunpack.c.l.b16 %v3121
    %v4441 = vunpack.c.l.b16 %v3122
    %v4442 = vunpack.c.h.b16 %v3122
    %v4443 = vunpack.c.l.b16 %v3123
    %v4444 = vunpack.c.h.b16 %v3123
    %v4445 = vunpack.c.l.b16 %v3124
    %v4446 = vunpack.c.h.b16 %v3124
    %v4447 = vunpack.c.l.b16 %v3125
    %v4448 = vunpack.c.l.b16 %v3126
    %v4449 = vunpack.c.h.b16 %v3126
    %v4450 = vunpack.c.l.b16 %v3127
    %v4451 = vunpack.c.h.b16 %v3127
    %v4452 = vunpack.c.l.b16 %v3128
    %v4453 = vunpack.c.h.b16 %v3128
    %v4454 = vunpack.c.l.b16 %v3129
    %v4455 = vunpack.c.l.b16 %v3130
    %v4456 = vunpack.c.h.b16 %v3130
    %v4457 = vunpack.c.l.b16 %v3131
    %v4458 = vunpack.c.h.b16 %v3131
    %v4459 = vunpack.c.l.b16 %v3132
    %v4460 = vunpack.c.h.b16 %v3132
    %v4461 = vunpack.c.l.b16 %v3133
    %v4462 = vunpack.c.l.b16 %v3134
    %v4463 = vunpack.c.h.b16 %v3134
    %v4464 = vunpack.c.l.b16 %v3135
    %v4465 = vunpack.c.h.b16 %v3135
    %v4466 = vunpack.c.l.b16 %v3136
    %v4467 = vunpack.c.h.b16 %v3136
    %v4468 = vunpack.c.l.b16 %v3137
    %v4469 = vunpack.c.l.b16 %v3138
    %v4470 = vunpack.c.h.b16 %v3138
    %v4471 = vunpack.c.l.b16 %v3139
    %v4472 = vunpack.c.h.b16 %v3139
    %v4473 = vunpack.c.l.b16 %v3140
    %v4474 = vunpack.c.h.b16 %v3140
    %v4475 = vunpack.c.l.b16 %v3141
    %v4476 = vunpack.c.l.b16 %v3142
    %v4477 = vunpack.c.h.b16 %v3142
    %v4478 = vunpack.c.l.b16 %v3143
    %v4479 = vunpack.c.h.b16 %v3143
    %v4480 = vunpack.c.l.b16 %v3144
    %v4481 = vunpack.c.h.b16 %v3144
    %v4482 = vunpack.c.l.b16 %v3145
    %v4483 = vunpack.c.l.b16 %v3146
    %v4484 = vunpack.c.h.b16 %v3146
    %v4485 = vunpack.c.l.b16 %v3147
    %v4486 = vunpack.c.h.b16 %v3147
    %v4487 = vunpack.c.l.b16 %v3148
    %v4488 = vunpack.c.h.b16 %v3148
    %v4489 = vunpack.c.l.b16 %v3149
    %v4490 = vunpack.c.l.b16 %v3150
    %v4491 = vunpack.c.h.b16 %v3150
    %v4492 = vunpack.c.l.b16 %v3151
    %v4493 = vunpack.c.h.b16 %v3151
    %v4494 = vunpack.c.l.b16 %v3152
    %v4495 = vunpack.c.h.b16 %v3152
    %v4496 = vunpack.c.l.b16 %v3153
    %v4497 = vunpack.c.l.b16 %v3154
    %v4498 = vunpack.c.h.b16 %v3154
    %v4499 = vunpack.c.l.b16 %v3155
    %v4500 = vunpack.c.h.b16 %v3155
    %v4501 = vunpack.c.l.b16 %v3156
    %v4502 = vunpack.c.h.b16 %v3156
    %v4503 = vunpack.c.l.b16 %v3157
    %v4504 = vunpack.c.l.b16 %v3158
    %v4505 = vunpack.c.h.b16 %v3158
    %v4506 = vunpack.c.l.b16 %v3159
    %v4507 = vunpack.c.h.b16 %v3159
    %v4508 = vunpack.c.l.b16 %v3160
    %v4509 = vunpack.c.h.b16 %v3160
    %v4510 = vunpack.c.l.b16 %v3161
    %v4511 = vunpack.c.l.b16 %v3162
    %v4512 = vunpack.c.h.b16 %v3162
    %v4513 = vunpack.c.l.b16 %v3163
    %v4514 = vunpack.c.h.b16 %v3163
    %v4515 = vunpack.c.l.b16 %v3164
    %v4516 = vunpack.c.h.b16 %v3164
    %v4517 = vunpack.c.l.b16 %v3165
    %v4518 = vunpack.c.l.b16 %v3166
    %v4519 = vunpack.c.h.b16 %v3166
    %v4520 = vunpack.c.l.b16 %v3167
    %v4521 = vunpack.c.h.b16 %v3167
    %v4522 = vunpack.c.l.b16 %v3168
    %v4523 = vunpack.c.h.b16 %v3168
    %v4524 = vunpack.c.l.b16 %v3169
    %v4525 = vunpack.c.l.b16 %v3170
    %v4526 = vunpack.c.h.b16 %v3170
    %v4527 = vunpack.c.l.b16 %v3171
    %v4528 = vunpack.c.h.b16 %v3171
    %v4529 = vunpack.c.l.b16 %v3172
    %v4530 = vunpack.c.h.b16 %v3172
    %v4531 = vunpack.c.l.b16 %v3173
    %v4532 = vunpack.c.l.b16 %v3174
    %v4533 = vunpack.c.h.b16 %v3174
    %v4534 = vunpack.c.l.b16 %v3175
    %v4535 = vunpack.c.h.b16 %v3175
    %v4536 = vunpack.c.l.b16 %v3176
    %v4537 = vunpack.c.h.b16 %v3176
    %v4538 = vunpack.c.l.b16 %v3177
    %v4539 = vunpack.c.l.b16 %v3178
    %v4540 = vunpack.c.h.b16 %v3178
    %v4541 = vunpack.c.l.b16 %v3179
    %v4542 = vunpack.c.h.b16 %v3179
    %v4543 = vunpack.c.l.b16 %v3180
    %v4544 = vunpack.c.h.b16 %v3180
    %v4545 = vunpack.c.l.b16 %v3181
    %v4546 = vunpack.c.l.b16 %v3182
    %v4547 = vunpack.c.h.b16 %v3182
    %v4548 = vunpack.c.l.b16 %v3183
    %v4549 = vunpack.c.h.b16 %v3183
    %v4550 = vunpack.c.l.b16 %v3184
    %v4551 = vunpack.c.h.b16 %v3184
    %v4552 = vunpack.c.l.b16 %v3185
    %v4553 = vunpack.c.l.b16 %v3186
    %v4554 = vunpack.c.h.b16 %v3186
    %v4555 = vunpack.c.l.b16 %v3187
    %v4556 = vunpack.c.h.b16 %v3187
    %v4557 = vunpack.c.l.b16 %v3188
    %v4558 = vunpack.c.h.b16 %v3188
    %v4559 = vunpack.c.l.b16 %v3189
    %v4560 = vunpack.c.l.b16 %v3190
    %v4561 = vunpack.c.h.b16 %v3190
    %v4562 = vunpack.c.l.b16 %v3191
    %v4563 = vunpack.c.h.b16 %v3191
    %v4564 = vunpack.c.l.b16 %v3192
    %v4565 = vunpack.c.h.b16 %v3192
    %v4566 = vunpack.c.l.b16 %v3193
    %v4567 = vunpack.c.l.b16 %v3194
    %v4568 = vunpack.c.h.b16 %v3194
    %v4569 = vunpack.c.l.b16 %v3195
    %v4570 = vunpack.c.h.b16 %v3195
    %v4571 = vunpack.c.l.b16 %v3196
    %v4572 = vunpack.c.h.b16 %v3196
    %v4573 = vunpack.c.l.b16 %v3197
    %v4574 = vunpack.c.l.b16 %v3198
    %v4575 = vunpack.c.h.b16 %v3198
    %v4576 = vunpack.c.l.b16 %v3199
    %v4577 = vunpack.c.h.b16 %v3199
    %v4578 = vunpack.c.l.b16 %v3200
    %v4579 = vunpack.c.h.b16 %v3200
    %v4580 = vunpack.c.l.b16 %v3201
    %v4581 = vunpack.c.l.b16 %v3202
    %v4582 = vunpack.c.h.b16 %v3202
    %v4583 = vunpack.c.l.b16 %v3203
    %v4584 = vunpack.c.h.b16 %v3203
    %v4585 = vunpack.c.l.b16 %v3204
    %v4586 = vunpack.c.h.b16 %v3204
    %v4587 = vunpack.c.l.b16 %v3205
    %v4588 = vunpack.c.l.b16 %v3206
    %v4589 = vunpack.c.h.b16 %v3206
    %v4590 = vunpack.c.l.b16 %v3207
    %v4591 = vunpack.c.h.b16 %v3207
    %v4592 = vunpack.c.l.b16 %v3208
    %v4593 = vunpack.c.h.b16 %v3208
    %v4594 = vunpack.c.l.b16 %v3209
    %v4595 = vunpack.c.l.b16 %v3210
    %v4596 = vunpack.c.h.b16 %v3210
    %v4597 = vunpack.c.l.b16 %v3211
    %v4598 = vunpack.c.h.b16 %v3211
    %v4599 = vunpack.c.l.b16 %v3212
    %v4600 = vunpack.c.h.b16 %v3212
    %v4601 = vunpack.c.l.b16 %v3213
    %v4602 = vunpack.c.l.b16 %v3214
    %v4603 = vunpack.c.h.b16 %v3214
    %v4604 = vunpack.c.l.b16 %v3215
    %v4605 = vunpack.c.h.b16 %v3215
    %v4606 = vunpack.c.l.b16 %v3216
    %v4607 = vunpack.c.h.b16 %v3216
    %v4608 = vunpack.c.l.b16 %v3217
    %v4609 = vunpack.c.l.b16 %v3218
    %v4610 = vunpack.c.h.b16 %v3218
    %v4611 = vunpack.c.l.b16 %v3219
    %v4612 = vunpack.c.h.b16 %v3219
    %v4613 = vunpack.c.l.b16 %v3220
    %v4614 = vunpack.c.h.b16 %v3220
    %v4615 = vunpack.c.l.b16 %v3221
    %v4616 = vunpack.c.l.b16 %v3222
    %v4617 = vunpack.c.h.b16 %v3222
    %v4618 = vunpack.c.l.b16 %v3223
    %v4619 = vunpack.c.h.b16 %v3223
    %v4620 = vunpack.c.l.b16 %v3224
    %v4621 = vunpack.c.h.b16 %v3224
    %v4622 = vunpack.c.l.b16 %v3225
    %v4623 = vunpack.c.l.b16 %v3226
    %v4624 = vunpack.c.h.b16 %v3226
    %v4625 = vunpack.c.l.b16 %v3227
    %v4626 = vunpack.c.h.b16 %v3227
    %v4627 = vunpack.c.l.b16 %v3228
    %v4628 = vunpack.c.h.b16 %v3228
    %v4629 = vunpack.c.l.b16 %v3229
    %v4630 = vunpack.c.l.b16 %v3230
    %v4631 = vunpack.c.h.b16 %v3230
    %v4632 = vunpack.c.l.b16 %v3231
    %v4633 = vunpack.c.h.b16 %v3231
    %v4634 = vunpack.c.l.b16 %v3232
    %v4635 = vunpack.c.h.b16 %v3232
    %v4636 = vunpack.c.l.b16 %v3233
    %v4637 = vunpack.c.l.b16 %v3234
    %v4638 = vunpack.c.h.b16 %v3234
    %v4639 = vunpack.c.l.b16 %v3235
    %v4640 = vunpack.c.h.b16 %v3235
    %v4641 = vunpack.c.l.b16 %v3236
    %v4642 = vunpack.c.h.b16 %v3236
    %v4643 = vunpack.c.l.b16 %v3237
    %v4644 = vunpack.c.l.b16 %v3238
    %v4645 = vunpack.c.h.b16 %v3238
    %v4646 = vunpack.c.l.b16 %v3239
    %v4647 = vunpack.c.h.b16 %v3239
    %v4648 = vunpack.c.l.b16 %v3240
    %v4649 = vunpack.c.h.b16 %v3240
    %v4650 = vunpack.c.l.b16 %v3241
    %v4651 = vunpack.c.l.b16 %v3242
    %v4652 = vunpack.c.h.b16 %v3242
    %v4653 = vunpack.c.l.b16 %v3243
    %v4654 = vunpack.c.h.b16 %v3243
    %v4655 = vunpack.c.l.b16 %v3244
    %v4656 = vunpack.c.h.b16 %v3244
    %v4657 = vunpack.c.l.b16 %v3245
    %v4658 = vunpack.c.l.b16 %v3246
    %v4659 = vunpack.c.h.b16 %v3246
    %v4660 = vunpack.c.l.b16 %v3247
    %v4661 = vunpack.c.h.b16 %v3247
    %v4662 = vunpack.c.l.b16 %v3248
    %v4663 = vunpack.c.h.b16 %v3248
    %v4664 = vunpack.c.l.b16 %v3249
    %v4665 = vunpack.c.l.b16 %v3250
    %v4666 = vunpack.c.h.b16 %v3250
    %v4667 = vunpack.c.l.b16 %v3251
    %v4668 = vunpack.c.h.b16 %v3251
    %v4669 = vunpack.c.l.b16 %v3252
    %v4670 = vunpack.c.h.b16 %v3252
    %v4671 = vunpack.c.l.b16 %v3253
    %v4672 = vunpack.c.l.b16 %v3254
    %v4673 = vunpack.c.h.b16 %v3254
    %v4674 = vunpack.c.l.b16 %v3255
    %v4675 = vunpack.c.h.b16 %v3255
    %v4676 = vunpack.c.l.b16 %v3256
    %v4677 = vunpack.c.h.b16 %v3256
    %v4678 = vunpack.c.l.b16 %v3257
    %v4679 = vunpack.c.l.b16 %v3258
    %v4680 = vunpack.c.h.b16 %v3258
    %v4681 = vunpack.c.l.b16 %v3259
    %v4682 = vunpack.c.h.b16 %v3259
    %v4683 = vunpack.c.l.b16 %v3260
    %v4684 = vunpack.c.h.b16 %v3260
    %v4685 = vunpack.c.l.b16 %v3261
    %v4686 = vpack.c.b16 %v3797, %v3790
    %v4687 = vpack.c.b16 %v3798, %v3791
    %v4688 = vpack.c.b16 %v3799, %v3792
    %v4689 = vpack.c.b16 %v3800, %v3793
    %v4690 = vpack.c.b16 %v3801, %v3794
    %v4691 = vpack.c.b16 %v3802, %v3795
    %v4692 = vpack.c.b16 %v3803, %v3796
    %v4693 = vpack.c.b16 %v3811, %v3804
    %v4694 = vpack.c.b16 %v3812, %v3805
    %v4695 = vpack.c.b16 %v3813, %v3806
    %v4696 = vpack.c.b16 %v3814, %v3807
    %v4697 = vpack.c.b16 %v3815, %v3808
    %v4698 = vpack.c.b16 %v3816, %v3809
    %v4699 = vpack.c.b16 %v3817, %v3810
    %v4700 = vpack.c.b16 %v3825, %v3818
    %v4701 = vpack.c.b16 %v3826, %v3819
    %v4702 = vpack.c.b16 %v3827, %v3820
    %v4703 = vpack.c.b16 %v3828, %v3821
    %v4704 = vpack.c.b16 %v3829, %v3822
    %v4705 = vpack.c.b16 %v3830, %v3823
    %v4706 = vpack.c.b16 %v3831, %v3824
    %v4707 = vpack.c.b16 %v3839, %v3832
    %v4708 = vpack.c.b16 %v3840, %v3833
    %v4709 = vpack.c.b16 %v3841, %v3834
    %v4710 = vpack.c.b16 %v3842, %v3835
    %v4711 = vpack.c.b16 %v3843, %v3836
    %v4712 = vpack.c.b16 %v3844, %v3837
    %v4713 = vpack.c.b16 %v3845, %v3838
    %v4714 = vpack.c.b16 %v3853, %v3846
    %v4715 = vpack.c.b16 %v3854, %v3847
    %v4716 = vpack.c.b16 %v3855, %v3848
    %v4717 = vpack.c.b16 %v3856, %v3849
    %v4718 = vpack.c.b16 %v3857, %v3850
    %v4719 = vpack.c.b16 %v3858, %v3851
    %v4720 = vpack.c.b16 %v3859, %v3852
    %v4721 = vpack.c.b16 %v3867, %v3860
    %v4722 = vpack.c.b16 %v3868, %v3861
    %v4723 = vpack.c.b16 %v3869, %v3862
    %v4724 = vpack.c.b16 %v3870, %v3863
    %v4725 = vpack.c.b16 %v3871, %v3864
    %v4726 = vpack.c.b16 %v3872, %v3865
    %v4727 = vpack.c.b16 %v3873, %v3866
    %v4728 = vpack.c.b16 %v3881, %v3874
    %v4729 = vpack.c.b16 %v3882, %v3875
    %v4730 = vpack.c.b16 %v3883, %v3876
    %v4731 = vpack.c.b16 %v3884, %v3877
    %v4732 = vpack.c.b16 %v3885, %v3878
    %v4733 = vpack.c.b16 %v3886, %v3879
    %v4734 = vpack.c.b16 %v3887, %v3880
    %v4735 = vpack.c.b16 %v3895, %v3888
    %v4736 = vpack.c.b16 %v3896, %v3889
    %v4737 = vpack.c.b16 %v3897, %v3890
    %v4738 = vpack.c.b16 %v3898, %v3891
    %v4739 = vpack.c.b16 %v3899, %v3892
    %v4740 = vpack.c.b16 %v3900, %v3893
    %v4741 = vpack.c.b16 %v3901, %v3894
    %v4742 = vpack.c.b16 %v3909, %v3902
    %v4743 = vpack.c.b16 %v3910, %v3903
    %v4744 = vpack.c.b16 %v3911, %v3904
    %v4745 = vpack.c.b16 %v3912, %v3905
    %v4746 = vpack.c.b16 %v3913, %v3906
    %v4747 = vpack.c.b16 %v3914, %v3907
    %v4748 = vpack.c.b16 %v3915, %v3908
    %v4749 = vpack.c.b16 %v3923, %v3916
    %v4750 = vpack.c.b16 %v3924, %v3917
    %v4751 = vpack.c.b16 %v3925, %v3918
    %v4752 = vpack.c.b16 %v3926, %v3919
    %v4753 = vpack.c.b16 %v3927, %v3920
    %v4754 = vpack.c.b16 %v3928, %v3921
    %v4755 = vpack.c.b16 %v3929, %v3922
    %v4756 = vpack.c.b16 %v3937, %v3930
    %v4757 = vpack.c.b16 %v3938, %v3931
    %v4758 = vpack.c.b16 %v3939, %v3932
    %v4759 = vpack.c.b16 %v3940, %v3933
    %v4760 = vpack.c.b16 %v3941, %v3934
    %v4761 = vpack.c.b16 %v3942, %v3935
    %v4762 = vpack.c.b16 %v3943, %v3936
    %v4763 = vpack.c.b16 %v3951, %v3944
    %v4764 = vpack.c.b16 %v3952, %v3945
    %v4765 = vpack.c.b16 %v3953, %v3946
    %v4766 = vpack.c.b16 %v3954, %v3947
    %v4767 = vpack.c.b16 %v3955, %v3948
    %v4768 = vpack.c.b16 %v3956, %v3949
    %v4769 = vpack.c.b16 %v3957, %v3950
    %v4770 = vpack.c.b16 %v3965, %v3958
    %v4771 = vpack.c.b16 %v3966, %v3959
    %v4772 = vpack.c.b16 %v3967, %v3960
    %v4773 = vpack.c.b16 %v3968, %v3961
    %v4774 = vpack.c.b16 %v3969, %v3962
    %v4775 = vpack.c.b16 %v3970, %v3963
    %v4776 = vpack.c.b16 %v3971, %v3964
    %v4777 = vpack.c.b16 %v3979, %v3972
    %v4778 = vpack.c.b16 %v3980, %v3973
    %v4779 = vpack.c.b16 %v3981, %v3974
    %v4780 = vpack.c.b16 %v3982, %v3975
    %v4781 = vpack.c.b16 %v3983, %v3976
    %v4782 = vpack.c.b16 %v3984, %v3977
    %v4783 = vpack.c.b16 %v3985, %v3978
    %v4784 = vpack.c.b16 %v3993, %v3986
    %v4785 = vpack.c.b16 %v3994, %v3987
    %v4786 = vpack.c.b16 %v3995, %v3988
    %v4787 = vpack.c.b16 %v3996, %v3989
    %v4788 = vpack.c.b16 %v3997, %v3990
    %v4789 = vpack.c.b16 %v3998, %v3991
    %v4790 = vpack.c.b16 %v3999, %v3992
    %v4791 = vpack.c.b16 %v4007, %v4000
    %v4792 = vpack.c.b16 %v4008, %v4001
    %v4793 = vpack.c.b16 %v4009, %v4002
    %v4794 = vpack.c.b16 %v4010, %v4003
    %v4795 = vpack.c.b16 %v4011, %v4004
    %v4796 = vpack.c.b16 %v4012, %v4005
    %v4797 = vpack.c.b16 %v4013, %v4006
    %v4798 = vpack.c.b16 %v4021, %v4014
    %v4799 = vpack.c.b16 %v4022, %v4015
    %v4800 = vpack.c.b16 %v4023, %v4016
    %v4801 = vpack.c.b16 %v4024, %v4017
    %v4802 = vpack.c.b16 %v4025, %v4018
    %v4803 = vpack.c.b16 %v4026, %v4019
    %v4804 = vpack.c.b16 %v4027, %v4020
    %v4805 = vpack.c.b16 %v4035, %v4028
    %v4806 = vpack.c.b16 %v4036, %v4029
    %v4807 = vpack.c.b16 %v4037, %v4030
    %v4808 = vpack.c.b16 %v4038, %v4031
    %v4809 = vpack.c.b16 %v4039, %v4032
    %v4810 = vpack.c.b16 %v4040, %v4033
    %v4811 = vpack.c.b16 %v4041, %v4034
    %v4812 = vpack.c.b16 %v4049, %v4042
    %v4813 = vpack.c.b16 %v4050, %v4043
    %v4814 = vpack.c.b16 %v4051, %v4044
    %v4815 = vpack.c.b16 %v4052, %v4045
    %v4816 = vpack.c.b16 %v4053, %v4046
    %v4817 = vpack.c.b16 %v4054, %v4047
    %v4818 = vpack.c.b16 %v4055, %v4048
    %v4819 = vpack.c.b16 %v4063, %v4056
    %v4820 = vpack.c.b16 %v4064, %v4057
    %v4821 = vpack.c.b16 %v4065, %v4058
    %v4822 = vpack.c.b16 %v4066, %v4059
    %v4823 = vpack.c.b16 %v4067, %v4060
    %v4824 = vpack.c.b16 %v4068, %v4061
    %v4825 = vpack.c.b16 %v4069, %v4062
    %v4826 = vpack.c.b16 %v4077, %v4070
    %v4827 = vpack.c.b16 %v4078, %v4071
    %v4828 = vpack.c.b16 %v4079, %v4072
    %v4829 = vpack.c.b16 %v4080, %v4073
    %v4830 = vpack.c.b16 %v4081, %v4074
    %v4831 = vpack.c.b16 %v4082, %v4075
    %v4832 = vpack.c.b16 %v4083, %v4076
    %v4833 = vpack.c.b16 %v4091, %v4084
    %v4834 = vpack.c.b16 %v4092, %v4085
    %v4835 = vpack.c.b16 %v4093, %v4086
    %v4836 = vpack.c.b16 %v4094, %v4087
    %v4837 = vpack.c.b16 %v4095, %v4088
    %v4838 = vpack.c.b16 %v4096, %v4089
    %v4839 = vpack.c.b16 %v4097, %v4090
    %v4840 = vpack.c.b16 %v4105, %v4098
    %v4841 = vpack.c.b16 %v4106, %v4099
    %v4842 = vpack.c.b16 %v4107, %v4100
    %v4843 = vpack.c.b16 %v4108, %v4101
    %v4844 = vpack.c.b16 %v4109, %v4102
    %v4845 = vpack.c.b16 %v4110, %v4103
    %v4846 = vpack.c.b16 %v4111, %v4104
    %v4847 = vpack.c.b16 %v4119, %v4112
    %v4848 = vpack.c.b16 %v4120, %v4113
    %v4849 = vpack.c.b16 %v4121, %v4114
    %v4850 = vpack.c.b16 %v4122, %v4115
    %v4851 = vpack.c.b16 %v4123, %v4116
    %v4852 = vpack.c.b16 %v4124, %v4117
    %v4853 = vpack.c.b16 %v4125, %v4118
    %v4854 = vpack.c.b16 %v4133, %v4126
    %v4855 = vpack.c.b16 %v4134, %v4127
    %v4856 = vpack.c.b16 %v4135, %v4128
    %v4857 = vpack.c.b16 %v4136, %v4129
    %v4858 = vpack.c.b16 %v4137, %v4130
    %v4859 = vpack.c.b16 %v4138, %v4131
    %v4860 = vpack.c.b16 %v4139, %v4132
    %v4861 = vpack.c.b16 %v4147, %v4140
    %v4862 = vpack.c.b16 %v4148, %v4141
    %v4863 = vpack.c.b16 %v4149, %v4142
    %v4864 = vpack.c.b16 %v4150, %v4143
    %v4865 = vpack.c.b16 %v4151, %v4144
    %v4866 = vpack.c.b16 %v4152, %v4145
    %v4867 = vpack.c.b16 %v4153, %v4146
    %v4868 = vpack.c.b16 %v4161, %v4154
    %v4869 = vpack.c.b16 %v4162, %v4155
    %v4870 = vpack.c.b16 %v4163, %v4156
    %v4871 = vpack.c.b16 %v4164, %v4157
    %v4872 = vpack.c.b16 %v4165, %v4158
    %v4873 = vpack.c.b16 %v4166, %v4159
    %v4874 = vpack.c.b16 %v4167, %v4160
    %v4875 = vpack.c.b16 %v4175, %v4168
    %v4876 = vpack.c.b16 %v4176, %v4169
    %v4877 = vpack.c.b16 %v4177, %v4170
    %v4878 = vpack.c.b16 %v4178, %v4171
    %v4879 = vpack.c.b16 %v4179, %v4172
    %v4880 = vpack.c.b16 %v4180, %v4173
    %v4881 = vpack.c.b16 %v4181, %v4174
    %v4882 = vpack.c.b16 %v4189, %v4182
    %v4883 = vpack.c.b16 %v4190, %v4183
    %v4884 = vpack.c.b16 %v4191, %v4184
    %v4885 = vpack.c.b16 %v4192, %v4185
    %v4886 = vpack.c.b16 %v4193, %v4186
    %v4887 = vpack.c.b16 %v4194, %v4187
    %v4888 = vpack.c.b16 %v4195, %v4188
    %v4889 = vpack.c.b16 %v4203, %v4196
    %v4890 = vpack.c.b16 %v4204, %v4197
    %v4891 = vpack.c.b16 %v4205, %v4198
    %v4892 = vpack.c.b16 %v4206, %v4199
    %v4893 = vpack.c.b16 %v4207, %v4200
    %v4894 = vpack.c.b16 %v4208, %v4201
    %v4895 = vpack.c.b16 %v4209, %v4202
    %v4896 = vpack.c.b16 %v4217, %v4210
    %v4897 = vpack.c.b16 %v4218, %v4211
    %v4898 = vpack.c.b16 %v4219, %v4212
    %v4899 = vpack.c.b16 %v4220, %v4213
    %v4900 = vpack.c.b16 %v4221, %v4214
    %v4901 = vpack.c.b16 %v4222, %v4215
    %v4902 = vpack.c.b16 %v4223, %v4216
    %v4903 = vpack.c.b16 %v4231, %v4224
    %v4904 = vpack.c.b16 %v4232, %v4225
    %v4905 = vpack.c.b16 %v4233, %v4226
    %v4906 = vpack.c.b16 %v4234, %v4227
    %v4907 = vpack.c.b16 %v4235, %v4228
    %v4908 = vpack.c.b16 %v4236, %v4229
    %v4909 = vpack.c.b16 %v4237, %v4230
    %v4910 = vpack.c.b16 %v4245, %v4238
    %v4911 = vpack.c.b16 %v4246, %v4239
    %v4912 = vpack.c.b16 %v4247, %v4240
    %v4913 = vpack.c.b16 %v4248, %v4241
    %v4914 = vpack.c.b16 %v4249, %v4242
    %v4915 = vpack.c.b16 %v4250, %v4243
    %v4916 = vpack.c.b16 %v4251, %v4244
    %v4917 = vpack.c.b16 %v4259, %v4252
    %v4918 = vpack.c.b16 %v4260, %v4253
    %v4919 = vpack.c.b16 %v4261, %v4254
    %v4920 = vpack.c.b16 %v4262, %v4255
    %v4921 = vpack.c.b16 %v4263, %v4256
    %v4922 = vpack.c.b16 %v4264, %v4257
    %v4923 = vpack.c.b16 %v4265, %v4258
    %v4924 = vpack.c.b16 %v4273, %v4266
    %v4925 = vpack.c.b16 %v4274, %v4267
    %v4926 = vpack.c.b16 %v4275, %v4268
    %v4927 = vpack.c.b16 %v4276, %v4269
    %v4928 = vpack.c.b16 %v4277, %v4270
    %v4929 = vpack.c.b16 %v4278, %v4271
    %v4930 = vpack.c.b16 %v4279, %v4272
    %v4931 = vpack.c.b16 %v4287, %v4280
    %v4932 = vpack.c.b16 %v4288, %v4281
    %v4933 = vpack.c.b16 %v4289, %v4282
    %v4934 = vpack.c.b16 %v4290, %v4283
    %v4935 = vpack.c.b16 %v4291, %v4284
    %v4936 = vpack.c.b16 %v4292, %v4285
    %v4937 = vpack.c.b16 %v4293, %v4286
    %v4938 = vpack.c.b16 %v4301, %v4294
    %v4939 = vpack.c.b16 %v4302, %v4295
    %v4940 = vpack.c.b16 %v4303, %v4296
    %v4941 = vpack.c.b16 %v4304, %v4297
    %v4942 = vpack.c.b16 %v4305, %v4298
    %v4943 = vpack.c.b16 %v4306, %v4299
    %v4944 = vpack.c.b16 %v4307, %v4300
    %v4945 = vpack.c.b16 %v4315, %v4308
    %v4946 = vpack.c.b16 %v4316, %v4309
    %v4947 = vpack.c.b16 %v4317, %v4310
    %v4948 = vpack.c.b16 %v4318, %v4311
    %v4949 = vpack.c.b16 %v4319, %v4312
    %v4950 = vpack.c.b16 %v4320, %v4313
    %v4951 = vpack.c.b16 %v4321, %v4314
    %v4952 = vpack.c.b16 %v4329, %v4322
    %v4953 = vpack.c.b16 %v4330, %v4323
    %v4954 = vpack.c.b16 %v4331, %v4324
    %v4955 = vpack.c.b16 %v4332, %v4325
    %v4956 = vpack.c.b16 %v4333, %v4326
    %v4957 = vpack.c.b16 %v4334, %v4327
    %v4958 = vpack.c.b16 %v4335, %v4328
    %v4959 = vpack.c.b16 %v4343, %v4336
    %v4960 = vpack.c.b16 %v4344, %v4337
    %v4961 = vpack.c.b16 %v4345, %v4338
    %v4962 = vpack.c.b16 %v4346, %v4339
    %v4963 = vpack.c.b16 %v4347, %v4340
    %v4964 = vpack.c.b16 %v4348, %v4341
    %v4965 = vpack.c.b16 %v4349, %v4342
    %v4966 = vpack.c.b16 %v4357, %v4350
    %v4967 = vpack.c.b16 %v4358, %v4351
    %v4968 = vpack.c.b16 %v4359, %v4352
    %v4969 = vpack.c.b16 %v4360, %v4353
    %v4970 = vpack.c.b16 %v4361, %v4354
    %v4971 = vpack.c.b16 %v4362, %v4355
    %v4972 = vpack.c.b16 %v4363, %v4356
    %v4973 = vpack.c.b16 %v4371, %v4364
    %v4974 = vpack.c.b16 %v4372, %v4365
    %v4975 = vpack.c.b16 %v4373, %v4366
    %v4976 = vpack.c.b16 %v4374, %v4367
    %v4977 = vpack.c.b16 %v4375, %v4368
    %v4978 = vpack.c.b16 %v4376, %v4369
    %v4979 = vpack.c.b16 %v4377, %v4370
    %v4980 = vpack.c.b16 %v4385, %v4378
    %v4981 = vpack.c.b16 %v4386, %v4379
    %v4982 = vpack.c.b16 %v4387, %v4380
    %v4983 = vpack.c.b16 %v4388, %v4381
    %v4984 = vpack.c.b16 %v4389, %v4382
    %v4985 = vpack.c.b16 %v4390, %v4383
    %v4986 = vpack.c.b16 %v4391, %v4384
    %v4987 = vpack.c.b16 %v4399, %v4392
    %v4988 = vpack.c.b16 %v4400, %v4393
    %v4989 = vpack.c.b16 %v4401, %v4394
    %v4990 = vpack.c.b16 %v4402, %v4395
    %v4991 = vpack.c.b16 %v4403, %v4396
    %v4992 = vpack.c.b16 %v4404, %v4397
    %v4993 = vpack.c.b16 %v4405, %v4398
    %v4994 = vpack.c.b16 %v4413, %v4406
    %v4995 = vpack.c.b16 %v4414, %v4407
    %v4996 = vpack.c.b16 %v4415, %v4408
    %v4997 = vpack.c.b16 %v4416, %v4409
    %v4998 = vpack.c.b16 %v4417, %v4410
    %v4999 = vpack.c.b16 %v4418, %v4411
    %v5000 = vpack.c.b16 %v4419, %v4412
    %v5001 = vpack.c.b16 %v4427, %v4420
    %v5002 = vpack.c.b16 %v4428, %v4421
    %v5003 = vpack.c.b16 %v4429, %v4422
    %v5004 = vpack.c.b16 %v4430, %v4423
    %v5005 = vpack.c.b16 %v4431, %v4424
    %v5006 = vpack.c.b16 %v4432, %v4425
    %v5007 = vpack.c.b16 %v4433, %v4426
    %v5008 = vpack.c.b16 %v4441, %v4434
    %v5009 = vpack.c.b16 %v4442, %v4435
    %v5010 = vpack.c.b16 %v4443, %v4436
    %v5011 = vpack.c.b16 %v4444, %v4437
    %v5012 = vpack.c.b16 %v4445, %v4438
    %v5013 = vpack.c.b16 %v4446, %v4439
    %v5014 = vpack.c.b16 %v4447, %v4440
    %v5015 = vpack.c.b16 %v4455, %v4448
    %v5016 = vpack.c.b16 %v4456, %v4449
    %v5017 = vpack.c.b16 %v4457, %v4450
    %v5018 = vpack.c.b16 %v4458, %v4451
    %v5019 = vpack.c.b16 %v4459, %v4452
    %v5020 = vpack.c.b16 %v4460, %v4453
    %v5021 = vpack.c.b16 %v4461, %v4454
    %v5022 = vpack.c.b16 %v4469, %v4462
    %v5023 = vpack.c.b16 %v4470, %v4463
    %v5024 = vpack.c.b16 %v4471, %v4464
    %v5025 = vpack.c.b16 %v4472, %v4465
    %v5026 = vpack.c.b16 %v4473, %v4466
    %v5027 = vpack.c.b16 %v4474, %v4467
    %v5028 = vpack.c.b16 %v4475, %v4468
    %v5029 = vpack.c.b16 %v4483, %v4476
    %v5030 = vpack.c.b16 %v4484, %v4477
    %v5031 = vpack.c.b16 %v4485, %v4478
    %v5032 = vpack.c.b16 %v4486, %v4479
    %v5033 = vpack.c.b16 %v4487, %v4480
    %v5034 = vpack.c.b16 %v4488, %v4481
    %v5035 = vpack.c.b16 %v4489, %v4482
    %v5036 = vpack.c.b16 %v4497, %v4490
    %v5037 = vpack.c.b16 %v4498, %v4491
    %v5038 = vpack.c.b16 %v4499, %v4492
    %v5039 = vpack.c.b16 %v4500, %v4493
    %v5040 = vpack.c.b16 %v4501, %v4494
    %v5041 = vpack.c.b16 %v4502, %v4495
    %v5042 = vpack.c.b16 %v4503, %v4496
    %v5043 = vpack.c.b16 %v4511, %v4504
    %v5044 = vpack.c.b16 %v4512, %v4505
    %v5045 = vpack.c.b16 %v4513, %v4506
    %v5046 = vpack.c.b16 %v4514, %v4507
    %v5047 = vpack.c.b16 %v4515, %v4508
    %v5048 = vpack.c.b16 %v4516, %v4509
    %v5049 = vpack.c.b16 %v4517, %v4510
    %v5050 = vpack.c.b16 %v4525, %v4518
    %v5051 = vpack.c.b16 %v4526, %v4519
    %v5052 = vpack.c.b16 %v4527, %v4520
    %v5053 = vpack.c.b16 %v4528, %v4521
    %v5054 = vpack.c.b16 %v4529, %v4522
    %v5055 = vpack.c.b16 %v4530, %v4523
    %v5056 = vpack.c.b16 %v4531, %v4524
    %v5057 = vpack.c.b16 %v4539, %v4532
    %v5058 = vpack.c.b16 %v4540, %v4533
    %v5059 = vpack.c.b16 %v4541, %v4534
    %v5060 = vpack.c.b16 %v4542, %v4535
    %v5061 = vpack.c.b16 %v4543, %v4536
    %v5062 = vpack.c.b16 %v4544, %v4537
    %v5063 = vpack.c.b16 %v4545, %v4538
    %v5064 = vpack.c.b16 %v4553, %v4546
    %v5065 = vpack.c.b16 %v4554, %v4547
    %v5066 = vpack.c.b16 %v4555, %v4548
    %v5067 = vpack.c.b16 %v4556, %v4549
    %v5068 = vpack.c.b16 %v4557, %v4550
    %v5069 = vpack.c.b16 %v4558, %v4551
    %v5070 = vpack.c.b16 %v4559, %v4552
    %v5071 = vpack.c.b16 %v4567, %v4560
    %v5072 = vpack.c.b16 %v4568, %v4561
    %v5073 = vpack.c.b16 %v4569, %v4562
    %v5074 = vpack.c.b16 %v4570, %v4563
    %v5075 = vpack.c.b16 %v4571, %v4564
    %v5076 = vpack.c.b16 %v4572, %v4565
    %v5077 = vpack.c.b16 %v4573, %v4566
    %v5078 = vpack.c.b16 %v4581, %v4574
    %v5079 = vpack.c.b16 %v4582, %v4575
    %v5080 = vpack.c.b16 %v4583, %v4576
    %v5081 = vpack.c.b16 %v4584, %v4577
    %v5082 = vpack.c.b16 %v4585, %v4578
    %v5083 = vpack.c.b16 %v4586, %v4579
    %v5084 = vpack.c.b16 %v4587, %v4580
    %v5085 = vpack.c.b16 %v4595, %v4588
    %v5086 = vpack.c.b16 %v4596, %v4589
    %v5087 = vpack.c.b16 %v4597, %v4590
    %v5088 = vpack.c.b16 %v4598, %v4591
    %v5089 = vpack.c.b16 %v4599, %v4592
    %v5090 = vpack.c.b16 %v4600, %v4593
    %v5091 = vpack.c.b16 %v4601, %v4594
    %v5092 = vpack.c.b16 %v4609, %v4602
    %v5093 = vpack.c.b16 %v4610, %v4603
    %v5094 = vpack.c.b16 %v4611, %v4604
    %v5095 = vpack.c.b16 %v4612, %v4605
    %v5096 = vpack.c.b16 %v4613, %v4606
    %v5097 = vpack.c.b16 %v4614, %v4607
    %v5098 = vpack.c.b16 %v4615, %v4608
    %v5099 = vpack.c.b16 %v4623, %v4616
    %v5100 = vpack.c.b16 %v4624, %v4617
    %v5101 = vpack.c.b16 %v4625, %v4618
    %v5102 = vpack.c.b16 %v4626, %v4619
    %v5103 = vpack.c.b16 %v4627, %v4620
    %v5104 = vpack.c.b16 %v4628, %v4621
    %v5105 = vpack.c.b16 %v4629, %v4622
    %v5106 = vpack.c.b16 %v4637, %v4630
    %v5107 = vpack.c.b16 %v4638, %v4631
    %v5108 = vpack.c.b16 %v4639, %v4632
    %v5109 = vpack.c.b16 %v4640, %v4633
    %v5110 = vpack.c.b16 %v4641, %v4634
    %v5111 = vpack.c.b16 %v4642, %v4635
    %v5112 = vpack.c.b16 %v4643, %v4636
    %v5113 = vpack.c.b16 %v4651, %v4644
    %v5114 = vpack.c.b16 %v4652, %v4645
    %v5115 = vpack.c.b16 %v4653, %v4646
    %v5116 = vpack.c.b16 %v4654, %v4647
    %v5117 = vpack.c.b16 %v4655, %v4648
    %v5118 = vpack.c.b16 %v4656, %v4649
    %v5119 = vpack.c.b16 %v4657, %v4650
    %v5120 = vpack.c.b16 %v4665, %v4658
    %v5121 = vpack.c.b16 %v4666, %v4659
    %v5122 = vpack.c.b16 %v4667, %v4660
    %v5123 = vpack.c.b16 %v4668, %v4661
    %v5124 = vpack.c.b16 %v4669, %v4662
    %v5125 = vpack.c.b16 %v4670, %v4663
    %v5126 = vpack.c.b16 %v4671, %v4664
    %v5127 = vpack.c.b16 %v4679, %v4672
    %v5128 = vpack.c.b16 %v4680, %v4673
    %v5129 = vpack.c.b16 %v4681, %v4674
    %v5130 = vpack.c.b16 %v4682, %v4675
    %v5131 = vpack.c.b16 %v4683, %v4676
    %v5132 = vpack.c.b16 %v4684, %v4677
    %v5133 = vpack.c.b16 %v4685, %v4678
    %5582 = vmatpush.bf16.msra.mxu0 %v4735
    %5583 = vmatpush.bf16.msra.mxu0 %v4728
    %5584 = vmatpush.bf16.msra.mxu0 %v4721
    %5585 = vmatpush.bf16.msra.mxu0 %v4714
    %5586 = vmatpush.bf16.msra.mxu0 %v4707
    %5587 = vmatpush.bf16.msra.mxu0 %v4700
    %5588 = vmatpush.bf16.msra.mxu0 %v4693
    %5589 = vmatpush.bf16.msra.mxu0 %v4686
    %5590 = vmatmul.bf16.gmra.mxu0 %v2742
    %v5591 = vpop.f32.mrf.mxu0
    %v5592 = vadd.f32 %v3264, %v5591
    %v5593 = vpop.f32.mrf.mxu0
    %5594 = vdwg.mxu0
    %5595 = vmatpush.bf16.msra.mxu0 %v4791
    %5596 = vmatpush.bf16.msra.mxu0 %v4784
    %5597 = vmatpush.bf16.msra.mxu0 %v4777
    %5598 = vmatpush.bf16.msra.mxu0 %v4770
    %5599 = vmatpush.bf16.msra.mxu0 %v4763
    %5600 = vmatpush.bf16.msra.mxu0 %v4756
    %5601 = vmatpush.bf16.msra.mxu0 %v4749
    %5602 = vmatpush.bf16.msra.mxu0 %v4742
    %5603 = vmatmul.bf16.gmra.mxu0 %v2743
    %v5604 = vpop.f32.mrf.mxu0
    %v5605 = vadd.f32 %v5592, %v5604
    %v5606 = vpop.f32.mrf.mxu0
    %5607 = vdwg.mxu0
    %5608 = vmatpush.bf16.msra.mxu0 %v4847
    %5609 = vmatpush.bf16.msra.mxu0 %v4840
    %5610 = vmatpush.bf16.msra.mxu0 %v4833
    %5611 = vmatpush.bf16.msra.mxu0 %v4826
    %5612 = vmatpush.bf16.msra.mxu0 %v4819
    %5613 = vmatpush.bf16.msra.mxu0 %v4812
    %5614 = vmatpush.bf16.msra.mxu0 %v4805
    %5615 = vmatpush.bf16.msra.mxu0 %v4798
    %5616 = vmatmul.bf16.gmra.mxu0 %v2744
    %v5617 = vpop.f32.mrf.mxu0
    %v5618 = vadd.f32 %v5605, %v5617
    %v5619 = vpop.f32.mrf.mxu0
    %5620 = vdwg.mxu0
    %5621 = vmatpush.bf16.msra.mxu0 %v4903
    %5622 = vmatpush.bf16.msra.mxu0 %v4896
    %5623 = vmatpush.bf16.msra.mxu0 %v4889
    %5624 = vmatpush.bf16.msra.mxu0 %v4882
    %5625 = vmatpush.bf16.msra.mxu0 %v4875
    %5626 = vmatpush.bf16.msra.mxu0 %v4868
    %5627 = vmatpush.bf16.msra.mxu0 %v4861
    %5628 = vmatpush.bf16.msra.mxu0 %v4854
    %5629 = vmatmul.bf16.gmra.mxu0 %v2745
    %v5630 = vpop.f32.mrf.mxu0
    %v5631 = vadd.f32 %v5618, %v5630
    %v5632 = vpop.f32.mrf.mxu0
    %5633 = vdwg.mxu0
    %5634 = vmatpush.bf16.msra.mxu0 %v4959
    %5635 = vmatpush.bf16.msra.mxu0 %v4952
    %5636 = vmatpush.bf16.msra.mxu0 %v4945
    %5637 = vmatpush.bf16.msra.mxu0 %v4938
    %5638 = vmatpush.bf16.msra.mxu0 %v4931
    %5639 = vmatpush.bf16.msra.mxu0 %v4924
    %5640 = vmatpush.bf16.msra.mxu0 %v4917
    %5641 = vmatpush.bf16.msra.mxu0 %v4910
    %5642 = vmatmul.bf16.gmra.mxu0 %v2746
    %v5643 = vpop.f32.mrf.mxu0
    %v5644 = vadd.f32 %v5631, %v5643
    %v5645 = vpop.f32.mrf.mxu0
    %5646 = vdwg.mxu0
    %5647 = vmatpush.bf16.msra.mxu0 %v5015
    %5648 = vmatpush.bf16.msra.mxu0 %v5008
    %5649 = vmatpush.bf16.msra.mxu0 %v5001
    %5650 = vmatpush.bf16.msra.mxu0 %v4994
    %5651 = vmatpush.bf16.msra.mxu0 %v4987
    %5652 = vmatpush.bf16.msra.mxu0 %v4980
    %5653 = vmatpush.bf16.msra.mxu0 %v4973
    %5654 = vmatpush.bf16.msra.mxu0 %v4966
    %5655 = vmatmul.bf16.gmra.mxu0 %v2747
    %v5656 = vpop.f32.mrf.mxu0
    %v5657 = vadd.f32 %v5644, %v5656
    %v5658 = vpop.f32.mrf.mxu0
    %5659 = vdwg.mxu0
    %5660 = vmatpush.bf16.msra.mxu0 %v5071
    %5661 = vmatpush.bf16.msra.mxu0 %v5064
    %5662 = vmatpush.bf16.msra.mxu0 %v5057
    %5663 = vmatpush.bf16.msra.mxu0 %v5050
    %5664 = vmatpush.bf16.msra.mxu0 %v5043
    %5665 = vmatpush.bf16.msra.mxu0 %v5036
    %5666 = vmatpush.bf16.msra.mxu0 %v5029
    %5667 = vmatpush.bf16.msra.mxu0 %v5022
    %5668 = vmatmul.bf16.gmra.mxu0 %v2748
    %v5669 = vpop.f32.mrf.mxu0
    %v5670 = vadd.f32 %v5657, %v5669
    %v5671 = vpop.f32.mrf.mxu0
    %5672 = vdwg.mxu0
    %5673 = vmatpush.bf16.msra.mxu0 %v5127
    %5674 = vmatpush.bf16.msra.mxu0 %v5120
    %5675 = vmatpush.bf16.msra.mxu0 %v5113
    %5676 = vmatpush.bf16.msra.mxu0 %v5106
    %5677 = vmatpush.bf16.msra.mxu0 %v5099
    %5678 = vmatpush.bf16.msra.mxu0 %v5092
    %5679 = vmatpush.bf16.msra.mxu0 %v5085
    %5680 = vmatpush.bf16.msra.mxu0 %v5078
    %5681 = vmatmul.bf16.gmra.mxu0 %v2749
    %v5682 = vpop.f32.mrf.mxu0
    %v5683 = vadd.f32 %v5670, %v5682
    %v5684 = vpop.f32.mrf.mxu0
    %5685 = vdwg.mxu0
    %5686 = vmatpush.bf16.msra.mxu0 %v4736
    %5687 = vmatpush.bf16.msra.mxu0 %v4729
    %5688 = vmatpush.bf16.msra.mxu0 %v4722
    %5689 = vmatpush.bf16.msra.mxu0 %v4715
    %5690 = vmatpush.bf16.msra.mxu0 %v4708
    %5691 = vmatpush.bf16.msra.mxu0 %v4701
    %5692 = vmatpush.bf16.msra.mxu0 %v4694
    %5693 = vmatpush.bf16.msra.mxu0 %v4687
    %5694 = vmatmul.bf16.gmra.mxu0 %v2742
    %v5695 = vpop.f32.mrf.mxu0
    %v5696 = vadd.f32 %v3265, %v5695
    %v5697 = vpop.f32.mrf.mxu0
    %5698 = vdwg.mxu0
    %5699 = vmatpush.bf16.msra.mxu0 %v4792
    %5700 = vmatpush.bf16.msra.mxu0 %v4785
    %5701 = vmatpush.bf16.msra.mxu0 %v4778
    %5702 = vmatpush.bf16.msra.mxu0 %v4771
    %5703 = vmatpush.bf16.msra.mxu0 %v4764
    %5704 = vmatpush.bf16.msra.mxu0 %v4757
    %5705 = vmatpush.bf16.msra.mxu0 %v4750
    %5706 = vmatpush.bf16.msra.mxu0 %v4743
    %5707 = vmatmul.bf16.gmra.mxu0 %v2743
    %v5708 = vpop.f32.mrf.mxu0
    %v5709 = vadd.f32 %v5696, %v5708
    %v5710 = vpop.f32.mrf.mxu0
    %5711 = vdwg.mxu0
    %5712 = vmatpush.bf16.msra.mxu0 %v4848
    %5713 = vmatpush.bf16.msra.mxu0 %v4841
    %5714 = vmatpush.bf16.msra.mxu0 %v4834
    %5715 = vmatpush.bf16.msra.mxu0 %v4827
    %5716 = vmatpush.bf16.msra.mxu0 %v4820
    %5717 = vmatpush.bf16.msra.mxu0 %v4813
    %5718 = vmatpush.bf16.msra.mxu0 %v4806
    %5719 = vmatpush.bf16.msra.mxu0 %v4799
    %5720 = vmatmul.bf16.gmra.mxu0 %v2744
    %v5721 = vpop.f32.mrf.mxu0
    %v5722 = vadd.f32 %v5709, %v5721
    %v5723 = vpop.f32.mrf.mxu0
    %5724 = vdwg.mxu0
    %5725 = vmatpush.bf16.msra.mxu0 %v4904
    %5726 = vmatpush.bf16.msra.mxu0 %v4897
    %5727 = vmatpush.bf16.msra.mxu0 %v4890
    %5728 = vmatpush.bf16.msra.mxu0 %v4883
    %5729 = vmatpush.bf16.msra.mxu0 %v4876
    %5730 = vmatpush.bf16.msra.mxu0 %v4869
    %5731 = vmatpush.bf16.msra.mxu0 %v4862
    %5732 = vmatpush.bf16.msra.mxu0 %v4855
    %5733 = vmatmul.bf16.gmra.mxu0 %v2745
    %v5734 = vpop.f32.mrf.mxu0
    %v5735 = vadd.f32 %v5722, %v5734
    %v5736 = vpop.f32.mrf.mxu0
    %5737 = vdwg.mxu0
    %5738 = vmatpush.bf16.msra.mxu0 %v4960
    %5739 = vmatpush.bf16.msra.mxu0 %v4953
    %5740 = vmatpush.bf16.msra.mxu0 %v4946
    %5741 = vmatpush.bf16.msra.mxu0 %v4939
    %5742 = vmatpush.bf16.msra.mxu0 %v4932
    %5743 = vmatpush.bf16.msra.mxu0 %v4925
    %5744 = vmatpush.bf16.msra.mxu0 %v4918
    %5745 = vmatpush.bf16.msra.mxu0 %v4911
    %5746 = vmatmul.bf16.gmra.mxu0 %v2746
    %v5747 = vpop.f32.mrf.mxu0
    %v5748 = vadd.f32 %v5735, %v5747
    %v5749 = vpop.f32.mrf.mxu0
    %5750 = vdwg.mxu0
    %5751 = vmatpush.bf16.msra.mxu0 %v5016
    %5752 = vmatpush.bf16.msra.mxu0 %v5009
    %5753 = vmatpush.bf16.msra.mxu0 %v5002
    %5754 = vmatpush.bf16.msra.mxu0 %v4995
    %5755 = vmatpush.bf16.msra.mxu0 %v4988
    %5756 = vmatpush.bf16.msra.mxu0 %v4981
    %5757 = vmatpush.bf16.msra.mxu0 %v4974
    %5758 = vmatpush.bf16.msra.mxu0 %v4967
    %5759 = vmatmul.bf16.gmra.mxu0 %v2747
    %v5760 = vpop.f32.mrf.mxu0
    %v5761 = vadd.f32 %v5748, %v5760
    %v5762 = vpop.f32.mrf.mxu0
    %5763 = vdwg.mxu0
    %5764 = vmatpush.bf16.msra.mxu0 %v5072
    %5765 = vmatpush.bf16.msra.mxu0 %v5065
    %5766 = vmatpush.bf16.msra.mxu0 %v5058
    %5767 = vmatpush.bf16.msra.mxu0 %v5051
    %5768 = vmatpush.bf16.msra.mxu0 %v5044
    %5769 = vmatpush.bf16.msra.mxu0 %v5037
    %5770 = vmatpush.bf16.msra.mxu0 %v5030
    %5771 = vmatpush.bf16.msra.mxu0 %v5023
    %5772 = vmatmul.bf16.gmra.mxu0 %v2748
    %v5773 = vpop.f32.mrf.mxu0
    %v5774 = vadd.f32 %v5761, %v5773
    %v5775 = vpop.f32.mrf.mxu0
    %5776 = vdwg.mxu0
    %5777 = vmatpush.bf16.msra.mxu0 %v5128
    %5778 = vmatpush.bf16.msra.mxu0 %v5121
    %5779 = vmatpush.bf16.msra.mxu0 %v5114
    %5780 = vmatpush.bf16.msra.mxu0 %v5107
    %5781 = vmatpush.bf16.msra.mxu0 %v5100
    %5782 = vmatpush.bf16.msra.mxu0 %v5093
    %5783 = vmatpush.bf16.msra.mxu0 %v5086
    %5784 = vmatpush.bf16.msra.mxu0 %v5079
    %5785 = vmatmul.bf16.gmra.mxu0 %v2749
    %v5786 = vpop.f32.mrf.mxu0
    %v5787 = vadd.f32 %v5774, %v5786
    %v5788 = vpop.f32.mrf.mxu0
    %5789 = vdwg.mxu0
    %5790 = vmatpush.bf16.msra.mxu0 %v4737
    %5791 = vmatpush.bf16.msra.mxu0 %v4730
    %5792 = vmatpush.bf16.msra.mxu0 %v4723
    %5793 = vmatpush.bf16.msra.mxu0 %v4716
    %5794 = vmatpush.bf16.msra.mxu0 %v4709
    %5795 = vmatpush.bf16.msra.mxu0 %v4702
    %5796 = vmatpush.bf16.msra.mxu0 %v4695
    %5797 = vmatpush.bf16.msra.mxu0 %v4688
    %5798 = vmatmul.bf16.gmra.mxu0 %v2742
    %v5799 = vpop.f32.mrf.mxu0
    %v5800 = vadd.f32 %v3266, %v5799
    %v5801 = vpop.f32.mrf.mxu0
    %5802 = vdwg.mxu0
    %5803 = vmatpush.bf16.msra.mxu0 %v4793
    %5804 = vmatpush.bf16.msra.mxu0 %v4786
    %5805 = vmatpush.bf16.msra.mxu0 %v4779
    %5806 = vmatpush.bf16.msra.mxu0 %v4772
    %5807 = vmatpush.bf16.msra.mxu0 %v4765
    %5808 = vmatpush.bf16.msra.mxu0 %v4758
    %5809 = vmatpush.bf16.msra.mxu0 %v4751
    %5810 = vmatpush.bf16.msra.mxu0 %v4744
    %5811 = vmatmul.bf16.gmra.mxu0 %v2743
    %v5812 = vpop.f32.mrf.mxu0
    %v5813 = vadd.f32 %v5800, %v5812
    %v5814 = vpop.f32.mrf.mxu0
    %5815 = vdwg.mxu0
    %5816 = vmatpush.bf16.msra.mxu0 %v4849
    %5817 = vmatpush.bf16.msra.mxu0 %v4842
    %5818 = vmatpush.bf16.msra.mxu0 %v4835
    %5819 = vmatpush.bf16.msra.mxu0 %v4828
    %5820 = vmatpush.bf16.msra.mxu0 %v4821
    %5821 = vmatpush.bf16.msra.mxu0 %v4814
    %5822 = vmatpush.bf16.msra.mxu0 %v4807
    %5823 = vmatpush.bf16.msra.mxu0 %v4800
    %5824 = vmatmul.bf16.gmra.mxu0 %v2744
    %v5825 = vpop.f32.mrf.mxu0
    %v5826 = vadd.f32 %v5813, %v5825
    %v5827 = vpop.f32.mrf.mxu0
    %5828 = vdwg.mxu0
    %5829 = vmatpush.bf16.msra.mxu0 %v4905
    %5830 = vmatpush.bf16.msra.mxu0 %v4898
    %5831 = vmatpush.bf16.msra.mxu0 %v4891
    %5832 = vmatpush.bf16.msra.mxu0 %v4884
    %5833 = vmatpush.bf16.msra.mxu0 %v4877
    %5834 = vmatpush.bf16.msra.mxu0 %v4870
    %5835 = vmatpush.bf16.msra.mxu0 %v4863
    %5836 = vmatpush.bf16.msra.mxu0 %v4856
    %5837 = vmatmul.bf16.gmra.mxu0 %v2745
    %v5838 = vpop.f32.mrf.mxu0
    %v5839 = vadd.f32 %v5826, %v5838
    %v5840 = vpop.f32.mrf.mxu0
    %5841 = vdwg.mxu0
    %5842 = vmatpush.bf16.msra.mxu0 %v4961
    %5843 = vmatpush.bf16.msra.mxu0 %v4954
    %5844 = vmatpush.bf16.msra.mxu0 %v4947
    %5845 = vmatpush.bf16.msra.mxu0 %v4940
    %5846 = vmatpush.bf16.msra.mxu0 %v4933
    %5847 = vmatpush.bf16.msra.mxu0 %v4926
    %5848 = vmatpush.bf16.msra.mxu0 %v4919
    %5849 = vmatpush.bf16.msra.mxu0 %v4912
    %5850 = vmatmul.bf16.gmra.mxu0 %v2746
    %v5851 = vpop.f32.mrf.mxu0
    %v5852 = vadd.f32 %v5839, %v5851
    %v5853 = vpop.f32.mrf.mxu0
    %5854 = vdwg.mxu0
    %5855 = vmatpush.bf16.msra.mxu0 %v5017
    %5856 = vmatpush.bf16.msra.mxu0 %v5010
    %5857 = vmatpush.bf16.msra.mxu0 %v5003
    %5858 = vmatpush.bf16.msra.mxu0 %v4996
    %5859 = vmatpush.bf16.msra.mxu0 %v4989
    %5860 = vmatpush.bf16.msra.mxu0 %v4982
    %5861 = vmatpush.bf16.msra.mxu0 %v4975
    %5862 = vmatpush.bf16.msra.mxu0 %v4968
    %5863 = vmatmul.bf16.gmra.mxu0 %v2747
    %v5864 = vpop.f32.mrf.mxu0
    %v5865 = vadd.f32 %v5852, %v5864
    %v5866 = vpop.f32.mrf.mxu0
    %5867 = vdwg.mxu0
    %5868 = vmatpush.bf16.msra.mxu0 %v5073
    %5869 = vmatpush.bf16.msra.mxu0 %v5066
    %5870 = vmatpush.bf16.msra.mxu0 %v5059
    %5871 = vmatpush.bf16.msra.mxu0 %v5052
    %5872 = vmatpush.bf16.msra.mxu0 %v5045
    %5873 = vmatpush.bf16.msra.mxu0 %v5038
    %5874 = vmatpush.bf16.msra.mxu0 %v5031
    %5875 = vmatpush.bf16.msra.mxu0 %v5024
    %5876 = vmatmul.bf16.gmra.mxu0 %v2748
    %v5877 = vpop.f32.mrf.mxu0
    %v5878 = vadd.f32 %v5865, %v5877
    %v5879 = vpop.f32.mrf.mxu0
    %5880 = vdwg.mxu0
    %5881 = vmatpush.bf16.msra.mxu0 %v5129
    %5882 = vmatpush.bf16.msra.mxu0 %v5122
    %5883 = vmatpush.bf16.msra.mxu0 %v5115
    %5884 = vmatpush.bf16.msra.mxu0 %v5108
    %5885 = vmatpush.bf16.msra.mxu0 %v5101
    %5886 = vmatpush.bf16.msra.mxu0 %v5094
    %5887 = vmatpush.bf16.msra.mxu0 %v5087
    %5888 = vmatpush.bf16.msra.mxu0 %v5080
    %5889 = vmatmul.bf16.gmra.mxu0 %v2749
    %v5890 = vpop.f32.mrf.mxu0
    %v5891 = vadd.f32 %v5878, %v5890
    %v5892 = vpop.f32.mrf.mxu0
    %5893 = vdwg.mxu0
    %5894 = vmatpush.bf16.msra.mxu0 %v4738
    %5895 = vmatpush.bf16.msra.mxu0 %v4731
    %5896 = vmatpush.bf16.msra.mxu0 %v4724
    %5897 = vmatpush.bf16.msra.mxu0 %v4717
    %5898 = vmatpush.bf16.msra.mxu0 %v4710
    %5899 = vmatpush.bf16.msra.mxu0 %v4703
    %5900 = vmatpush.bf16.msra.mxu0 %v4696
    %5901 = vmatpush.bf16.msra.mxu0 %v4689
    %5902 = vmatmul.bf16.gmra.mxu0 %v2742
    %v5903 = vpop.f32.mrf.mxu0
    %v5904 = vadd.f32 %v3267, %v5903
    %v5905 = vpop.f32.mrf.mxu0
    %5906 = vdwg.mxu0
    %5907 = vmatpush.bf16.msra.mxu0 %v4794
    %5908 = vmatpush.bf16.msra.mxu0 %v4787
    %5909 = vmatpush.bf16.msra.mxu0 %v4780
    %5910 = vmatpush.bf16.msra.mxu0 %v4773
    %5911 = vmatpush.bf16.msra.mxu0 %v4766
    %5912 = vmatpush.bf16.msra.mxu0 %v4759
    %5913 = vmatpush.bf16.msra.mxu0 %v4752
    %5914 = vmatpush.bf16.msra.mxu0 %v4745
    %5915 = vmatmul.bf16.gmra.mxu0 %v2743
    %v5916 = vpop.f32.mrf.mxu0
    %v5917 = vadd.f32 %v5904, %v5916
    %v5918 = vpop.f32.mrf.mxu0
    %5919 = vdwg.mxu0
    %5920 = vmatpush.bf16.msra.mxu0 %v4850
    %5921 = vmatpush.bf16.msra.mxu0 %v4843
    %5922 = vmatpush.bf16.msra.mxu0 %v4836
    %5923 = vmatpush.bf16.msra.mxu0 %v4829
    %5924 = vmatpush.bf16.msra.mxu0 %v4822
    %5925 = vmatpush.bf16.msra.mxu0 %v4815
    %5926 = vmatpush.bf16.msra.mxu0 %v4808
    %5927 = vmatpush.bf16.msra.mxu0 %v4801
    %5928 = vmatmul.bf16.gmra.mxu0 %v2744
    %v5929 = vpop.f32.mrf.mxu0
    %v5930 = vadd.f32 %v5917, %v5929
    %v5931 = vpop.f32.mrf.mxu0
    %5932 = vdwg.mxu0
    %5933 = vmatpush.bf16.msra.mxu0 %v4906
    %5934 = vmatpush.bf16.msra.mxu0 %v4899
    %5935 = vmatpush.bf16.msra.mxu0 %v4892
    %5936 = vmatpush.bf16.msra.mxu0 %v4885
    %5937 = vmatpush.bf16.msra.mxu0 %v4878
    %5938 = vmatpush.bf16.msra.mxu0 %v4871
    %5939 = vmatpush.bf16.msra.mxu0 %v4864
    %5940 = vmatpush.bf16.msra.mxu0 %v4857
    %5941 = vmatmul.bf16.gmra.mxu0 %v2745
    %v5942 = vpop.f32.mrf.mxu0
    %v5943 = vadd.f32 %v5930, %v5942
    %v5944 = vpop.f32.mrf.mxu0
    %5945 = vdwg.mxu0
    %5946 = vmatpush.bf16.msra.mxu0 %v4962
    %5947 = vmatpush.bf16.msra.mxu0 %v4955
    %5948 = vmatpush.bf16.msra.mxu0 %v4948
    %5949 = vmatpush.bf16.msra.mxu0 %v4941
    %5950 = vmatpush.bf16.msra.mxu0 %v4934
    %5951 = vmatpush.bf16.msra.mxu0 %v4927
    %5952 = vmatpush.bf16.msra.mxu0 %v4920
    %5953 = vmatpush.bf16.msra.mxu0 %v4913
    %5954 = vmatmul.bf16.gmra.mxu0 %v2746
    %v5955 = vpop.f32.mrf.mxu0
    %v5956 = vadd.f32 %v5943, %v5955
    %v5957 = vpop.f32.mrf.mxu0
    %5958 = vdwg.mxu0
    %5959 = vmatpush.bf16.msra.mxu0 %v5018
    %5960 = vmatpush.bf16.msra.mxu0 %v5011
    %5961 = vmatpush.bf16.msra.mxu0 %v5004
    %5962 = vmatpush.bf16.msra.mxu0 %v4997
    %5963 = vmatpush.bf16.msra.mxu0 %v4990
    %5964 = vmatpush.bf16.msra.mxu0 %v4983
    %5965 = vmatpush.bf16.msra.mxu0 %v4976
    %5966 = vmatpush.bf16.msra.mxu0 %v4969
    %5967 = vmatmul.bf16.gmra.mxu0 %v2747
    %v5968 = vpop.f32.mrf.mxu0
    %v5969 = vadd.f32 %v5956, %v5968
    %v5970 = vpop.f32.mrf.mxu0
    %5971 = vdwg.mxu0
    %5972 = vmatpush.bf16.msra.mxu0 %v5074
    %5973 = vmatpush.bf16.msra.mxu0 %v5067
    %5974 = vmatpush.bf16.msra.mxu0 %v5060
    %5975 = vmatpush.bf16.msra.mxu0 %v5053
    %5976 = vmatpush.bf16.msra.mxu0 %v5046
    %5977 = vmatpush.bf16.msra.mxu0 %v5039
    %5978 = vmatpush.bf16.msra.mxu0 %v5032
    %5979 = vmatpush.bf16.msra.mxu0 %v5025
    %5980 = vmatmul.bf16.gmra.mxu0 %v2748
    %v5981 = vpop.f32.mrf.mxu0
    %v5982 = vadd.f32 %v5969, %v5981
    %v5983 = vpop.f32.mrf.mxu0
    %5984 = vdwg.mxu0
    %5985 = vmatpush.bf16.msra.mxu0 %v5130
    %5986 = vmatpush.bf16.msra.mxu0 %v5123
    %5987 = vmatpush.bf16.msra.mxu0 %v5116
    %5988 = vmatpush.bf16.msra.mxu0 %v5109
    %5989 = vmatpush.bf16.msra.mxu0 %v5102
    %5990 = vmatpush.bf16.msra.mxu0 %v5095
    %5991 = vmatpush.bf16.msra.mxu0 %v5088
    %5992 = vmatpush.bf16.msra.mxu0 %v5081
    %5993 = vmatmul.bf16.gmra.mxu0 %v2749
    %v5994 = vpop.f32.mrf.mxu0
    %v5995 = vadd.f32 %v5982, %v5994
    %v5996 = vpop.f32.mrf.mxu0
    %5997 = vdwg.mxu0
    %5998 = vmatpush.bf16.msra.mxu0 %v4739
    %5999 = vmatpush.bf16.msra.mxu0 %v4732
    %6000 = vmatpush.bf16.msra.mxu0 %v4725
    %6001 = vmatpush.bf16.msra.mxu0 %v4718
    %6002 = vmatpush.bf16.msra.mxu0 %v4711
    %6003 = vmatpush.bf16.msra.mxu0 %v4704
    %6004 = vmatpush.bf16.msra.mxu0 %v4697
    %6005 = vmatpush.bf16.msra.mxu0 %v4690
    %6006 = vmatmul.bf16.gmra.mxu0 %v2742
    %v6007 = vpop.f32.mrf.mxu0
    %v6008 = vadd.f32 %v3268, %v6007
    %v6009 = vpop.f32.mrf.mxu0
    %6010 = vdwg.mxu0
    %6011 = vmatpush.bf16.msra.mxu0 %v4795
    %6012 = vmatpush.bf16.msra.mxu0 %v4788
    %6013 = vmatpush.bf16.msra.mxu0 %v4781
    %6014 = vmatpush.bf16.msra.mxu0 %v4774
    %6015 = vmatpush.bf16.msra.mxu0 %v4767
    %6016 = vmatpush.bf16.msra.mxu0 %v4760
    %6017 = vmatpush.bf16.msra.mxu0 %v4753
    %6018 = vmatpush.bf16.msra.mxu0 %v4746
    %6019 = vmatmul.bf16.gmra.mxu0 %v2743
    %v6020 = vpop.f32.mrf.mxu0
    %v6021 = vadd.f32 %v6008, %v6020
    %v6022 = vpop.f32.mrf.mxu0
    %6023 = vdwg.mxu0
    %6024 = vmatpush.bf16.msra.mxu0 %v4851
    %6025 = vmatpush.bf16.msra.mxu0 %v4844
    %6026 = vmatpush.bf16.msra.mxu0 %v4837
    %6027 = vmatpush.bf16.msra.mxu0 %v4830
    %6028 = vmatpush.bf16.msra.mxu0 %v4823
    %6029 = vmatpush.bf16.msra.mxu0 %v4816
    %6030 = vmatpush.bf16.msra.mxu0 %v4809
    %6031 = vmatpush.bf16.msra.mxu0 %v4802
    %6032 = vmatmul.bf16.gmra.mxu0 %v2744
    %v6033 = vpop.f32.mrf.mxu0
    %v6034 = vadd.f32 %v6021, %v6033
    %v6035 = vpop.f32.mrf.mxu0
    %6036 = vdwg.mxu0
    %6037 = vmatpush.bf16.msra.mxu0 %v4907
    %6038 = vmatpush.bf16.msra.mxu0 %v4900
    %6039 = vmatpush.bf16.msra.mxu0 %v4893
    %6040 = vmatpush.bf16.msra.mxu0 %v4886
    %6041 = vmatpush.bf16.msra.mxu0 %v4879
    %6042 = vmatpush.bf16.msra.mxu0 %v4872
    %6043 = vmatpush.bf16.msra.mxu0 %v4865
    %6044 = vmatpush.bf16.msra.mxu0 %v4858
    %6045 = vmatmul.bf16.gmra.mxu0 %v2745
    %v6046 = vpop.f32.mrf.mxu0
    %v6047 = vadd.f32 %v6034, %v6046
    %v6048 = vpop.f32.mrf.mxu0
    %6049 = vdwg.mxu0
    %6050 = vmatpush.bf16.msra.mxu0 %v4963
    %6051 = vmatpush.bf16.msra.mxu0 %v4956
    %6052 = vmatpush.bf16.msra.mxu0 %v4949
    %6053 = vmatpush.bf16.msra.mxu0 %v4942
    %6054 = vmatpush.bf16.msra.mxu0 %v4935
    %6055 = vmatpush.bf16.msra.mxu0 %v4928
    %6056 = vmatpush.bf16.msra.mxu0 %v4921
    %6057 = vmatpush.bf16.msra.mxu0 %v4914
    %6058 = vmatmul.bf16.gmra.mxu0 %v2746
    %v6059 = vpop.f32.mrf.mxu0
    %v6060 = vadd.f32 %v6047, %v6059
    %v6061 = vpop.f32.mrf.mxu0
    %6062 = vdwg.mxu0
    %6063 = vmatpush.bf16.msra.mxu0 %v5019
    %6064 = vmatpush.bf16.msra.mxu0 %v5012
    %6065 = vmatpush.bf16.msra.mxu0 %v5005
    %6066 = vmatpush.bf16.msra.mxu0 %v4998
    %6067 = vmatpush.bf16.msra.mxu0 %v4991
    %6068 = vmatpush.bf16.msra.mxu0 %v4984
    %6069 = vmatpush.bf16.msra.mxu0 %v4977
    %6070 = vmatpush.bf16.msra.mxu0 %v4970
    %6071 = vmatmul.bf16.gmra.mxu0 %v2747
    %v6072 = vpop.f32.mrf.mxu0
    %v6073 = vadd.f32 %v6060, %v6072
    %v6074 = vpop.f32.mrf.mxu0
    %6075 = vdwg.mxu0
    %6076 = vmatpush.bf16.msra.mxu0 %v5075
    %6077 = vmatpush.bf16.msra.mxu0 %v5068
    %6078 = vmatpush.bf16.msra.mxu0 %v5061
    %6079 = vmatpush.bf16.msra.mxu0 %v5054
    %6080 = vmatpush.bf16.msra.mxu0 %v5047
    %6081 = vmatpush.bf16.msra.mxu0 %v5040
    %6082 = vmatpush.bf16.msra.mxu0 %v5033
    %6083 = vmatpush.bf16.msra.mxu0 %v5026
    %6084 = vmatmul.bf16.gmra.mxu0 %v2748
    %v6085 = vpop.f32.mrf.mxu0
    %v6086 = vadd.f32 %v6073, %v6085
    %v6087 = vpop.f32.mrf.mxu0
    %6088 = vdwg.mxu0
    %6089 = vmatpush.bf16.msra.mxu0 %v5131
    %6090 = vmatpush.bf16.msra.mxu0 %v5124
    %6091 = vmatpush.bf16.msra.mxu0 %v5117
    %6092 = vmatpush.bf16.msra.mxu0 %v5110
    %6093 = vmatpush.bf16.msra.mxu0 %v5103
    %6094 = vmatpush.bf16.msra.mxu0 %v5096
    %6095 = vmatpush.bf16.msra.mxu0 %v5089
    %6096 = vmatpush.bf16.msra.mxu0 %v5082
    %6097 = vmatmul.bf16.gmra.mxu0 %v2749
    %v6098 = vpop.f32.mrf.mxu0
    %v6099 = vadd.f32 %v6086, %v6098
    %v6100 = vpop.f32.mrf.mxu0
    %6101 = vdwg.mxu0
    %6102 = vmatpush.bf16.msra.mxu0 %v4740
    %6103 = vmatpush.bf16.msra.mxu0 %v4733
    %6104 = vmatpush.bf16.msra.mxu0 %v4726
    %6105 = vmatpush.bf16.msra.mxu0 %v4719
    %6106 = vmatpush.bf16.msra.mxu0 %v4712
    %6107 = vmatpush.bf16.msra.mxu0 %v4705
    %6108 = vmatpush.bf16.msra.mxu0 %v4698
    %6109 = vmatpush.bf16.msra.mxu0 %v4691
    %6110 = vmatmul.bf16.gmra.mxu0 %v2742
    %v6111 = vpop.f32.mrf.mxu0
    %v6112 = vadd.f32 %v3269, %v6111
    %v6113 = vpop.f32.mrf.mxu0
    %6114 = vdwg.mxu0
    %6115 = vmatpush.bf16.msra.mxu0 %v4796
    %6116 = vmatpush.bf16.msra.mxu0 %v4789
    %6117 = vmatpush.bf16.msra.mxu0 %v4782
    %6118 = vmatpush.bf16.msra.mxu0 %v4775
    %6119 = vmatpush.bf16.msra.mxu0 %v4768
    %6120 = vmatpush.bf16.msra.mxu0 %v4761
    %6121 = vmatpush.bf16.msra.mxu0 %v4754
    %6122 = vmatpush.bf16.msra.mxu0 %v4747
    %6123 = vmatmul.bf16.gmra.mxu0 %v2743
    %v6124 = vpop.f32.mrf.mxu0
    %v6125 = vadd.f32 %v6112, %v6124
    %v6126 = vpop.f32.mrf.mxu0
    %6127 = vdwg.mxu0
    %6128 = vmatpush.bf16.msra.mxu0 %v4852
    %6129 = vmatpush.bf16.msra.mxu0 %v4845
    %6130 = vmatpush.bf16.msra.mxu0 %v4838
    %6131 = vmatpush.bf16.msra.mxu0 %v4831
    %6132 = vmatpush.bf16.msra.mxu0 %v4824
    %6133 = vmatpush.bf16.msra.mxu0 %v4817
    %6134 = vmatpush.bf16.msra.mxu0 %v4810
    %6135 = vmatpush.bf16.msra.mxu0 %v4803
    %6136 = vmatmul.bf16.gmra.mxu0 %v2744
    %v6137 = vpop.f32.mrf.mxu0
    %v6138 = vadd.f32 %v6125, %v6137
    %v6139 = vpop.f32.mrf.mxu0
    %6140 = vdwg.mxu0
    %6141 = vmatpush.bf16.msra.mxu0 %v4908
    %6142 = vmatpush.bf16.msra.mxu0 %v4901
    %6143 = vmatpush.bf16.msra.mxu0 %v4894
    %6144 = vmatpush.bf16.msra.mxu0 %v4887
    %6145 = vmatpush.bf16.msra.mxu0 %v4880
    %6146 = vmatpush.bf16.msra.mxu0 %v4873
    %6147 = vmatpush.bf16.msra.mxu0 %v4866
    %6148 = vmatpush.bf16.msra.mxu0 %v4859
    %6149 = vmatmul.bf16.gmra.mxu0 %v2745
    %v6150 = vpop.f32.mrf.mxu0
    %v6151 = vadd.f32 %v6138, %v6150
    %v6152 = vpop.f32.mrf.mxu0
    %6153 = vdwg.mxu0
    %6154 = vmatpush.bf16.msra.mxu0 %v4964
    %6155 = vmatpush.bf16.msra.mxu0 %v4957
    %6156 = vmatpush.bf16.msra.mxu0 %v4950
    %6157 = vmatpush.bf16.msra.mxu0 %v4943
    %6158 = vmatpush.bf16.msra.mxu0 %v4936
    %6159 = vmatpush.bf16.msra.mxu0 %v4929
    %6160 = vmatpush.bf16.msra.mxu0 %v4922
    %6161 = vmatpush.bf16.msra.mxu0 %v4915
    %6162 = vmatmul.bf16.gmra.mxu0 %v2746
    %v6163 = vpop.f32.mrf.mxu0
    %v6164 = vadd.f32 %v6151, %v6163
    %v6165 = vpop.f32.mrf.mxu0
    %6166 = vdwg.mxu0
    %6167 = vmatpush.bf16.msra.mxu0 %v5020
    %6168 = vmatpush.bf16.msra.mxu0 %v5013
    %6169 = vmatpush.bf16.msra.mxu0 %v5006
    %6170 = vmatpush.bf16.msra.mxu0 %v4999
    %6171 = vmatpush.bf16.msra.mxu0 %v4992
    %6172 = vmatpush.bf16.msra.mxu0 %v4985
    %6173 = vmatpush.bf16.msra.mxu0 %v4978
    %6174 = vmatpush.bf16.msra.mxu0 %v4971
    %6175 = vmatmul.bf16.gmra.mxu0 %v2747
    %v6176 = vpop.f32.mrf.mxu0
    %v6177 = vadd.f32 %v6164, %v6176
    %v6178 = vpop.f32.mrf.mxu0
    %6179 = vdwg.mxu0
    %6180 = vmatpush.bf16.msra.mxu0 %v5076
    %6181 = vmatpush.bf16.msra.mxu0 %v5069
    %6182 = vmatpush.bf16.msra.mxu0 %v5062
    %6183 = vmatpush.bf16.msra.mxu0 %v5055
    %6184 = vmatpush.bf16.msra.mxu0 %v5048
    %6185 = vmatpush.bf16.msra.mxu0 %v5041
    %6186 = vmatpush.bf16.msra.mxu0 %v5034
    %6187 = vmatpush.bf16.msra.mxu0 %v5027
    %6188 = vmatmul.bf16.gmra.mxu0 %v2748
    %v6189 = vpop.f32.mrf.mxu0
    %v6190 = vadd.f32 %v6177, %v6189
    %v6191 = vpop.f32.mrf.mxu0
    %6192 = vdwg.mxu0
    %6193 = vmatpush.bf16.msra.mxu0 %v5132
    %6194 = vmatpush.bf16.msra.mxu0 %v5125
    %6195 = vmatpush.bf16.msra.mxu0 %v5118
    %6196 = vmatpush.bf16.msra.mxu0 %v5111
    %6197 = vmatpush.bf16.msra.mxu0 %v5104
    %6198 = vmatpush.bf16.msra.mxu0 %v5097
    %6199 = vmatpush.bf16.msra.mxu0 %v5090
    %6200 = vmatpush.bf16.msra.mxu0 %v5083
    %6201 = vmatmul.bf16.gmra.mxu0 %v2749
    %v6202 = vpop.f32.mrf.mxu0
    %v6203 = vadd.f32 %v6190, %v6202
    %v6204 = vpop.f32.mrf.mxu0
    %6205 = vdwg.mxu0
    %6206 = vmatpush.bf16.msra.mxu0 %v4741
    %6207 = vmatpush.bf16.msra.mxu0 %v4734
    %6208 = vmatpush.bf16.msra.mxu0 %v4727
    %6209 = vmatpush.bf16.msra.mxu0 %v4720
    %6210 = vmatpush.bf16.msra.mxu0 %v4713
    %6211 = vmatpush.bf16.msra.mxu0 %v4706
    %6212 = vmatpush.bf16.msra.mxu0 %v4699
    %6213 = vmatpush.bf16.msra.mxu0 %v4692
    %6214 = vmatmul.bf16.gmra.mxu0 %v2742
    %v6215 = vpop.f32.mrf.mxu0
    %v6216 = vadd.f32 %v3270, %v6215
    %v6217 = vpop.f32.mrf.mxu0
    %6218 = vdwg.mxu0
    %6219 = vmatpush.bf16.msra.mxu0 %v4797
    %6220 = vmatpush.bf16.msra.mxu0 %v4790
    %6221 = vmatpush.bf16.msra.mxu0 %v4783
    %6222 = vmatpush.bf16.msra.mxu0 %v4776
    %6223 = vmatpush.bf16.msra.mxu0 %v4769
    %6224 = vmatpush.bf16.msra.mxu0 %v4762
    %6225 = vmatpush.bf16.msra.mxu0 %v4755
    %6226 = vmatpush.bf16.msra.mxu0 %v4748
    %6227 = vmatmul.bf16.gmra.mxu0 %v2743
    %v6228 = vpop.f32.mrf.mxu0
    %v6229 = vadd.f32 %v6216, %v6228
    %v6230 = vpop.f32.mrf.mxu0
    %6231 = vdwg.mxu0
    %6232 = vmatpush.bf16.msra.mxu0 %v4853
    %6233 = vmatpush.bf16.msra.mxu0 %v4846
    %6234 = vmatpush.bf16.msra.mxu0 %v4839
    %6235 = vmatpush.bf16.msra.mxu0 %v4832
    %6236 = vmatpush.bf16.msra.mxu0 %v4825
    %6237 = vmatpush.bf16.msra.mxu0 %v4818
    %6238 = vmatpush.bf16.msra.mxu0 %v4811
    %6239 = vmatpush.bf16.msra.mxu0 %v4804
    %6240 = vmatmul.bf16.gmra.mxu0 %v2744
    %v6241 = vpop.f32.mrf.mxu0
    %v6242 = vadd.f32 %v6229, %v6241
    %v6243 = vpop.f32.mrf.mxu0
    %6244 = vdwg.mxu0
    %6245 = vmatpush.bf16.msra.mxu0 %v4909
    %6246 = vmatpush.bf16.msra.mxu0 %v4902
    %6247 = vmatpush.bf16.msra.mxu0 %v4895
    %6248 = vmatpush.bf16.msra.mxu0 %v4888
    %6249 = vmatpush.bf16.msra.mxu0 %v4881
    %6250 = vmatpush.bf16.msra.mxu0 %v4874
    %6251 = vmatpush.bf16.msra.mxu0 %v4867
    %6252 = vmatpush.bf16.msra.mxu0 %v4860
    %6253 = vmatmul.bf16.gmra.mxu0 %v2745
    %v6254 = vpop.f32.mrf.mxu0
    %v6255 = vadd.f32 %v6242, %v6254
    %v6256 = vpop.f32.mrf.mxu0
    %6257 = vdwg.mxu0
    %6258 = vmatpush.bf16.msra.mxu0 %v4965
    %6259 = vmatpush.bf16.msra.mxu0 %v4958
    %6260 = vmatpush.bf16.msra.mxu0 %v4951
    %6261 = vmatpush.bf16.msra.mxu0 %v4944
    %6262 = vmatpush.bf16.msra.mxu0 %v4937
    %6263 = vmatpush.bf16.msra.mxu0 %v4930
    %6264 = vmatpush.bf16.msra.mxu0 %v4923
    %6265 = vmatpush.bf16.msra.mxu0 %v4916
    %6266 = vmatmul.bf16.gmra.mxu0 %v2746
    %v6267 = vpop.f32.mrf.mxu0
    %v6268 = vadd.f32 %v6255, %v6267
    %v6269 = vpop.f32.mrf.mxu0
    %6270 = vdwg.mxu0
    %6271 = vmatpush.bf16.msra.mxu0 %v5021
    %6272 = vmatpush.bf16.msra.mxu0 %v5014
    %6273 = vmatpush.bf16.msra.mxu0 %v5007
    %6274 = vmatpush.bf16.msra.mxu0 %v5000
    %6275 = vmatpush.bf16.msra.mxu0 %v4993
    %6276 = vmatpush.bf16.msra.mxu0 %v4986
    %6277 = vmatpush.bf16.msra.mxu0 %v4979
    %6278 = vmatpush.bf16.msra.mxu0 %v4972
    %6279 = vmatmul.bf16.gmra.mxu0 %v2747
    %v6280 = vpop.f32.mrf.mxu0
    %v6281 = vadd.f32 %v6268, %v6280
    %v6282 = vpop.f32.mrf.mxu0
    %6283 = vdwg.mxu0
    %6284 = vmatpush.bf16.msra.mxu0 %v5077
    %6285 = vmatpush.bf16.msra.mxu0 %v5070
    %6286 = vmatpush.bf16.msra.mxu0 %v5063
    %6287 = vmatpush.bf16.msra.mxu0 %v5056
    %6288 = vmatpush.bf16.msra.mxu0 %v5049
    %6289 = vmatpush.bf16.msra.mxu0 %v5042
    %6290 = vmatpush.bf16.msra.mxu0 %v5035
    %6291 = vmatpush.bf16.msra.mxu0 %v5028
    %6292 = vmatmul.bf16.gmra.mxu0 %v2748
    %v6293 = vpop.f32.mrf.mxu0
    %v6294 = vadd.f32 %v6281, %v6293
    %v6295 = vpop.f32.mrf.mxu0
    %6296 = vdwg.mxu0
    %6297 = vmatpush.bf16.msra.mxu0 %v5133
    %6298 = vmatpush.bf16.msra.mxu0 %v5126
    %6299 = vmatpush.bf16.msra.mxu0 %v5119
    %6300 = vmatpush.bf16.msra.mxu0 %v5112
    %6301 = vmatpush.bf16.msra.mxu0 %v5105
    %6302 = vmatpush.bf16.msra.mxu0 %v5098
    %6303 = vmatpush.bf16.msra.mxu0 %v5091
    %6304 = vmatpush.bf16.msra.mxu0 %v5084
    %6305 = vmatmul.bf16.gmra.mxu0 %v2749
    %v6306 = vpop.f32.mrf.mxu0
    %v6307 = vadd.f32 %v6294, %v6306
    %v6308 = vpop.f32.mrf.mxu0
    %6309 = vdwg.mxu0
    %v6310 = vtanh.pop %v5683
    %v6311 = vtanh.pop %v5787
    %v6312 = vtanh.pop %v5891
    %v6313 = vtanh.pop %v5995
    %v6314 = vtanh.pop %v6099
    %v6315 = vtanh.pop %v6203
    %v6316 = vtanh.pop %v6307
    %v6317 = vpack.c.bf16 %v6311, %v6310
    %v6318 = vpack.c.bf16 %v6313, %v6312
    %v6319 = vpack.c.bf16 %v6315, %v6314
    %v6320 = vpack.c.bf16 %v6316, %v6316
    %6321 = vst [vmem:[#allocation17] sm:$0xff] %v6317
    %6322 = vst [vmem:[#allocation17 + $0x8] sm:$0xff] %v6318
    %6323 = vst [vmem:[#allocation17 + $0x10] sm:$0xff] %v6319
    %6324 = vst [vmem:[#allocation17 + $0x18] sm:$0xf] %v6320
    // Predicated region
    $region74: #{tpu_custom_call.1} parent=1 // pred_check
      _
    $region75: #{tpu_custom_call.1} parent=1 // pred_check_branch
      %6326 = sbr.rel (0) target = $region77
    $region76: #{tpu_custom_call.1} parent=1 // pred_region
      %6328 = vsyncadd [#allocation4], 0
      %s6330 = sshll.u32 [#allocation17], 4
      %s6331 = int_to_ptr.vmem [resolvable:$true] %s6330
      %s6332 = sshll.u32 %s9, 4
      %s6333 = int_to_ptr.hbm [resolvable:$true] %s6332
      %6335 = dma.vmem_to_hbm [thread:$0]  %s6331, 448, %s6333, [#allocation4]
    $region77: #{tpu_custom_call.1} parent=1 // pred_fallthru
      _
    // Predicated region
    $region78: #{tpu_custom_call.1} parent=1 // pred_check
      _
    $region79: #{tpu_custom_call.1} parent=1 // pred_check_branch
      %6337 = sbr.rel (0) target = $region81
    $region80: #{tpu_custom_call.1} parent=1 // pred_region
      %6339 = dma.done [#allocation4], 448
    $region81: #{tpu_custom_call.1} parent=1 // pred_fallthru
      _
    %6340 = vsyncpa [#allocation3], 1
    %6341 = vsyncpa [#allocation6], 1
    %6342 = vsyncpa [#allocation9], 1
    %6343 = vsyncpa [#allocation12], 1
    %6344 = vsyncpa [#allocation15], 1
    %6345 = vsyncpa [#allocation4], 1

</llo_original>
